<compile_context>
chip_gen: v5e
topology: v5e:2x2
jax: 0.10.0
libtpu: 0.0.40
codegen_flags: <defaults>
</compile_context>

<pallas_src>
import jax
import jax.numpy as jnp
from jax.experimental import pallas as pl
from jax.experimental.pallas import tpu as pltpu

LANE = 128
OUT_PAD = 128   # classifier logits padded to one lane-dense vreg width


def _round_up(v, m):
    return (v + m - 1) // m * m


def _make_fused_kernel(matmul_dtype):
    """Builds the fused kernel; processes TB graphs per grid step."""

    def kernel(mean_ref, rstd_ref,              # (1, D) f32 BN stats
               x_ref,                           # (TB, N, D) f32
               a_ref,                           # (TB, N, N) matmul dtype
               idx_ref,                         # (TB, k1, 1) int32
               w1f_ref, w1a_ref, b1_ref,        # conv1
               w2f_ref, w2a_ref, b2_ref,        # conv2
               w3f_ref, w3a_ref, b3_ref,        # conv3
               w4f_ref, w4a_ref, b4_ref,        # conv4 (out padded to 128)
               cw1_ref, cb1_ref, alpha_ref, cw2_ref, cb2_ref,   # classifier
               o_ref):                          # (TB, k1, OUT_PAD) f32
        TB, N, D = x_ref.shape
        k1 = idx_ref.shape[1]
        adj = a_ref[...]                        # already matmul dtype (no cast)

        # ---- BatchNorm1d (affine=False): apply precomputed batch stats ------
        xf = x_ref[...].reshape(TB * N, D)
        h = ((xf - mean_ref[...]) * rstd_ref[...]).astype(matmul_dtype)

        def graph_conv(hflat, wf_ref, wa_ref, b_ref):
            wf = wf_ref[...]
            wa = wa_ref[...]
            f_in, f_out = wf.shape
            # feature path: H @ W_feat
            feat = jnp.dot(hflat, wf, preferred_element_type=jnp.float32)
            if f_out < f_in:
                # A @ (H @ W_agg): N^2 matmul at the smaller (output) width.
                hw = jnp.dot(hflat, wa, preferred_element_type=jnp.float32)
                hw3 = hw.astype(matmul_dtype).reshape(TB, N, f_out)
                agg = jnp.einsum('bij,bjf->bif', adj, hw3,
                                 preferred_element_type=jnp.float32)
                agg = agg.reshape(TB * N, f_out)
            else:
                # (A @ H) @ W_agg: N^2 matmul at the smaller (input) width.
                h3 = hflat.reshape(TB, N, f_in)
                ah = jnp.einsum('bij,bjf->bif', adj, h3,
                                preferred_element_type=jnp.float32)
                agg = jnp.dot(ah.astype(matmul_dtype).reshape(TB * N, f_in),
                              wa, preferred_element_type=jnp.float32)
            out = jnp.maximum(feat + agg + b_ref[...], 0.0)   # bias+ReLU in f32
            return out.astype(matmul_dtype)     # single cast, bf16-resident

        h = graph_conv(h, w1f_ref, w1a_ref, b1_ref)   # (TB*N, 512)
        h = graph_conv(h, w2f_ref, w2a_ref, b2_ref)   # (TB*N, 256)
        h = graph_conv(h, w3f_ref, w3a_ref, b3_ref)   # (TB*N, 128)
        h = graph_conv(h, w4f_ref, w4a_ref, b4_ref)   # (TB*N, 128) [64 padded]

        # ---- Edge gather via one-hot matmul (MXU), no per-row stores --------
        f4 = h.shape[-1]
        onehot = (jax.lax.broadcasted_iota(jnp.int32, (TB, k1, N), 2)
                  == idx_ref[...]).astype(matmul_dtype)          # (TB, k1, N)
        edge = jnp.einsum('bkn,bnf->bkf', onehot, h.reshape(TB, N, f4),
                          preferred_element_type=jnp.float32)    # exact select

        # ---- Classifier: Linear -> PReLU -> Linear (lane-padded widths) -----
        e2 = edge.astype(matmul_dtype).reshape(TB * k1, f4)
        hc = jnp.dot(e2, cw1_ref[...],
                     preferred_element_type=jnp.float32) + cb1_ref[...]
        hc = jnp.where(hc >= 0.0, hc, alpha_ref[...] * hc)       # PReLU (f32)
        logits = jnp.dot(hc.astype(matmul_dtype), cw2_ref[...],
                         preferred_element_type=jnp.float32) + cb2_ref[...]
        o_ref[...] = logits.reshape(TB, k1, OUT_PAD)

    return kernel


def gcn_forward(params, x, A, one_hop_idcs, *, matmul_dtype=jnp.bfloat16,
                eps=1e-5, graphs_per_step=4):
    """x: (B,N,D) f32, A: (B,N,N), one_hop_idcs: (B,k1) int -> (B*k1, 2) f32."""
    B, N, D = x.shape
    k1 = one_hop_idcs.shape[-1]
    assert N % 8 == 0, "N must be a multiple of 8 (sublane-aligned reshapes)."

    # Largest divisor of B that is <= graphs_per_step (graphs per grid step).
    TB = 1
    for t in range(min(B, graphs_per_step), 0, -1):
        if B % t == 0:
            TB = t
            break

    # BatchNorm1d(affine=False) training-mode batch stats: tiny D-length
    # reductions done in XLA; normalization itself runs in-kernel.
    flat = x.reshape(-1, D).astype(jnp.float32)
    mean2d = flat.mean(axis=0).reshape(1, D)
    var = flat.var(axis=0)                          # biased, as torch BN
    rstd2d = jax.lax.rsqrt(var + eps).reshape(1, D)

    def split(w):                                   # [:Din]->feat, [Din:]->agg
        din = w.shape[0] // 2
        return w[:din], w[din:]

    def pad_cols(w, width):
        return jnp.zeros((w.shape[0], width), w.dtype).at[:, :w.shape[1]].set(w)

    def pad2d(w, rows, cols):
        return jnp.zeros((rows, cols), w.dtype).at[:w.shape[0], :w.shape[1]].set(w)

    F4 = params["conv4_w"].shape[1]
    F4p = _round_up(F4, LANE)                       # 64 -> 128
    H = params["cls_w1"].shape[1]
    Hp = _round_up(H, LANE)

    w1f, w1a = split(params["conv1_w"])
    w2f, w2a = split(params["conv2_w"])
    w3f, w3a = split(params["conv3_w"])
    w4f, w4a = split(params["conv4_w"])
    w4f, w4a = pad_cols(w4f, F4p), pad_cols(w4a, F4p)

    b1 = params["conv1_b"].reshape(1, -1)
    b2 = params["conv2_b"].reshape(1, -1)
    b3 = params["conv3_b"].reshape(1, -1)
    b4 = pad_cols(params["conv4_b"].reshape(1, -1), F4p)

    cw1 = pad2d(params["cls_w1"], F4p, Hp)          # zero rows/cols -> exact
    cb1 = pad_cols(params["cls_b1"].reshape(1, -1), Hp)
    alpha = pad_cols(params["cls_alpha"].reshape(1, -1), Hp)
    cw2 = pad2d(params["cls_w2"], Hp, OUT_PAD)
    cb2 = pad_cols(params["cls_b2"].reshape(1, -1), OUT_PAD)

    # bf16 matmul operands cast ONCE here (half the HBM->VMEM bytes for A and
    # weights, native MXU rate); biases / BN stats / alpha stay f32.
    mmd = matmul_dtype
    A_mm = A.astype(mmd)
    w1f, w1a = w1f.astype(mmd), w1a.astype(mmd)
    w2f, w2a = w2f.astype(mmd), w2a.astype(mmd)
    w3f, w3a = w3f.astype(mmd), w3a.astype(mmd)
    w4f, w4a = w4f.astype(mmd), w4a.astype(mmd)
    cw1, cw2 = cw1.astype(mmd), cw2.astype(mmd)

    idx3 = one_hop_idcs.astype(jnp.int32).reshape(B, k1, 1)

    weight_args = (w1f, w1a, b1, w2f, w2a, b2, w3f, w3a, b3,
                   w4f, w4a, b4, cw1, cb1, alpha, cw2, cb2)

    const2 = lambda i: (0, 0)
    per_b = lambda i: (i, 0, 0)
    weight_specs = [pl.BlockSpec(w.shape, const2) for w in weight_args]

    # Explicit VMEM budget: double-buffered blocks + (double-buffered) weights
    # + f32 activation working set + margin, clamped to v7x's 64 MiB physical.
    mm_bytes = jnp.dtype(mmd).itemsize
    block_bytes = (TB * N * N * mm_bytes          # A block
                   + TB * N * D * 4               # x block
                   + TB * k1 * 4                  # index block
                   + TB * k1 * OUT_PAD * 4)       # output block
    weight_bytes = sum(int(w.size) * w.dtype.itemsize for w in weight_args)
    act_bytes = TB * N * (512 + 512) * 4          # f32 intermediates headroom
    vmem_limit = 2 * block_bytes + 2 * weight_bytes + act_bytes + (8 << 20)
    vmem_limit = min(max(int(vmem_limit), 32 << 20), 64 << 20)

    out = pl.pallas_call(
        _make_fused_kernel(mmd),
        out_shape=jax.ShapeDtypeStruct((B, k1, OUT_PAD), jnp.float32),
        grid=(B // TB,),
        in_specs=[
            pl.BlockSpec((1, D), const2),            # BN mean
            pl.BlockSpec((1, D), const2),            # BN rstd
            pl.BlockSpec((TB, N, D), per_b),         # x
            pl.BlockSpec((TB, N, N), per_b),         # A
            pl.BlockSpec((TB, k1, 1), per_b),        # edge indices
        ] + weight_specs,
        out_specs=pl.BlockSpec((TB, k1, OUT_PAD), per_b),
        compiler_params=pltpu.CompilerParams(
            dimension_semantics=("parallel",),       # megacore-shard batch axis
            vmem_limit_bytes=vmem_limit),
    )(mean2d, rstd2d, x.astype(jnp.float32), A_mm, idx3, *weight_args)

    return out[:, :, :2].reshape(B * k1, 2)


# ----------------------------------------------------------------------------
# Pure-JAX reference (mirrors the PyTorch module) + parameter init.
# ----------------------------------------------------------------------------
def _reference_forward(params, x, A, one_hop_idcs, eps=1e-5):
    B, N, D = x.shape
    flat = x.reshape(-1, D)
    h = ((flat - flat.mean(0)) * jax.lax.rsqrt(flat.var(0) + eps)).reshape(B, N, D)

    def conv(h, w, b):
        agg = jnp.einsum('bij,bjd->bid', A, h)
        cat = jnp.concatenate([h, agg], axis=-1)
        return jax.nn.relu(jnp.einsum('bnd,df->bnf', cat, w) + b)

    h = conv(h, params["conv1_w"], params["conv1_b"])
    h = conv(h, params["conv2_w"], params["conv2_b"])
    h = conv(h, params["conv3_w"], params["conv3_b"])
    h = conv(h, params["conv4_w"], params["conv4_b"])
    edge = jnp.take_along_axis(h, one_hop_idcs[..., None], axis=1)
    e = edge.reshape(-1, h.shape[-1])
    hc = e @ params["cls_w1"] + params["cls_b1"]
    hc = jnp.where(hc >= 0, hc, params["cls_alpha"] * hc)
    return hc @ params["cls_w2"] + params["cls_b2"]


def xavier_uniform(key, shape):
    fan_in, fan_out = shape
    bound = jnp.sqrt(6.0 / (fan_in + fan_out))
    return jax.random.uniform(key, shape, jnp.float32, -bound, bound)


def init_params(key, input_dim, output_dim):
    ks = jax.random.split(key, 8)
    params = {}
    dims = [(input_dim, 512), (512, 256), (256, 128), (128, 64)]
    for i, (din, dout) in enumerate(dims):
        params[f"conv{i+1}_w"] = xavier_uniform(ks[i], (din * 2, dout))
        params[f"conv{i+1}_b"] = jnp.zeros((dout,), jnp.float32)
    params["cls_w1"] = xavier_uniform(ks[4], (64, output_dim))
    params["cls_b1"] = jnp.zeros((output_dim,), jnp.float32)
    params["cls_alpha"] = jnp.full((output_dim,), 0.25, jnp.float32)
    params["cls_w2"] = xavier_uniform(ks[5], (output_dim, 2))
    params["cls_b2"] = jnp.zeros((2,), jnp.float32)
    return params


if __name__ == "__main__":
    key = jax.random.PRNGKey(0)
    B, N, D_in, OUT, K1 = 8, 32, 64, 32, 8

    k_x, k_a, k_idx, k_p = jax.random.split(key, 4)
    x = jax.random.normal(k_x, (B, N, D_in), jnp.float32)
    # row-normalized adjacency (mean aggregation semantics)
    A_raw = (jax.random.uniform(k_a, (B, N, N)) < 0.3).astype(jnp.float32)
    A_raw = A_raw + jnp.eye(N)[None]
    A = A_raw / jnp.clip(A_raw.sum(-1, keepdims=True), 1.0)
    one_hop_idcs = jax.random.randint(k_idx, (B, K1), 0, N, jnp.int32)

    params = init_params(k_p, D_in, OUT)

    ref = _reference_forward(params, x, A, one_hop_idcs)
    ref_scale = float(jnp.max(jnp.abs(ref)))

    # Production default: bf16 matmul operands, f32 accumulation.
    pred = gcn_forward(params, x, A, one_hop_idcs)
    jax.block_until_ready(pred)
    assert pred.shape == (B * K1, 2) and pred.dtype == jnp.float32
    assert bool(jnp.all(jnp.isfinite(pred)))
    err_bf16 = float(jnp.max(jnp.abs(pred - ref)))
    assert err_bf16 < 0.1 + 0.05 * ref_scale, f"bf16 max abs err {err_bf16}"

    # f32 path: should match the reference tightly (re-association only).
    pred_f32 = gcn_forward(params, x, A, one_hop_idcs, matmul_dtype=jnp.float32)
    jax.block_until_ready(pred_f32)
    err_f32 = float(jnp.max(jnp.abs(pred_f32 - ref)))
    assert err_f32 < 1e-3 + 1e-3 * ref_scale, f"f32 max abs err {err_f32}"

    print("KERNEL_OK")
</pallas_src>

<mosaic_0001>
module attributes {stable_mosaic.version = 11 : i64} {
  func.func @kernel(%arg0: i32, %arg1: memref<1x64xf32, #tpu.memory_space<vmem>>, %arg2: memref<1x64xf32, #tpu.memory_space<vmem>>, %arg3: memref<4x32x64xf32, #tpu.memory_space<vmem>>, %arg4: memref<4x32x32xbf16, #tpu.memory_space<vmem>>, %arg5: memref<4x8x1xi32, #tpu.memory_space<vmem>>, %arg6: memref<64x512xbf16, #tpu.memory_space<vmem>>, %arg7: memref<64x512xbf16, #tpu.memory_space<vmem>>, %arg8: memref<1x512xf32, #tpu.memory_space<vmem>>, %arg9: memref<512x256xbf16, #tpu.memory_space<vmem>>, %arg10: memref<512x256xbf16, #tpu.memory_space<vmem>>, %arg11: memref<1x256xf32, #tpu.memory_space<vmem>>, %arg12: memref<256x128xbf16, #tpu.memory_space<vmem>>, %arg13: memref<256x128xbf16, #tpu.memory_space<vmem>>, %arg14: memref<1x128xf32, #tpu.memory_space<vmem>>, %arg15: memref<128x128xbf16, #tpu.memory_space<vmem>>, %arg16: memref<128x128xbf16, #tpu.memory_space<vmem>>, %arg17: memref<1x128xf32, #tpu.memory_space<vmem>>, %arg18: memref<128x128xbf16, #tpu.memory_space<vmem>>, %arg19: memref<1x128xf32, #tpu.memory_space<vmem>>, %arg20: memref<1x128xf32, #tpu.memory_space<vmem>>, %arg21: memref<128x128xbf16, #tpu.memory_space<vmem>>, %arg22: memref<1x128xf32, #tpu.memory_space<vmem>>, %arg23: memref<4x8x128xf32, #tpu.memory_space<vmem>>) attributes {dimension_semantics = [#tpu.dimension_semantics<parallel>], iteration_bounds = array<i64: 2>, scalar_prefetch = 0 : i64, scratch_operands = 0 : i64, tpu.core_type = #tpu.core_type<tc>, window_params = [{pipeline_mode = #tpu.pipeline_mode<synchronous>, transform_indices = @transform_0, window_bounds = array<i64: 1, 64>}, {pipeline_mode = #tpu.pipeline_mode<synchronous>, transform_indices = @transform_1, window_bounds = array<i64: 1, 64>}, {transform_indices = @transform_2, window_bounds = array<i64: 4, 32, 64>}, {transform_indices = @transform_3, window_bounds = array<i64: 4, 32, 32>}, {transform_indices = @transform_4, window_bounds = array<i64: 4, 8, 1>}, {pipeline_mode = #tpu.pipeline_mode<synchronous>, transform_indices = @transform_5, window_bounds = array<i64: 64, 512>}, {pipeline_mode = #tpu.pipeline_mode<synchronous>, transform_indices = @transform_6, window_bounds = array<i64: 64, 512>}, {pipeline_mode = #tpu.pipeline_mode<synchronous>, transform_indices = @transform_7, window_bounds = array<i64: 1, 512>}, {pipeline_mode = #tpu.pipeline_mode<synchronous>, transform_indices = @transform_8, window_bounds = array<i64: 512, 256>}, {pipeline_mode = #tpu.pipeline_mode<synchronous>, transform_indices = @transform_9, window_bounds = array<i64: 512, 256>}, {pipeline_mode = #tpu.pipeline_mode<synchronous>, transform_indices = @transform_10, window_bounds = array<i64: 1, 256>}, {pipeline_mode = #tpu.pipeline_mode<synchronous>, transform_indices = @transform_11, window_bounds = array<i64: 256, 128>}, {pipeline_mode = #tpu.pipeline_mode<synchronous>, transform_indices = @transform_12, window_bounds = array<i64: 256, 128>}, {pipeline_mode = #tpu.pipeline_mode<synchronous>, transform_indices = @transform_13, window_bounds = array<i64: 1, 128>}, {pipeline_mode = #tpu.pipeline_mode<synchronous>, transform_indices = @transform_14, window_bounds = array<i64: 128, 128>}, {pipeline_mode = #tpu.pipeline_mode<synchronous>, transform_indices = @transform_15, window_bounds = array<i64: 128, 128>}, {pipeline_mode = #tpu.pipeline_mode<synchronous>, transform_indices = @transform_16, window_bounds = array<i64: 1, 128>}, {pipeline_mode = #tpu.pipeline_mode<synchronous>, transform_indices = @transform_17, window_bounds = array<i64: 128, 128>}, {pipeline_mode = #tpu.pipeline_mode<synchronous>, transform_indices = @transform_18, window_bounds = array<i64: 1, 128>}, {pipeline_mode = #tpu.pipeline_mode<synchronous>, transform_indices = @transform_19, window_bounds = array<i64: 1, 128>}, {pipeline_mode = #tpu.pipeline_mode<synchronous>, transform_indices = @transform_20, window_bounds = array<i64: 128, 128>}, {pipeline_mode = #tpu.pipeline_mode<synchronous>, transform_indices = @transform_21, window_bounds = array<i64: 1, 128>}, {transform_indices = @transform_22, window_bounds = array<i64: 4, 8, 128>}]} {
    %c0 = arith.constant 0 : index
    %c0_0 = arith.constant 0 : index
    %c0_1 = arith.constant 0 : index
    %0 = vector.load %arg4[%c0, %c0_0, %c0_1] : memref<4x32x32xbf16, #tpu.memory_space<vmem>>, vector<4x32x32xbf16>
    %c0_2 = arith.constant 0 : index
    %c0_3 = arith.constant 0 : index
    %c0_4 = arith.constant 0 : index
    %1 = vector.load %arg3[%c0_2, %c0_3, %c0_4] : memref<4x32x64xf32, #tpu.memory_space<vmem>>, vector<4x32x64xf32>
    %2 = vector.shape_cast %1 : vector<4x32x64xf32> to vector<128x64xf32>
    %c0_5 = arith.constant 0 : index
    %c0_6 = arith.constant 0 : index
    %3 = vector.load %arg1[%c0_5, %c0_6] : memref<1x64xf32, #tpu.memory_space<vmem>>, vector<1x64xf32>
    %4 = vector.broadcast %3 : vector<1x64xf32> to vector<128x64xf32>
    %5 = arith.subf %2, %4 : vector<128x64xf32>
    %c0_7 = arith.constant 0 : index
    %c0_8 = arith.constant 0 : index
    %6 = vector.load %arg2[%c0_7, %c0_8] : memref<1x64xf32, #tpu.memory_space<vmem>>, vector<1x64xf32>
    %7 = vector.broadcast %6 : vector<1x64xf32> to vector<128x64xf32>
    %8 = arith.mulf %5, %7 : vector<128x64xf32>
    %9 = arith.truncf %8 : vector<128x64xf32> to vector<128x64xbf16>
    %c0_9 = arith.constant 0 : index
    %c0_10 = arith.constant 0 : index
    %10 = vector.load %arg6[%c0_9, %c0_10] : memref<64x512xbf16, #tpu.memory_space<vmem>>, vector<64x512xbf16>
    %c0_11 = arith.constant 0 : index
    %c0_12 = arith.constant 0 : index
    %11 = vector.load %arg7[%c0_11, %c0_12] : memref<64x512xbf16, #tpu.memory_space<vmem>>, vector<64x512xbf16>
    %cst = arith.constant dense<0.000000e+00> : vector<128x512xf32>
    %12 = tpu.matmul %9, %10, %cst {dimension_numbers = #tpu.dot_dimension_numbers<[1], [0], [0], [1], [0, 0, 1, 1], [], []>} : vector<128x64xbf16>, vector<64x512xbf16>, vector<128x512xf32> -> vector<128x512xf32>
    %13 = vector.shape_cast %9 : vector<128x64xbf16> to vector<4x32x64xbf16>
    "tpu.trace_start"() <{level = 10 : i32, message = "bij,bjf->bif"}> : () -> ()
    %cst_13 = arith.constant dense<0.000000e+00> : vector<4x32x64xf32>
    %14 = tpu.matmul %0, %13, %cst_13 {dimension_numbers = #tpu.dot_dimension_numbers<[2], [1], [1], [2], [0, 0, 0, 1, 1, 2], [0], [0]>} : vector<4x32x32xbf16>, vector<4x32x64xbf16>, vector<4x32x64xf32> -> vector<4x32x64xf32>
    "tpu.trace_stop"() : () -> ()
    %15 = arith.truncf %14 : vector<4x32x64xf32> to vector<4x32x64xbf16>
    %16 = vector.shape_cast %15 : vector<4x32x64xbf16> to vector<128x64xbf16>
    %cst_14 = arith.constant dense<0.000000e+00> : vector<128x512xf32>
    %17 = tpu.matmul %16, %11, %cst_14 {dimension_numbers = #tpu.dot_dimension_numbers<[1], [0], [0], [1], [0, 0, 1, 1], [], []>} : vector<128x64xbf16>, vector<64x512xbf16>, vector<128x512xf32> -> vector<128x512xf32>
    %18 = arith.addf %12, %17 : vector<128x512xf32>
    %c0_15 = arith.constant 0 : index
    %c0_16 = arith.constant 0 : index
    %19 = vector.load %arg8[%c0_15, %c0_16] : memref<1x512xf32, #tpu.memory_space<vmem>>, vector<1x512xf32>
    %20 = vector.broadcast %19 : vector<1x512xf32> to vector<128x512xf32>
    %21 = arith.addf %18, %20 : vector<128x512xf32>
    %cst_17 = arith.constant 0.000000e+00 : f32
    %22 = vector.broadcast %cst_17 : f32 to vector<128x512xf32>
    %23 = arith.maximumf %21, %22 : vector<128x512xf32>
    %24 = arith.truncf %23 : vector<128x512xf32> to vector<128x512xbf16>
    %c0_18 = arith.constant 0 : index
    %c0_19 = arith.constant 0 : index
    %25 = vector.load %arg9[%c0_18, %c0_19] : memref<512x256xbf16, #tpu.memory_space<vmem>>, vector<512x256xbf16>
    %c0_20 = arith.constant 0 : index
    %c0_21 = arith.constant 0 : index
    %26 = vector.load %arg10[%c0_20, %c0_21] : memref<512x256xbf16, #tpu.memory_space<vmem>>, vector<512x256xbf16>
    %cst_22 = arith.constant dense<0.000000e+00> : vector<128x256xf32>
    %27 = tpu.matmul %24, %25, %cst_22 {dimension_numbers = #tpu.dot_dimension_numbers<[1], [0], [0], [1], [0, 0, 1, 1], [], []>} : vector<128x512xbf16>, vector<512x256xbf16>, vector<128x256xf32> -> vector<128x256xf32>
    %cst_23 = arith.constant dense<0.000000e+00> : vector<128x256xf32>
    %28 = tpu.matmul %24, %26, %cst_23 {dimension_numbers = #tpu.dot_dimension_numbers<[1], [0], [0], [1], [0, 0, 1, 1], [], []>} : vector<128x512xbf16>, vector<512x256xbf16>, vector<128x256xf32> -> vector<128x256xf32>
    %29 = arith.truncf %28 : vector<128x256xf32> to vector<128x256xbf16>
    %30 = vector.shape_cast %29 : vector<128x256xbf16> to vector<4x32x256xbf16>
    "tpu.trace_start"() <{level = 10 : i32, message = "bij,bjf->bif"}> : () -> ()
    %cst_24 = arith.constant dense<0.000000e+00> : vector<4x32x256xf32>
    %31 = tpu.matmul %0, %30, %cst_24 {dimension_numbers = #tpu.dot_dimension_numbers<[2], [1], [1], [2], [0, 0, 0, 1, 1, 2], [0], [0]>} : vector<4x32x32xbf16>, vector<4x32x256xbf16>, vector<4x32x256xf32> -> vector<4x32x256xf32>
    "tpu.trace_stop"() : () -> ()
    %32 = vector.shape_cast %31 : vector<4x32x256xf32> to vector<128x256xf32>
    %33 = arith.addf %27, %32 : vector<128x256xf32>
    %c0_25 = arith.constant 0 : index
    %c0_26 = arith.constant 0 : index
    %34 = vector.load %arg11[%c0_25, %c0_26] : memref<1x256xf32, #tpu.memory_space<vmem>>, vector<1x256xf32>
    %35 = vector.broadcast %34 : vector<1x256xf32> to vector<128x256xf32>
    %36 = arith.addf %33, %35 : vector<128x256xf32>
    %cst_27 = arith.constant 0.000000e+00 : f32
    %37 = vector.broadcast %cst_27 : f32 to vector<128x256xf32>
    %38 = arith.maximumf %36, %37 : vector<128x256xf32>
    %39 = arith.truncf %38 : vector<128x256xf32> to vector<128x256xbf16>
    %c0_28 = arith.constant 0 : index
    %c0_29 = arith.constant 0 : index
    %40 = vector.load %arg12[%c0_28, %c0_29] : memref<256x128xbf16, #tpu.memory_space<vmem>>, vector<256x128xbf16>
    %c0_30 = arith.constant 0 : index
    %c0_31 = arith.constant 0 : index
    %41 = vector.load %arg13[%c0_30, %c0_31] : memref<256x128xbf16, #tpu.memory_space<vmem>>, vector<256x128xbf16>
    %cst_32 = arith.constant dense<0.000000e+00> : vector<128x128xf32>
    %42 = tpu.matmul %39, %40, %cst_32 {dimension_numbers = #tpu.dot_dimension_numbers<[1], [0], [0], [1], [0, 0, 1, 1], [], []>} : vector<128x256xbf16>, vector<256x128xbf16>, vector<128x128xf32> -> vector<128x128xf32>
    %cst_33 = arith.constant dense<0.000000e+00> : vector<128x128xf32>
    %43 = tpu.matmul %39, %41, %cst_33 {dimension_numbers = #tpu.dot_dimension_numbers<[1], [0], [0], [1], [0, 0, 1, 1], [], []>} : vector<128x256xbf16>, vector<256x128xbf16>, vector<128x128xf32> -> vector<128x128xf32>
    %44 = arith.truncf %43 : vector<128x128xf32> to vector<128x128xbf16>
    %45 = vector.shape_cast %44 : vector<128x128xbf16> to vector<4x32x128xbf16>
    "tpu.trace_start"() <{level = 10 : i32, message = "bij,bjf->bif"}> : () -> ()
    %cst_34 = arith.constant dense<0.000000e+00> : vector<4x32x128xf32>
    %46 = tpu.matmul %0, %45, %cst_34 {dimension_numbers = #tpu.dot_dimension_numbers<[2], [1], [1], [2], [0, 0, 0, 1, 1, 2], [0], [0]>} : vector<4x32x32xbf16>, vector<4x32x128xbf16>, vector<4x32x128xf32> -> vector<4x32x128xf32>
    "tpu.trace_stop"() : () -> ()
    %47 = vector.shape_cast %46 : vector<4x32x128xf32> to vector<128x128xf32>
    %48 = arith.addf %42, %47 : vector<128x128xf32>
    %c0_35 = arith.constant 0 : index
    %c0_36 = arith.constant 0 : index
    %49 = vector.load %arg14[%c0_35, %c0_36] : memref<1x128xf32, #tpu.memory_space<vmem>>, vector<1x128xf32>
    %50 = vector.broadcast %49 : vector<1x128xf32> to vector<128x128xf32>
    %51 = arith.addf %48, %50 : vector<128x128xf32>
    %cst_37 = arith.constant 0.000000e+00 : f32
    %52 = vector.broadcast %cst_37 : f32 to vector<128x128xf32>
    %53 = arith.maximumf %51, %52 : vector<128x128xf32>
    %54 = arith.truncf %53 : vector<128x128xf32> to vector<128x128xbf16>
    %c0_38 = arith.constant 0 : index
    %c0_39 = arith.constant 0 : index
    %55 = vector.load %arg15[%c0_38, %c0_39] : memref<128x128xbf16, #tpu.memory_space<vmem>>, vector<128x128xbf16>
    %c0_40 = arith.constant 0 : index
    %c0_41 = arith.constant 0 : index
    %56 = vector.load %arg16[%c0_40, %c0_41] : memref<128x128xbf16, #tpu.memory_space<vmem>>, vector<128x128xbf16>
    %cst_42 = arith.constant dense<0.000000e+00> : vector<128x128xf32>
    %57 = tpu.matmul %54, %55, %cst_42 {dimension_numbers = #tpu.dot_dimension_numbers<[1], [0], [0], [1], [0, 0, 1, 1], [], []>} : vector<128x128xbf16>, vector<128x128xbf16>, vector<128x128xf32> -> vector<128x128xf32>
    %58 = vector.shape_cast %54 : vector<128x128xbf16> to vector<4x32x128xbf16>
    "tpu.trace_start"() <{level = 10 : i32, message = "bij,bjf->bif"}> : () -> ()
    %cst_43 = arith.constant dense<0.000000e+00> : vector<4x32x128xf32>
    %59 = tpu.matmul %0, %58, %cst_43 {dimension_numbers = #tpu.dot_dimension_numbers<[2], [1], [1], [2], [0, 0, 0, 1, 1, 2], [0], [0]>} : vector<4x32x32xbf16>, vector<4x32x128xbf16>, vector<4x32x128xf32> -> vector<4x32x128xf32>
    "tpu.trace_stop"() : () -> ()
    %60 = arith.truncf %59 : vector<4x32x128xf32> to vector<4x32x128xbf16>
    %61 = vector.shape_cast %60 : vector<4x32x128xbf16> to vector<128x128xbf16>
    %cst_44 = arith.constant dense<0.000000e+00> : vector<128x128xf32>
    %62 = tpu.matmul %61, %56, %cst_44 {dimension_numbers = #tpu.dot_dimension_numbers<[1], [0], [0], [1], [0, 0, 1, 1], [], []>} : vector<128x128xbf16>, vector<128x128xbf16>, vector<128x128xf32> -> vector<128x128xf32>
    %63 = arith.addf %57, %62 : vector<128x128xf32>
    %c0_45 = arith.constant 0 : index
    %c0_46 = arith.constant 0 : index
    %64 = vector.load %arg17[%c0_45, %c0_46] : memref<1x128xf32, #tpu.memory_space<vmem>>, vector<1x128xf32>
    %65 = vector.broadcast %64 : vector<1x128xf32> to vector<128x128xf32>
    %66 = arith.addf %63, %65 : vector<128x128xf32>
    %cst_47 = arith.constant 0.000000e+00 : f32
    %67 = vector.broadcast %cst_47 : f32 to vector<128x128xf32>
    %68 = arith.maximumf %66, %67 : vector<128x128xf32>
    %69 = arith.truncf %68 : vector<128x128xf32> to vector<128x128xbf16>
    %70 = tpu.iota {dimensions = array<i32: 2>} : vector<4x8x32xi32>
    %c0_48 = arith.constant 0 : index
    %c0_49 = arith.constant 0 : index
    %c0_50 = arith.constant 0 : index
    %71 = vector.load %arg5[%c0_48, %c0_49, %c0_50] : memref<4x8x1xi32, #tpu.memory_space<vmem>>, vector<4x8x1xi32>
    %72 = vector.broadcast %71 : vector<4x8x1xi32> to vector<4x8x32xi32>
    %73 = arith.cmpi eq, %70, %72 : vector<4x8x32xi32>
    %74 = arith.extui %73 : vector<4x8x32xi1> to vector<4x8x32xi32>
    %75 = arith.sitofp %74 : vector<4x8x32xi32> to vector<4x8x32xf32>
    %76 = arith.truncf %75 : vector<4x8x32xf32> to vector<4x8x32xbf16>
    %77 = vector.shape_cast %69 : vector<128x128xbf16> to vector<4x32x128xbf16>
    "tpu.trace_start"() <{level = 10 : i32, message = "bkn,bnf->bkf"}> : () -> ()
    %cst_51 = arith.constant dense<0.000000e+00> : vector<4x8x128xf32>
    %78 = tpu.matmul %76, %77, %cst_51 {dimension_numbers = #tpu.dot_dimension_numbers<[2], [1], [1], [2], [0, 0, 0, 1, 1, 2], [0], [0]>} : vector<4x8x32xbf16>, vector<4x32x128xbf16>, vector<4x8x128xf32> -> vector<4x8x128xf32>
    "tpu.trace_stop"() : () -> ()
    %79 = arith.truncf %78 : vector<4x8x128xf32> to vector<4x8x128xbf16>
    %80 = vector.shape_cast %79 : vector<4x8x128xbf16> to vector<32x128xbf16>
    %c0_52 = arith.constant 0 : index
    %c0_53 = arith.constant 0 : index
    %81 = vector.load %arg18[%c0_52, %c0_53] : memref<128x128xbf16, #tpu.memory_space<vmem>>, vector<128x128xbf16>
    %cst_54 = arith.constant dense<0.000000e+00> : vector<32x128xf32>
    %82 = tpu.matmul %80, %81, %cst_54 {dimension_numbers = #tpu.dot_dimension_numbers<[1], [0], [0], [1], [0, 0, 1, 1], [], []>} : vector<32x128xbf16>, vector<128x128xbf16>, vector<32x128xf32> -> vector<32x128xf32>
    %c0_55 = arith.constant 0 : index
    %c0_56 = arith.constant 0 : index
    %83 = vector.load %arg19[%c0_55, %c0_56] : memref<1x128xf32, #tpu.memory_space<vmem>>, vector<1x128xf32>
    %84 = vector.broadcast %83 : vector<1x128xf32> to vector<32x128xf32>
    %85 = arith.addf %82, %84 : vector<32x128xf32>
    %cst_57 = arith.constant 0.000000e+00 : f32
    %86 = vector.broadcast %cst_57 : f32 to vector<32x128xf32>
    %87 = arith.cmpf oge, %85, %86 : vector<32x128xf32>
    %c0_58 = arith.constant 0 : index
    %c0_59 = arith.constant 0 : index
    %88 = vector.load %arg20[%c0_58, %c0_59] : memref<1x128xf32, #tpu.memory_space<vmem>>, vector<1x128xf32>
    %89 = vector.broadcast %88 : vector<1x128xf32> to vector<32x128xf32>
    %90 = arith.mulf %89, %85 : vector<32x128xf32>
    %91 = arith.select %87, %85, %90 : vector<32x128xi1>, vector<32x128xf32>
    %92 = arith.truncf %91 : vector<32x128xf32> to vector<32x128xbf16>
    %c0_60 = arith.constant 0 : index
    %c0_61 = arith.constant 0 : index
    %93 = vector.load %arg21[%c0_60, %c0_61] : memref<128x128xbf16, #tpu.memory_space<vmem>>, vector<128x128xbf16>
    %cst_62 = arith.constant dense<0.000000e+00> : vector<32x128xf32>
    %94 = tpu.matmul %92, %93, %cst_62 {dimension_numbers = #tpu.dot_dimension_numbers<[1], [0], [0], [1], [0, 0, 1, 1], [], []>} : vector<32x128xbf16>, vector<128x128xbf16>, vector<32x128xf32> -> vector<32x128xf32>
    %c0_63 = arith.constant 0 : index
    %c0_64 = arith.constant 0 : index
    %95 = vector.load %arg22[%c0_63, %c0_64] : memref<1x128xf32, #tpu.memory_space<vmem>>, vector<1x128xf32>
    %96 = vector.broadcast %95 : vector<1x128xf32> to vector<32x128xf32>
    %97 = arith.addf %94, %96 : vector<32x128xf32>
    %98 = vector.shape_cast %97 : vector<32x128xf32> to vector<4x8x128xf32>
    %c0_65 = arith.constant 0 : index
    %c0_66 = arith.constant 0 : index
    %c0_67 = arith.constant 0 : index
    %99 = vector.load %arg23[%c0_65, %c0_66, %c0_67] : memref<4x8x128xf32, #tpu.memory_space<vmem>>, vector<4x8x128xf32>
    tpu.vector_store %arg23[%c0_65, %c0_66, %c0_67], %98 {strides = array<i32>} : memref<4x8x128xf32, #tpu.memory_space<vmem>>, vector<4x8x128xf32>,
    return
  }
  func.func @transform_0(%arg0: i32) -> (i32, i32) {
    %c0_i32 = arith.constant 0 : i32
    %c0_i32_0 = arith.constant 0 : i32
    %c0_i32_1 = arith.constant 0 : i32
    return %c0_i32, %c0_i32_0 : i32, i32
  }
  func.func @transform_1(%arg0: i32) -> (i32, i32) {
    %c0_i32 = arith.constant 0 : i32
    %c0_i32_0 = arith.constant 0 : i32
    %c0_i32_1 = arith.constant 0 : i32
    return %c0_i32, %c0_i32_0 : i32, i32
  }
  func.func @transform_2(%arg0: i32) -> (i32, i32, i32) {
    %c0_i32 = arith.constant 0 : i32
    %c0_i32_0 = arith.constant 0 : i32
    %c0_i32_1 = arith.constant 0 : i32
    return %arg0, %c0_i32, %c0_i32_0 : i32, i32, i32
  }
  func.func @transform_3(%arg0: i32) -> (i32, i32, i32) {
    %c0_i32 = arith.constant 0 : i32
    %c0_i32_0 = arith.constant 0 : i32
    %c0_i32_1 = arith.constant 0 : i32
    return %arg0, %c0_i32, %c0_i32_0 : i32, i32, i32
  }
  func.func @transform_4(%arg0: i32) -> (i32, i32, i32) {
    %c0_i32 = arith.constant 0 : i32
    %c0_i32_0 = arith.constant 0 : i32
    %c0_i32_1 = arith.constant 0 : i32
    return %arg0, %c0_i32, %c0_i32_0 : i32, i32, i32
  }
  func.func @transform_5(%arg0: i32) -> (i32, i32) {
    %c0_i32 = arith.constant 0 : i32
    %c0_i32_0 = arith.constant 0 : i32
    %c0_i32_1 = arith.constant 0 : i32
    return %c0_i32, %c0_i32_0 : i32, i32
  }
  func.func @transform_6(%arg0: i32) -> (i32, i32) {
    %c0_i32 = arith.constant 0 : i32
    %c0_i32_0 = arith.constant 0 : i32
    %c0_i32_1 = arith.constant 0 : i32
    return %c0_i32, %c0_i32_0 : i32, i32
  }
  func.func @transform_7(%arg0: i32) -> (i32, i32) {
    %c0_i32 = arith.constant 0 : i32
    %c0_i32_0 = arith.constant 0 : i32
    %c0_i32_1 = arith.constant 0 : i32
    return %c0_i32, %c0_i32_0 : i32, i32
  }
  func.func @transform_8(%arg0: i32) -> (i32, i32) {
    %c0_i32 = arith.constant 0 : i32
    %c0_i32_0 = arith.constant 0 : i32
    %c0_i32_1 = arith.constant 0 : i32
    return %c0_i32, %c0_i32_0 : i32, i32
  }
  func.func @transform_9(%arg0: i32) -> (i32, i32) {
    %c0_i32 = arith.constant 0 : i32
    %c0_i32_0 = arith.constant 0 : i32
    %c0_i32_1 = arith.constant 0 : i32
    return %c0_i32, %c0_i32_0 : i32, i32
  }
  func.func @transform_10(%arg0: i32) -> (i32, i32) {
    %c0_i32 = arith.constant 0 : i32
    %c0_i32_0 = arith.constant 0 : i32
    %c0_i32_1 = arith.constant 0 : i32
    return %c0_i32, %c0_i32_0 : i32, i32
  }
  func.func @transform_11(%arg0: i32) -> (i32, i32) {
    %c0_i32 = arith.constant 0 : i32
    %c0_i32_0 = arith.constant 0 : i32
    %c0_i32_1 = arith.constant 0 : i32
    return %c0_i32, %c0_i32_0 : i32, i32
  }
  func.func @transform_12(%arg0: i32) -> (i32, i32) {
    %c0_i32 = arith.constant 0 : i32
    %c0_i32_0 = arith.constant 0 : i32
    %c0_i32_1 = arith.constant 0 : i32
    return %c0_i32, %c0_i32_0 : i32, i32
  }
  func.func @transform_13(%arg0: i32) -> (i32, i32) {
    %c0_i32 = arith.constant 0 : i32
    %c0_i32_0 = arith.constant 0 : i32
    %c0_i32_1 = arith.constant 0 : i32
    return %c0_i32, %c0_i32_0 : i32, i32
  }
  func.func @transform_14(%arg0: i32) -> (i32, i32) {
    %c0_i32 = arith.constant 0 : i32
    %c0_i32_0 = arith.constant 0 : i32
    %c0_i32_1 = arith.constant 0 : i32
    return %c0_i32, %c0_i32_0 : i32, i32
  }
  func.func @transform_15(%arg0: i32) -> (i32, i32) {
    %c0_i32 = arith.constant 0 : i32
    %c0_i32_0 = arith.constant 0 : i32
    %c0_i32_1 = arith.constant 0 : i32
    return %c0_i32, %c0_i32_0 : i32, i32
  }
  func.func @transform_16(%arg0: i32) -> (i32, i32) {
    %c0_i32 = arith.constant 0 : i32
    %c0_i32_0 = arith.constant 0 : i32
    %c0_i32_1 = arith.constant 0 : i32
    return %c0_i32, %c0_i32_0 : i32, i32
  }
  func.func @transform_17(%arg0: i32) -> (i32, i32) {
    %c0_i32 = arith.constant 0 : i32
    %c0_i32_0 = arith.constant 0 : i32
    %c0_i32_1 = arith.constant 0 : i32
    return %c0_i32, %c0_i32_0 : i32, i32
  }
  func.func @transform_18(%arg0: i32) -> (i32, i32) {
    %c0_i32 = arith.constant 0 : i32
    %c0_i32_0 = arith.constant 0 : i32
    %c0_i32_1 = arith.constant 0 : i32
    return %c0_i32, %c0_i32_0 : i32, i32
  }
  func.func @transform_19(%arg0: i32) -> (i32, i32) {
    %c0_i32 = arith.constant 0 : i32
    %c0_i32_0 = arith.constant 0 : i32
    %c0_i32_1 = arith.constant 0 : i32
    return %c0_i32, %c0_i32_0 : i32, i32
  }
  func.func @transform_20(%arg0: i32) -> (i32, i32) {
    %c0_i32 = arith.constant 0 : i32
    %c0_i32_0 = arith.constant 0 : i32
    %c0_i32_1 = arith.constant 0 : i32
    return %c0_i32, %c0_i32_0 : i32, i32
  }
  func.func @transform_21(%arg0: i32) -> (i32, i32) {
    %c0_i32 = arith.constant 0 : i32
    %c0_i32_0 = arith.constant 0 : i32
    %c0_i32_1 = arith.constant 0 : i32
    return %c0_i32, %c0_i32_0 : i32, i32
  }
  func.func @transform_22(%arg0: i32) -> (i32, i32, i32) {
    %c0_i32 = arith.constant 0 : i32
    %c0_i32_0 = arith.constant 0 : i32
    %c0_i32_1 = arith.constant 0 : i32
    return %arg0, %c0_i32, %c0_i32_0 : i32, i32, i32
  }
}

</mosaic_0001>

<llo_original>
// kernel: tpu_custom_call.1
$region0: #{tpu_custom_call.1}
  #allocation0 [shape = 'u32[]', space=smem, size = 0x4, offset = 0x4, fixed_abs, tag = 'smem constant byte address 0x4 - core index']
  #allocation1 [shape = 'u32[72,128]{1,0:T(1,128)}', space=vmem, size = 0x9000, scoped, tag = 'internal scratch']
  %s0 = inlined_call_operand.vmem [shape: f32[1,64], index: 0, kind: input, shape index: {}]
  %s1 = inlined_call_operand.vmem [shape: f32[1,64], index: 1, kind: input, shape index: {}]
  %s2 = inlined_call_operand.hbm [shape: f32[8,32,64], index: 2, kind: input, shape index: {}]
  %s3 = inlined_call_operand.hbm [shape: bf16[8,32,32], index: 3, kind: input, shape index: {}]
  %s4 = inlined_call_operand.vmem [shape: s32[8,8,1], index: 4, kind: input, shape index: {}]
  %s5 = inlined_call_operand.hbm [shape: bf16[64,512], index: 5, kind: input, shape index: {}]
  %s6 = inlined_call_operand.hbm [shape: bf16[64,512], index: 6, kind: input, shape index: {}]
  %s7 = inlined_call_operand.vmem [shape: f32[1,512], index: 7, kind: input, shape index: {}]
  %s8 = inlined_call_operand.hbm [shape: bf16[512,256], index: 8, kind: input, shape index: {}]
  %s9 = inlined_call_operand.hbm [shape: bf16[512,256], index: 9, kind: input, shape index: {}]
  %s10 = inlined_call_operand.vmem [shape: f32[1,256], index: 10, kind: input, shape index: {}]
  %s11 = inlined_call_operand.hbm [shape: bf16[256,128], index: 11, kind: input, shape index: {}]
  %s12 = inlined_call_operand.hbm [shape: bf16[256,128], index: 12, kind: input, shape index: {}]
  %s13 = inlined_call_operand.vmem [shape: f32[1,128], index: 13, kind: input, shape index: {}]
  %s14 = inlined_call_operand.vmem [shape: bf16[128,128], index: 14, kind: input, shape index: {}]
  %s15 = inlined_call_operand.hbm [shape: bf16[128,128], index: 15, kind: input, shape index: {}]
  %s16 = inlined_call_operand.vmem [shape: f32[1,128], index: 16, kind: input, shape index: {}]
  %s17 = inlined_call_operand.hbm [shape: bf16[128,128], index: 17, kind: input, shape index: {}]
  %s18 = inlined_call_operand.vmem [shape: f32[1,128], index: 18, kind: input, shape index: {}]
  %s19 = inlined_call_operand.vmem [shape: f32[1,128], index: 19, kind: input, shape index: {}]
  %s20 = inlined_call_operand.hbm [shape: bf16[128,128], index: 20, kind: input, shape index: {}]
  %s21 = inlined_call_operand.vmem [shape: f32[1,128], index: 21, kind: input, shape index: {}]
  %s22 = inlined_call_operand.hbm [shape: f32[8,8,128], index: 22, kind: output, shape index: {}]
  %s23 = sld [smem:[#allocation0]]
  $region165: #{tpu_custom_call.1} parent=0
    _
  %s25 = ssub.s32 1, %s23
  %s26 = scalar_select 0, %s25, %s23
  $region1: #{tpu_custom_call.1} parent=0
    #allocation2 [shape = 'u8[131072]{0}', space=vmem, size = 0x20000, scoped, tag = 'input window, operand 2']
    #allocation3 [shape = 's32[2]{0}', space=sflag, size = 0x8, scoped, tag = 'scoped memory for tpu_custom_call.1']
    #allocation4 [shape = 's32[2]{0}', space=sflag, size = 0x8, scoped, tag = 'scoped memory for tpu_custom_call.1']
    #allocation5 [shape = 'u8[65536]{0}', space=vmem, size = 0x10000, scoped, tag = 'input window, operand 3']
    #allocation6 [shape = 's32[2]{0}', space=sflag, size = 0x8, scoped, tag = 'scoped memory for tpu_custom_call.1']
    #allocation7 [shape = 'u8[65536]{0}', space=vmem, size = 0x10000, scoped, tag = 'input window, operand 5, single buffered']
    #allocation8 [shape = 'u8[65536]{0}', space=vmem, size = 0x10000, scoped, tag = 'input window, operand 6, single buffered']
    #allocation9 [shape = 's32[1]{0}', space=sflag, size = 0x4, scoped, tag = 'scoped memory for tpu_custom_call.1']
    #allocation10 [shape = 'u8[262144]{0}', space=vmem, size = 0x40000, scoped, tag = 'input window, operand 8, single buffered']
    #allocation11 [shape = 'u8[262144]{0}', space=vmem, size = 0x40000, scoped, tag = 'input window, operand 9, single buffered']
    #allocation12 [shape = 's32[1]{0}', space=sflag, size = 0x4, scoped, tag = 'scoped memory for tpu_custom_call.1']
    #allocation13 [shape = 'u8[65536]{0}', space=vmem, size = 0x10000, scoped, tag = 'input window, operand 11, single buffered']
    #allocation14 [shape = 'u8[65536]{0}', space=vmem, size = 0x10000, scoped, tag = 'input window, operand 12, single buffered']
    #allocation15 [shape = 's32[1]{0}', space=sflag, size = 0x4, scoped, tag = 'scoped memory for tpu_custom_call.1']
    #allocation16 [shape = 'u8[32768]{0}', space=vmem, size = 0x8000, scoped, tag = 'input window, operand 15, single buffered']
    #allocation17 [shape = 'u8[32768]{0}', space=vmem, size = 0x8000, scoped, tag = 'input window, operand 17, single buffered']
    #allocation18 [shape = 's32[1]{0}', space=sflag, size = 0x4, scoped, tag = 'scoped memory for tpu_custom_call.1']
    #allocation19 [shape = 'u8[32768]{0}', space=vmem, size = 0x8000, scoped, tag = 'input window, operand 20, single buffered']
    #allocation20 [shape = 'u8[32768]{0}', space=vmem, size = 0x8000, scoped, tag = 'output window, operand 0']
    %27 = vsyncpa [#allocation3], 0
    %s28 = scalar_lea.sflag [#allocation3], 1
    %29 = vsyncpa %s28, 0
    %30 = vsyncpa [#allocation6], 0
    %s31 = scalar_lea.sflag [#allocation6], 1
    %32 = vsyncpa %s31, 0
    %33 = vsyncpa [#allocation9], 0
    %34 = vsyncpa [#allocation12], 0
    %35 = vsyncpa [#allocation15], 0
    %36 = vsyncpa [#allocation18], 0
    %37 = vsyncpa [#allocation4], 0
    %s38 = scalar_lea.sflag [#allocation4], 1
    %39 = vsyncpa %s38, 0
    loop: start=0, step=1, limit=4
    $region2: #{tpu_custom_call.1} parent=1 // loop_pre_header
      _
    $region3: #{tpu_custom_call.1} parent=1 // loop_header
      %s41 = sphi 0, %s45
      %p42 = scmp.ge.s32.totalorder %s41, 4
      %s49 = sphi 0, %s49
      %s51 = sphi 0, %s49
      %s52 = sphi 0, %s51
      %s66 = sphi 0, %s52
      %s70 = sphi 0, %s70
      %s72 = sphi 0, %s70
      %s73 = sphi 0, %s72
      %s87 = sphi 0, %s73
      %s93 = sphi 0, %s95
      %s96 = sphi 0, %s93
      %s97 = sphi 0, %s96
      %s113 = sphi 0, %s97
      %s119 = sphi 0, %s121
      %s122 = sphi 0, %s119
      %s123 = sphi 0, %s122
      %s139 = sphi 0, %s123
      %s145 = sphi 0, %s147
      %s148 = sphi 0, %s145
      %s149 = sphi 0, %s148
      %s165 = sphi 0, %s149
      %s169 = sphi 0, %s169
      %s171 = sphi 0, %s169
      %s172 = sphi 0, %s171
      %s186 = sphi 0, %s172
      %s190 = sphi 0, %s190
      %s192 = sphi 0, %s190
      %s193 = sphi 0, %s192
      %s207 = sphi 0, %s193
      %s211 = sphi 0, %s211
      %s213 = sphi 0, %s211
      %s214 = sphi 0, %s213
      %s228 = sphi 0, %s214
      %s232 = sphi 0, %s232
      %s234 = sphi 0, %s232
      %s235 = sphi 0, %s234
      %s249 = sphi 0, %s235
      %s253 = sphi 0, %s253
      %s255 = sphi 0, %s253
      %s256 = sphi 0, %s255
      %s270 = sphi 0, %s256
      %s274 = sphi 0, %s274
      %s276 = sphi 0, %s274
      %s277 = sphi 0, %s276
      %s291 = sphi 0, %s277
      %s295 = sphi 0, %s295
      %s297 = sphi 0, %s295
      %s298 = sphi 0, %s297
      %s312 = sphi 0, %s298
      %s316 = sphi 0, %s316
      %s318 = sphi 0, %s316
      %s319 = sphi 0, %s318
      %s333 = sphi 0, %s319
      %s337 = sphi 0, %s337
      %s339 = sphi 0, %s337
      %s340 = sphi 0, %s339
      %s354 = sphi 0, %s340
      %s358 = sphi 0, %s358
      %s360 = sphi 0, %s358
      %s361 = sphi 0, %s360
      %s375 = sphi 0, %s361
      %s379 = sphi 0, %s379
      %s381 = sphi 0, %s379
      %s382 = sphi 0, %s381
      %s396 = sphi 0, %s382
      %s400 = sphi 0, %s400
      %s402 = sphi 0, %s400
      %s403 = sphi 0, %s402
      %s417 = sphi 0, %s403
      %s421 = sphi 0, %s421
      %s423 = sphi 0, %s421
      %s424 = sphi 0, %s423
      %s438 = sphi 0, %s424
      %s442 = sphi 0, %s442
      %s444 = sphi 0, %s442
      %s445 = sphi 0, %s444
      %s459 = sphi 0, %s445
      %s463 = sphi 0, %s463
      %s465 = sphi 0, %s463
      %s466 = sphi 0, %s465
      %s480 = sphi 0, %s466
      %s484 = sphi 0, %s484
      %s486 = sphi 0, %s484
      %s487 = sphi 0, %s486
      %s501 = sphi 0, %s487
      %s505 = sphi 0, %s505
      %s507 = sphi 0, %s505
      %s508 = sphi 0, %s507
      %s522 = sphi 0, %s508
      %s528 = sphi 0, %s530
      %s531 = sphi 0, %s528
      %s532 = sphi 0, %s531
      %s548 = sphi 0, %s532
    $region4: #{tpu_custom_call.1} parent=1 // loop_header_branch
      %44 = sbr.rel (%p42) target = $region8
    $region5: #{tpu_custom_call.1} parent=1 // loop_body
      %s46 = ssub.s32 %s41, 1
      %s47 = ssub.s32 %s41, 2
      %s48 = sadd.s32 %s41, 1
      %s50 = sadd.s32 %s49, 1
      %p53 = scmp.eq.s32.totalorder %s41, 1
      %p54 = scmp.ne.s32.totalorder %s49, %s51
      %p55 = scmp.eq.s32.totalorder %s41, 0
      %p56 = por %p54, %p55
      %p57 = scmp.ne.s32.totalorder %s49, %s51
      %p58 = scmp.eq.s32.totalorder %s46, 1
      %p59 = por %p57, %p58
      %p60 = scmp.ne.s32.totalorder %s51, %s52
      %p61 = scmp.eq.s32.totalorder %s46, 0
      %p62 = por %p60, %p61
      %p63 = scmp.ne.s32.totalorder %s51, %s52
      %p64 = scmp.eq.s32.totalorder %s47, 1
      %p65 = por %p63, %p64
      %p67 = scmp.ne.s32.totalorder %s52, %s66
      %p68 = scmp.eq.s32.totalorder %s47, 0
      %p69 = por %p67, %p68
      %s71 = sadd.s32 %s70, 1
      %p74 = scmp.eq.s32.totalorder %s41, 1
      %p75 = scmp.ne.s32.totalorder %s70, %s72
      %p76 = scmp.eq.s32.totalorder %s41, 0
      %p77 = por %p75, %p76
      %p78 = scmp.ne.s32.totalorder %s70, %s72
      %p79 = scmp.eq.s32.totalorder %s46, 1
      %p80 = por %p78, %p79
      %p81 = scmp.ne.s32.totalorder %s72, %s73
      %p82 = scmp.eq.s32.totalorder %s46, 0
      %p83 = por %p81, %p82
      %p84 = scmp.ne.s32.totalorder %s72, %s73
      %p85 = scmp.eq.s32.totalorder %s47, 1
      %p86 = por %p84, %p85
      %p88 = scmp.ne.s32.totalorder %s73, %s87
      %p89 = scmp.eq.s32.totalorder %s47, 0
      %p90 = por %p88, %p89
      %s91 = ssub.s32 %s41, %s48
      %p92 = scmp.eq.s32.totalorder %s91, 0
      %s94 = sadd.s32 %s93, 1
      %s95 = scalar_select %p92, %s93, %s94
      %p98 = pneg %p92
      %p99 = scmp.eq.s32.totalorder %s41, 1
      %p100 = por %p98, %p99
      %p101 = scmp.ne.s32.totalorder %s93, %s96
      %p102 = scmp.eq.s32.totalorder %s41, 0
      %p103 = por %p101, %p102
      %p104 = scmp.ne.s32.totalorder %s93, %s96
      %p105 = scmp.eq.s32.totalorder %s46, 1
      %p106 = por %p104, %p105
      %p107 = scmp.ne.s32.totalorder %s96, %s97
      %p108 = scmp.eq.s32.totalorder %s46, 0
      %p109 = por %p107, %p108
      %p110 = scmp.ne.s32.totalorder %s96, %s97
      %p111 = scmp.eq.s32.totalorder %s47, 1
      %p112 = por %p110, %p111
      %p114 = scmp.ne.s32.totalorder %s97, %s113
      %p115 = scmp.eq.s32.totalorder %s47, 0
      %p116 = por %p114, %p115
      %s117 = ssub.s32 %s41, %s48
      %p118 = scmp.eq.s32.totalorder %s117, 0
      %s120 = sadd.s32 %s119, 1
      %s121 = scalar_select %p118, %s119, %s120
      %p124 = pneg %p118
      %p125 = scmp.eq.s32.totalorder %s41, 1
      %p126 = por %p124, %p125
      %p127 = scmp.ne.s32.totalorder %s119, %s122
      %p128 = scmp.eq.s32.totalorder %s41, 0
      %p129 = por %p127, %p128
      %p130 = scmp.ne.s32.totalorder %s119, %s122
      %p131 = scmp.eq.s32.totalorder %s46, 1
      %p132 = por %p130, %p131
      %p133 = scmp.ne.s32.totalorder %s122, %s123
      %p134 = scmp.eq.s32.totalorder %s46, 0
      %p135 = por %p133, %p134
      %p136 = scmp.ne.s32.totalorder %s122, %s123
      %p137 = scmp.eq.s32.totalorder %s47, 1
      %p138 = por %p136, %p137
      %p140 = scmp.ne.s32.totalorder %s123, %s139
      %p141 = scmp.eq.s32.totalorder %s47, 0
      %p142 = por %p140, %p141
      %s143 = ssub.s32 %s41, %s48
      %p144 = scmp.eq.s32.totalorder %s143, 0
      %s146 = sadd.s32 %s145, 1
      %s147 = scalar_select %p144, %s145, %s146
      %p150 = pneg %p144
      %p151 = scmp.eq.s32.totalorder %s41, 1
      %p152 = por %p150, %p151
      %p153 = scmp.ne.s32.totalorder %s145, %s148
      %p154 = scmp.eq.s32.totalorder %s41, 0
      %p155 = por %p153, %p154
      %p156 = scmp.ne.s32.totalorder %s145, %s148
      %p157 = scmp.eq.s32.totalorder %s46, 1
      %p158 = por %p156, %p157
      %p159 = scmp.ne.s32.totalorder %s148, %s149
      %p160 = scmp.eq.s32.totalorder %s46, 0
      %p161 = por %p159, %p160
      %p162 = scmp.ne.s32.totalorder %s148, %s149
      %p163 = scmp.eq.s32.totalorder %s47, 1
      %p164 = por %p162, %p163
      %p166 = scmp.ne.s32.totalorder %s149, %s165
      %p167 = scmp.eq.s32.totalorder %s47, 0
      %p168 = por %p166, %p167
      %s170 = sadd.s32 %s169, 1
      %p173 = scmp.eq.s32.totalorder %s41, 1
      %p174 = scmp.ne.s32.totalorder %s169, %s171
      %p175 = scmp.eq.s32.totalorder %s41, 0
      %p176 = por %p174, %p175
      %p177 = scmp.ne.s32.totalorder %s169, %s171
      %p178 = scmp.eq.s32.totalorder %s46, 1
      %p179 = por %p177, %p178
      %p180 = scmp.ne.s32.totalorder %s171, %s172
      %p181 = scmp.eq.s32.totalorder %s46, 0
      %p182 = por %p180, %p181
      %p183 = scmp.ne.s32.totalorder %s171, %s172
      %p184 = scmp.eq.s32.totalorder %s47, 1
      %p185 = por %p183, %p184
      %p187 = scmp.ne.s32.totalorder %s172, %s186
      %p188 = scmp.eq.s32.totalorder %s47, 0
      %p189 = por %p187, %p188
      %s191 = sadd.s32 %s190, 1
      %p194 = scmp.eq.s32.totalorder %s41, 1
      %p195 = scmp.ne.s32.totalorder %s190, %s192
      %p196 = scmp.eq.s32.totalorder %s41, 0
      %p197 = por %p195, %p196
      %p198 = scmp.ne.s32.totalorder %s190, %s192
      %p199 = scmp.eq.s32.totalorder %s46, 1
      %p200 = por %p198, %p199
      %p201 = scmp.ne.s32.totalorder %s192, %s193
      %p202 = scmp.eq.s32.totalorder %s46, 0
      %p203 = por %p201, %p202
      %p204 = scmp.ne.s32.totalorder %s192, %s193
      %p205 = scmp.eq.s32.totalorder %s47, 1
      %p206 = por %p204, %p205
      %p208 = scmp.ne.s32.totalorder %s193, %s207
      %p209 = scmp.eq.s32.totalorder %s47, 0
      %p210 = por %p208, %p209
      %s212 = sadd.s32 %s211, 1
      %p215 = scmp.eq.s32.totalorder %s41, 1
      %p216 = scmp.ne.s32.totalorder %s211, %s213
      %p217 = scmp.eq.s32.totalorder %s41, 0
      %p218 = por %p216, %p217
      %p219 = scmp.ne.s32.totalorder %s211, %s213
      %p220 = scmp.eq.s32.totalorder %s46, 1
      %p221 = por %p219, %p220
      %p222 = scmp.ne.s32.totalorder %s213, %s214
      %p223 = scmp.eq.s32.totalorder %s46, 0
      %p224 = por %p222, %p223
      %p225 = scmp.ne.s32.totalorder %s213, %s214
      %p226 = scmp.eq.s32.totalorder %s47, 1
      %p227 = por %p225, %p226
      %p229 = scmp.ne.s32.totalorder %s214, %s228
      %p230 = scmp.eq.s32.totalorder %s47, 0
      %p231 = por %p229, %p230
      %s233 = sadd.s32 %s232, 1
      %p236 = scmp.eq.s32.totalorder %s41, 1
      %p237 = scmp.ne.s32.totalorder %s232, %s234
      %p238 = scmp.eq.s32.totalorder %s41, 0
      %p239 = por %p237, %p238
      %p240 = scmp.ne.s32.totalorder %s232, %s234
      %p241 = scmp.eq.s32.totalorder %s46, 1
      %p242 = por %p240, %p241
      %p243 = scmp.ne.s32.totalorder %s234, %s235
      %p244 = scmp.eq.s32.totalorder %s46, 0
      %p245 = por %p243, %p244
      %p246 = scmp.ne.s32.totalorder %s234, %s235
      %p247 = scmp.eq.s32.totalorder %s47, 1
      %p248 = por %p246, %p247
      %p250 = scmp.ne.s32.totalorder %s235, %s249
      %p251 = scmp.eq.s32.totalorder %s47, 0
      %p252 = por %p250, %p251
      %s254 = sadd.s32 %s253, 1
      %p257 = scmp.eq.s32.totalorder %s41, 1
      %p258 = scmp.ne.s32.totalorder %s253, %s255
      %p259 = scmp.eq.s32.totalorder %s41, 0
      %p260 = por %p258, %p259
      %p261 = scmp.ne.s32.totalorder %s253, %s255
      %p262 = scmp.eq.s32.totalorder %s46, 1
      %p263 = por %p261, %p262
      %p264 = scmp.ne.s32.totalorder %s255, %s256
      %p265 = scmp.eq.s32.totalorder %s46, 0
      %p266 = por %p264, %p265
      %p267 = scmp.ne.s32.totalorder %s255, %s256
      %p268 = scmp.eq.s32.totalorder %s47, 1
      %p269 = por %p267, %p268
      %p271 = scmp.ne.s32.totalorder %s256, %s270
      %p272 = scmp.eq.s32.totalorder %s47, 0
      %p273 = por %p271, %p272
      %s275 = sadd.s32 %s274, 1
      %p278 = scmp.eq.s32.totalorder %s41, 1
      %p279 = scmp.ne.s32.totalorder %s274, %s276
      %p280 = scmp.eq.s32.totalorder %s41, 0
      %p281 = por %p279, %p280
      %p282 = scmp.ne.s32.totalorder %s274, %s276
      %p283 = scmp.eq.s32.totalorder %s46, 1
      %p284 = por %p282, %p283
      %p285 = scmp.ne.s32.totalorder %s276, %s277
      %p286 = scmp.eq.s32.totalorder %s46, 0
      %p287 = por %p285, %p286
      %p288 = scmp.ne.s32.totalorder %s276, %s277
      %p289 = scmp.eq.s32.totalorder %s47, 1
      %p290 = por %p288, %p289
      %p292 = scmp.ne.s32.totalorder %s277, %s291
      %p293 = scmp.eq.s32.totalorder %s47, 0
      %p294 = por %p292, %p293
      %s296 = sadd.s32 %s295, 1
      %p299 = scmp.eq.s32.totalorder %s41, 1
      %p300 = scmp.ne.s32.totalorder %s295, %s297
      %p301 = scmp.eq.s32.totalorder %s41, 0
      %p302 = por %p300, %p301
      %p303 = scmp.ne.s32.totalorder %s295, %s297
      %p304 = scmp.eq.s32.totalorder %s46, 1
      %p305 = por %p303, %p304
      %p306 = scmp.ne.s32.totalorder %s297, %s298
      %p307 = scmp.eq.s32.totalorder %s46, 0
      %p308 = por %p306, %p307
      %p309 = scmp.ne.s32.totalorder %s297, %s298
      %p310 = scmp.eq.s32.totalorder %s47, 1
      %p311 = por %p309, %p310
      %p313 = scmp.ne.s32.totalorder %s298, %s312
      %p314 = scmp.eq.s32.totalorder %s47, 0
      %p315 = por %p313, %p314
      %s317 = sadd.s32 %s316, 1
      %p320 = scmp.eq.s32.totalorder %s41, 1
      %p321 = scmp.ne.s32.totalorder %s316, %s318
      %p322 = scmp.eq.s32.totalorder %s41, 0
      %p323 = por %p321, %p322
      %p324 = scmp.ne.s32.totalorder %s316, %s318
      %p325 = scmp.eq.s32.totalorder %s46, 1
      %p326 = por %p324, %p325
      %p327 = scmp.ne.s32.totalorder %s318, %s319
      %p328 = scmp.eq.s32.totalorder %s46, 0
      %p329 = por %p327, %p328
      %p330 = scmp.ne.s32.totalorder %s318, %s319
      %p331 = scmp.eq.s32.totalorder %s47, 1
      %p332 = por %p330, %p331
      %p334 = scmp.ne.s32.totalorder %s319, %s333
      %p335 = scmp.eq.s32.totalorder %s47, 0
      %p336 = por %p334, %p335
      %s338 = sadd.s32 %s337, 1
      %p341 = scmp.eq.s32.totalorder %s41, 1
      %p342 = scmp.ne.s32.totalorder %s337, %s339
      %p343 = scmp.eq.s32.totalorder %s41, 0
      %p344 = por %p342, %p343
      %p345 = scmp.ne.s32.totalorder %s337, %s339
      %p346 = scmp.eq.s32.totalorder %s46, 1
      %p347 = por %p345, %p346
      %p348 = scmp.ne.s32.totalorder %s339, %s340
      %p349 = scmp.eq.s32.totalorder %s46, 0
      %p350 = por %p348, %p349
      %p351 = scmp.ne.s32.totalorder %s339, %s340
      %p352 = scmp.eq.s32.totalorder %s47, 1
      %p353 = por %p351, %p352
      %p355 = scmp.ne.s32.totalorder %s340, %s354
      %p356 = scmp.eq.s32.totalorder %s47, 0
      %p357 = por %p355, %p356
      %s359 = sadd.s32 %s358, 1
      %p362 = scmp.eq.s32.totalorder %s41, 1
      %p363 = scmp.ne.s32.totalorder %s358, %s360
      %p364 = scmp.eq.s32.totalorder %s41, 0
      %p365 = por %p363, %p364
      %p366 = scmp.ne.s32.totalorder %s358, %s360
      %p367 = scmp.eq.s32.totalorder %s46, 1
      %p368 = por %p366, %p367
      %p369 = scmp.ne.s32.totalorder %s360, %s361
      %p370 = scmp.eq.s32.totalorder %s46, 0
      %p371 = por %p369, %p370
      %p372 = scmp.ne.s32.totalorder %s360, %s361
      %p373 = scmp.eq.s32.totalorder %s47, 1
      %p374 = por %p372, %p373
      %p376 = scmp.ne.s32.totalorder %s361, %s375
      %p377 = scmp.eq.s32.totalorder %s47, 0
      %p378 = por %p376, %p377
      %s380 = sadd.s32 %s379, 1
      %p383 = scmp.eq.s32.totalorder %s41, 1
      %p384 = scmp.ne.s32.totalorder %s379, %s381
      %p385 = scmp.eq.s32.totalorder %s41, 0
      %p386 = por %p384, %p385
      %p387 = scmp.ne.s32.totalorder %s379, %s381
      %p388 = scmp.eq.s32.totalorder %s46, 1
      %p389 = por %p387, %p388
      %p390 = scmp.ne.s32.totalorder %s381, %s382
      %p391 = scmp.eq.s32.totalorder %s46, 0
      %p392 = por %p390, %p391
      %p393 = scmp.ne.s32.totalorder %s381, %s382
      %p394 = scmp.eq.s32.totalorder %s47, 1
      %p395 = por %p393, %p394
      %p397 = scmp.ne.s32.totalorder %s382, %s396
      %p398 = scmp.eq.s32.totalorder %s47, 0
      %p399 = por %p397, %p398
      %s401 = sadd.s32 %s400, 1
      %p404 = scmp.eq.s32.totalorder %s41, 1
      %p405 = scmp.ne.s32.totalorder %s400, %s402
      %p406 = scmp.eq.s32.totalorder %s41, 0
      %p407 = por %p405, %p406
      %p408 = scmp.ne.s32.totalorder %s400, %s402
      %p409 = scmp.eq.s32.totalorder %s46, 1
      %p410 = por %p408, %p409
      %p411 = scmp.ne.s32.totalorder %s402, %s403
      %p412 = scmp.eq.s32.totalorder %s46, 0
      %p413 = por %p411, %p412
      %p414 = scmp.ne.s32.totalorder %s402, %s403
      %p415 = scmp.eq.s32.totalorder %s47, 1
      %p416 = por %p414, %p415
      %p418 = scmp.ne.s32.totalorder %s403, %s417
      %p419 = scmp.eq.s32.totalorder %s47, 0
      %p420 = por %p418, %p419
      %s422 = sadd.s32 %s421, 1
      %p425 = scmp.eq.s32.totalorder %s41, 1
      %p426 = scmp.ne.s32.totalorder %s421, %s423
      %p427 = scmp.eq.s32.totalorder %s41, 0
      %p428 = por %p426, %p427
      %p429 = scmp.ne.s32.totalorder %s421, %s423
      %p430 = scmp.eq.s32.totalorder %s46, 1
      %p431 = por %p429, %p430
      %p432 = scmp.ne.s32.totalorder %s423, %s424
      %p433 = scmp.eq.s32.totalorder %s46, 0
      %p434 = por %p432, %p433
      %p435 = scmp.ne.s32.totalorder %s423, %s424
      %p436 = scmp.eq.s32.totalorder %s47, 1
      %p437 = por %p435, %p436
      %p439 = scmp.ne.s32.totalorder %s424, %s438
      %p440 = scmp.eq.s32.totalorder %s47, 0
      %p441 = por %p439, %p440
      %s443 = sadd.s32 %s442, 1
      %p446 = scmp.eq.s32.totalorder %s41, 1
      %p447 = scmp.ne.s32.totalorder %s442, %s444
      %p448 = scmp.eq.s32.totalorder %s41, 0
      %p449 = por %p447, %p448
      %p450 = scmp.ne.s32.totalorder %s442, %s444
      %p451 = scmp.eq.s32.totalorder %s46, 1
      %p452 = por %p450, %p451
      %p453 = scmp.ne.s32.totalorder %s444, %s445
      %p454 = scmp.eq.s32.totalorder %s46, 0
      %p455 = por %p453, %p454
      %p456 = scmp.ne.s32.totalorder %s444, %s445
      %p457 = scmp.eq.s32.totalorder %s47, 1
      %p458 = por %p456, %p457
      %p460 = scmp.ne.s32.totalorder %s445, %s459
      %p461 = scmp.eq.s32.totalorder %s47, 0
      %p462 = por %p460, %p461
      %s464 = sadd.s32 %s463, 1
      %p467 = scmp.eq.s32.totalorder %s41, 1
      %p468 = scmp.ne.s32.totalorder %s463, %s465
      %p469 = scmp.eq.s32.totalorder %s41, 0
      %p470 = por %p468, %p469
      %p471 = scmp.ne.s32.totalorder %s463, %s465
      %p472 = scmp.eq.s32.totalorder %s46, 1
      %p473 = por %p471, %p472
      %p474 = scmp.ne.s32.totalorder %s465, %s466
      %p475 = scmp.eq.s32.totalorder %s46, 0
      %p476 = por %p474, %p475
      %p477 = scmp.ne.s32.totalorder %s465, %s466
      %p478 = scmp.eq.s32.totalorder %s47, 1
      %p479 = por %p477, %p478
      %p481 = scmp.ne.s32.totalorder %s466, %s480
      %p482 = scmp.eq.s32.totalorder %s47, 0
      %p483 = por %p481, %p482
      %s485 = sadd.s32 %s484, 1
      %p488 = scmp.eq.s32.totalorder %s41, 1
      %p489 = scmp.ne.s32.totalorder %s484, %s486
      %p490 = scmp.eq.s32.totalorder %s41, 0
      %p491 = por %p489, %p490
      %p492 = scmp.ne.s32.totalorder %s484, %s486
      %p493 = scmp.eq.s32.totalorder %s46, 1
      %p494 = por %p492, %p493
      %p495 = scmp.ne.s32.totalorder %s486, %s487
      %p496 = scmp.eq.s32.totalorder %s46, 0
      %p497 = por %p495, %p496
      %p498 = scmp.ne.s32.totalorder %s486, %s487
      %p499 = scmp.eq.s32.totalorder %s47, 1
      %p500 = por %p498, %p499
      %p502 = scmp.ne.s32.totalorder %s487, %s501
      %p503 = scmp.eq.s32.totalorder %s47, 0
      %p504 = por %p502, %p503
      %s506 = sadd.s32 %s505, 1
      %p509 = scmp.eq.s32.totalorder %s41, 1
      %p510 = scmp.ne.s32.totalorder %s505, %s507
      %p511 = scmp.eq.s32.totalorder %s41, 0
      %p512 = por %p510, %p511
      %p513 = scmp.ne.s32.totalorder %s505, %s507
      %p514 = scmp.eq.s32.totalorder %s46, 1
      %p515 = por %p513, %p514
      %p516 = scmp.ne.s32.totalorder %s507, %s508
      %p517 = scmp.eq.s32.totalorder %s46, 0
      %p518 = por %p516, %p517
      %p519 = scmp.ne.s32.totalorder %s507, %s508
      %p520 = scmp.eq.s32.totalorder %s47, 1
      %p521 = por %p519, %p520
      %p523 = scmp.ne.s32.totalorder %s508, %s522
      %p524 = scmp.eq.s32.totalorder %s47, 0
      %p525 = por %p523, %p524
      %s526 = ssub.s32 %s41, %s48
      %p527 = scmp.eq.s32.totalorder %s526, 0
      %s529 = sadd.s32 %s528, 1
      %s530 = scalar_select %p527, %s528, %s529
      %p533 = pneg %p527
      %p534 = scmp.eq.s32.totalorder %s41, 1
      %p535 = por %p533, %p534
      %p536 = scmp.ne.s32.totalorder %s528, %s531
      %p537 = scmp.eq.s32.totalorder %s41, 0
      %p538 = por %p536, %p537
      %p539 = scmp.ne.s32.totalorder %s528, %s531
      %p540 = scmp.eq.s32.totalorder %s46, 1
      %p541 = por %p539, %p540
      %p542 = scmp.ne.s32.totalorder %s531, %s532
      %p543 = scmp.eq.s32.totalorder %s46, 0
      %p544 = por %p542, %p543
      %p545 = scmp.ne.s32.totalorder %s531, %s532
      %p546 = scmp.eq.s32.totalorder %s47, 1
      %p547 = por %p545, %p546
      %p549 = scmp.ne.s32.totalorder %s532, %s548
      %p550 = scmp.eq.s32.totalorder %s47, 0
      %p551 = por %p549, %p550
      %p552 = scmp.le.s32.totalorder 1, %s41
      %p553 = scmp.lt.s32.totalorder %s41, 3
      %p554 = pnand %p552, %p553
      %p555 = pneg %p554
      // Predicated region
      $region9: #{tpu_custom_call.1} parent=5 // pred_check
        _
      $region10: #{tpu_custom_call.1} parent=5 // pred_check_branch
        %557 = sbr.rel (%p554) target = $region12
      $region11: #{tpu_custom_call.1} parent=5 // pred_region
        %s558 = ssub.s32 %s41, 1
        // Predicated region
        $region13: #{tpu_custom_call.1} parent=11 // pred_check
          %p559 = pneg %p62
        $region14: #{tpu_custom_call.1} parent=11 // pred_check_branch
          %561 = sbr.rel (%p559) target = $region16
        $region15: #{tpu_custom_call.1} parent=11 // pred_region
          _
        $region16: #{tpu_custom_call.1} parent=11 // pred_fallthru
          _
        // Predicated region
        $region17: #{tpu_custom_call.1} parent=11 // pred_check
          %p562 = pneg %p83
        $region18: #{tpu_custom_call.1} parent=11 // pred_check_branch
          %564 = sbr.rel (%p562) target = $region20
        $region19: #{tpu_custom_call.1} parent=11 // pred_region
          _
        $region20: #{tpu_custom_call.1} parent=11 // pred_fallthru
          _
        // Predicated region
        $region21: #{tpu_custom_call.1} parent=11 // pred_check
          %p565 = pneg %p182
        $region22: #{tpu_custom_call.1} parent=11 // pred_check_branch
          %567 = sbr.rel (%p565) target = $region24
        $region23: #{tpu_custom_call.1} parent=11 // pred_region
          %569 = vsyncadd [#allocation6], 0
          %s570 = sshll.u32 %s5, 4
          %s571 = int_to_ptr.hbm [resolvable:$true] %s570
          %s572 = sshll.u32 [#allocation7], 4
          %s573 = int_to_ptr.vmem [resolvable:$true] %s572
          %578 = dma.hbm_to_vmem [thread:$0]  %s571, 2048, %s573, [#allocation6], 256, 256, 16
        $region24: #{tpu_custom_call.1} parent=11 // pred_fallthru
          _
        // Predicated region
        $region25: #{tpu_custom_call.1} parent=11 // pred_check
          %p579 = pneg %p203
        $region26: #{tpu_custom_call.1} parent=11 // pred_check_branch
          %581 = sbr.rel (%p579) target = $region28
        $region27: #{tpu_custom_call.1} parent=11 // pred_region
          %583 = vsyncadd [#allocation9], 0
          %s584 = sshll.u32 %s6, 4
          %s585 = int_to_ptr.hbm [resolvable:$true] %s584
          %s586 = sshll.u32 [#allocation8], 4
          %s587 = int_to_ptr.vmem [resolvable:$true] %s586
          %592 = dma.hbm_to_vmem [thread:$0]  %s585, 2048, %s587, [#allocation9], 256, 256, 16
        $region28: #{tpu_custom_call.1} parent=11 // pred_fallthru
          _
        // Predicated region
        $region29: #{tpu_custom_call.1} parent=11 // pred_check
          %p593 = pneg %p224
        $region30: #{tpu_custom_call.1} parent=11 // pred_check_branch
          %595 = sbr.rel (%p593) target = $region32
        $region31: #{tpu_custom_call.1} parent=11 // pred_region
          _
        $region32: #{tpu_custom_call.1} parent=11 // pred_fallthru
          _
        // Predicated region
        $region33: #{tpu_custom_call.1} parent=11 // pred_check
          %p596 = pneg %p245
        $region34: #{tpu_custom_call.1} parent=11 // pred_check_branch
          %598 = sbr.rel (%p596) target = $region36
        $region35: #{tpu_custom_call.1} parent=11 // pred_region
          %600 = vsyncadd [#allocation9], 0
          %s601 = sshll.u32 %s8, 4
          %s602 = int_to_ptr.hbm [resolvable:$true] %s601
          %s603 = sshll.u32 [#allocation10], 4
          %s604 = int_to_ptr.vmem [resolvable:$true] %s603
          %609 = dma.hbm_to_vmem [thread:$0]  %s602, 8192, %s604, [#allocation9], 128, 128, 8
        $region36: #{tpu_custom_call.1} parent=11 // pred_fallthru
          _
        // Predicated region
        $region37: #{tpu_custom_call.1} parent=11 // pred_check
          %p610 = pneg %p266
        $region38: #{tpu_custom_call.1} parent=11 // pred_check_branch
          %612 = sbr.rel (%p610) target = $region40
        $region39: #{tpu_custom_call.1} parent=11 // pred_region
          %614 = vsyncadd [#allocation12], 0
          %s615 = sshll.u32 %s9, 4
          %s616 = int_to_ptr.hbm [resolvable:$true] %s615
          %s617 = sshll.u32 [#allocation11], 4
          %s618 = int_to_ptr.vmem [resolvable:$true] %s617
          %623 = dma.hbm_to_vmem [thread:$0]  %s616, 8192, %s618, [#allocation12], 128, 128, 8
        $region40: #{tpu_custom_call.1} parent=11 // pred_fallthru
          _
        // Predicated region
        $region41: #{tpu_custom_call.1} parent=11 // pred_check
          %p624 = pneg %p287
        $region42: #{tpu_custom_call.1} parent=11 // pred_check_branch
          %626 = sbr.rel (%p624) target = $region44
        $region43: #{tpu_custom_call.1} parent=11 // pred_region
          _
        $region44: #{tpu_custom_call.1} parent=11 // pred_fallthru
          _
        // Predicated region
        $region45: #{tpu_custom_call.1} parent=11 // pred_check
          %p627 = pneg %p308
        $region46: #{tpu_custom_call.1} parent=11 // pred_check_branch
          %629 = sbr.rel (%p627) target = $region48
        $region47: #{tpu_custom_call.1} parent=11 // pred_region
          %631 = vsyncadd [#allocation12], 0
          %s632 = sshll.u32 %s11, 4
          %s633 = int_to_ptr.hbm [resolvable:$true] %s632
          %s634 = sshll.u32 [#allocation13], 4
          %s635 = int_to_ptr.vmem [resolvable:$true] %s634
          %640 = dma.hbm_to_vmem [thread:$0]  %s633, 2048, %s635, [#allocation12], 64, 64, 4
        $region48: #{tpu_custom_call.1} parent=11 // pred_fallthru
          _
        // Predicated region
        $region49: #{tpu_custom_call.1} parent=11 // pred_check
          %p641 = pneg %p329
        $region50: #{tpu_custom_call.1} parent=11 // pred_check_branch
          %643 = sbr.rel (%p641) target = $region52
        $region51: #{tpu_custom_call.1} parent=11 // pred_region
          %645 = vsyncadd [#allocation15], 0
          %s646 = sshll.u32 %s12, 4
          %s647 = int_to_ptr.hbm [resolvable:$true] %s646
          %s648 = sshll.u32 [#allocation14], 4
          %s649 = int_to_ptr.vmem [resolvable:$true] %s648
          %654 = dma.hbm_to_vmem [thread:$0]  %s647, 2048, %s649, [#allocation15], 64, 64, 4
        $region52: #{tpu_custom_call.1} parent=11 // pred_fallthru
          _
        // Predicated region
        $region53: #{tpu_custom_call.1} parent=11 // pred_check
          %p655 = pneg %p350
        $region54: #{tpu_custom_call.1} parent=11 // pred_check_branch
          %657 = sbr.rel (%p655) target = $region56
        $region55: #{tpu_custom_call.1} parent=11 // pred_region
          _
        $region56: #{tpu_custom_call.1} parent=11 // pred_fallthru
          _
        // Predicated region
        $region57: #{tpu_custom_call.1} parent=11 // pred_check
          %p658 = pneg %p371
        $region58: #{tpu_custom_call.1} parent=11 // pred_check_branch
          %660 = sbr.rel (%p658) target = $region60
        $region59: #{tpu_custom_call.1} parent=11 // pred_region
          _
        $region60: #{tpu_custom_call.1} parent=11 // pred_fallthru
          _
        // Predicated region
        $region61: #{tpu_custom_call.1} parent=11 // pred_check
          %p661 = pneg %p392
        $region62: #{tpu_custom_call.1} parent=11 // pred_check_branch
          %663 = sbr.rel (%p661) target = $region64
        $region63: #{tpu_custom_call.1} parent=11 // pred_region
          %665 = vsyncadd [#allocation15], 0
          %s666 = sshll.u32 %s15, 4
          %s667 = int_to_ptr.hbm [resolvable:$true] %s666
          %s668 = sshll.u32 [#allocation16], 4
          %s669 = int_to_ptr.vmem [resolvable:$true] %s668
          %674 = dma.hbm_to_vmem [thread:$0]  %s667, 1024, %s669, [#allocation15], 64, 64, 4
        $region64: #{tpu_custom_call.1} parent=11 // pred_fallthru
          _
        // Predicated region
        $region65: #{tpu_custom_call.1} parent=11 // pred_check
          %p675 = pneg %p413
        $region66: #{tpu_custom_call.1} parent=11 // pred_check_branch
          %677 = sbr.rel (%p675) target = $region68
        $region67: #{tpu_custom_call.1} parent=11 // pred_region
          _
        $region68: #{tpu_custom_call.1} parent=11 // pred_fallthru
          _
        // Predicated region
        $region69: #{tpu_custom_call.1} parent=11 // pred_check
          %p678 = pneg %p434
        $region70: #{tpu_custom_call.1} parent=11 // pred_check_branch
          %680 = sbr.rel (%p678) target = $region72
        $region71: #{tpu_custom_call.1} parent=11 // pred_region
          %682 = vsyncadd [#allocation18], 0
          %s683 = sshll.u32 %s17, 4
          %s684 = int_to_ptr.hbm [resolvable:$true] %s683
          %s685 = sshll.u32 [#allocation17], 4
          %s686 = int_to_ptr.vmem [resolvable:$true] %s685
          %691 = dma.hbm_to_vmem [thread:$0]  %s684, 1024, %s686, [#allocation18], 64, 64, 4
        $region72: #{tpu_custom_call.1} parent=11 // pred_fallthru
          _
        // Predicated region
        $region73: #{tpu_custom_call.1} parent=11 // pred_check
          %p692 = pneg %p455
        $region74: #{tpu_custom_call.1} parent=11 // pred_check_branch
          %694 = sbr.rel (%p692) target = $region76
        $region75: #{tpu_custom_call.1} parent=11 // pred_region
          _
        $region76: #{tpu_custom_call.1} parent=11 // pred_fallthru
          _
        // Predicated region
        $region77: #{tpu_custom_call.1} parent=11 // pred_check
          %p695 = pneg %p476
        $region78: #{tpu_custom_call.1} parent=11 // pred_check_branch
          %697 = sbr.rel (%p695) target = $region80
        $region79: #{tpu_custom_call.1} parent=11 // pred_region
          _
        $region80: #{tpu_custom_call.1} parent=11 // pred_fallthru
          _
        // Predicated region
        $region81: #{tpu_custom_call.1} parent=11 // pred_check
          %p698 = pneg %p497
        $region82: #{tpu_custom_call.1} parent=11 // pred_check_branch
          %700 = sbr.rel (%p698) target = $region84
        $region83: #{tpu_custom_call.1} parent=11 // pred_region
          %702 = vsyncadd [#allocation18], 0
          %s703 = sshll.u32 %s20, 4
          %s704 = int_to_ptr.hbm [resolvable:$true] %s703
          %s705 = sshll.u32 [#allocation19], 4
          %s706 = int_to_ptr.vmem [resolvable:$true] %s705
          %711 = dma.hbm_to_vmem [thread:$0]  %s704, 1024, %s706, [#allocation18], 64, 64, 4
        $region84: #{tpu_custom_call.1} parent=11 // pred_fallthru
          _
        // Predicated region
        $region85: #{tpu_custom_call.1} parent=11 // pred_check
          %p712 = pneg %p518
        $region86: #{tpu_custom_call.1} parent=11 // pred_check_branch
          %714 = sbr.rel (%p712) target = $region88
        $region87: #{tpu_custom_call.1} parent=11 // pred_region
          _
        $region88: #{tpu_custom_call.1} parent=11 // pred_fallthru
          _
      $region12: #{tpu_custom_call.1} parent=5 // pred_fallthru
        _
      %p715 = scmp.lt.s32.totalorder %s41, 2
      // Predicated region
      $region89: #{tpu_custom_call.1} parent=5 // pred_check
        %p716 = pneg %p715
      $region90: #{tpu_custom_call.1} parent=5 // pred_check_branch
        %718 = sbr.rel (%p716) target = $region92
      $region91: #{tpu_custom_call.1} parent=5 // pred_region
        // Predicated region
        $region93: #{tpu_custom_call.1} parent=91 // pred_check
          %p719 = pneg %p103
        $region94: #{tpu_custom_call.1} parent=91 // pred_check_branch
          %721 = sbr.rel (%p719) target = $region96
        $region95: #{tpu_custom_call.1} parent=91 // pred_region
          %s722 = sand.u32 %s93, 1
          %s723 = scalar_lea.sflag [#allocation3], %s722
          %s724 = sand.u32 %s93, 1
          %s725 = smul.addr %s724, 128
          %s726 = scalar_lea.vmem [#allocation2], %s725
          %s727 = smul.u32 4, %s41
          %729 = vsyncadd %s723, 0
          %s730 = smul.addr %s727, 4
          %s731 = smul.addr %s730, 8
          %s732 = scalar_lea.hbm %s2, %s731
          %s733 = sshll.u32 %s732, 4
          %s734 = int_to_ptr.hbm [resolvable:$true] %s733
          %s735 = sshll.u32 %s726, 4
          %s736 = int_to_ptr.vmem [resolvable:$true] %s735
          %741 = dma.hbm_to_vmem [thread:$0]  %s734, 2048, %s736, %s723, 128, 128, 8
        $region96: #{tpu_custom_call.1} parent=91 // pred_fallthru
          _
        // Predicated region
        $region97: #{tpu_custom_call.1} parent=91 // pred_check
          %p742 = pneg %p129
        $region98: #{tpu_custom_call.1} parent=91 // pred_check_branch
          %744 = sbr.rel (%p742) target = $region100
        $region99: #{tpu_custom_call.1} parent=91 // pred_region
          %s745 = sand.u32 %s41, 1
          %s746 = scalar_lea.sflag [#allocation6], %s745
          %s747 = sand.u32 %s119, 1
          %s748 = smul.addr %s747, 64
          %s749 = scalar_lea.vmem [#allocation5], %s748
          %s750 = smul.u32 4, %s41
          %752 = vsyncadd %s746, 0
          %s753 = smul.addr %s750, 4
          %s754 = smul.addr %s753, 4
          %s755 = scalar_lea.hbm %s3, %s754
          %s756 = sshll.u32 %s755, 4
          %s757 = int_to_ptr.hbm [resolvable:$true] %s756
          %s758 = sshll.u32 %s749, 4
          %s759 = int_to_ptr.vmem [resolvable:$true] %s758
          %764 = dma.hbm_to_vmem [thread:$0]  %s757, 1024, %s759, %s746, 64, 64, 4
        $region100: #{tpu_custom_call.1} parent=91 // pred_fallthru
          _
        // Predicated region
        $region101: #{tpu_custom_call.1} parent=91 // pred_check
          %p765 = pneg %p155
        $region102: #{tpu_custom_call.1} parent=91 // pred_check_branch
          %767 = sbr.rel (%p765) target = $region104
        $region103: #{tpu_custom_call.1} parent=91 // pred_region
          %s768 = smul.u32 4, %s41
          %p769 = scmp.lt.s32.totalorder %s768, 7
          %s770 = scalar_select %p769, %s768, 7
          %s771 = smul.addr %s770, 8
          %s772 = scalar_lea.vmem %s4, %s771
          %s773 = smul.u32 4, %s41
        $region104: #{tpu_custom_call.1} parent=91 // pred_fallthru
          _
      $region92: #{tpu_custom_call.1} parent=5 // pred_fallthru
        _
      %p774 = scmp.le.s32.totalorder 1, %s41
      %p775 = scmp.lt.s32.totalorder %s41, 3
      %p776 = pnand %p774, %p775
      %p777 = pneg %p776
      // Predicated region
      $region105: #{tpu_custom_call.1} parent=5 // pred_check
        _
      $region106: #{tpu_custom_call.1} parent=5 // pred_check_branch
        %779 = sbr.rel (%p776) target = $region108
      $region107: #{tpu_custom_call.1} parent=5 // pred_region
        %s780 = ssub.s32 %s41, 1
        %s781 = sand.u32 %s96, 1
        %s782 = scalar_lea.sflag [#allocation3], %s781
        %s783 = sand.u32 %s96, 1
        %s784 = smul.addr %s783, 128
        %s785 = scalar_lea.vmem [#allocation2], %s784
        // Predicated region
        $region109: #{tpu_custom_call.1} parent=107 // pred_check
          %p786 = pneg %p109
        $region110: #{tpu_custom_call.1} parent=107 // pred_check_branch
          %788 = sbr.rel (%p786) target = $region112
        $region111: #{tpu_custom_call.1} parent=107 // pred_region
          %790 = dma.done %s782, 2048
        $region112: #{tpu_custom_call.1} parent=107 // pred_fallthru
          _
        %s791 = sand.u32 %s46, 1
        %s792 = scalar_lea.sflag [#allocation6], %s791
        %s793 = sand.u32 %s122, 1
        %s794 = smul.addr %s793, 64
        %s795 = scalar_lea.vmem [#allocation5], %s794
        // Predicated region
        $region113: #{tpu_custom_call.1} parent=107 // pred_check
          %p796 = pneg %p135
        $region114: #{tpu_custom_call.1} parent=107 // pred_check_branch
          %798 = sbr.rel (%p796) target = $region116
        $region115: #{tpu_custom_call.1} parent=107 // pred_region
          %800 = dma.done %s792, 1024
        $region116: #{tpu_custom_call.1} parent=107 // pred_fallthru
          _
        // Predicated region
        $region117: #{tpu_custom_call.1} parent=107 // pred_check
          %p801 = pneg %p182
        $region118: #{tpu_custom_call.1} parent=107 // pred_check_branch
          %803 = sbr.rel (%p801) target = $region120
        $region119: #{tpu_custom_call.1} parent=107 // pred_region
          %805 = dma.done [#allocation6], 2048
        $region120: #{tpu_custom_call.1} parent=107 // pred_fallthru
          _
        // Predicated region
        $region121: #{tpu_custom_call.1} parent=107 // pred_check
          %p806 = pneg %p203
        $region122: #{tpu_custom_call.1} parent=107 // pred_check_branch
          %808 = sbr.rel (%p806) target = $region124
        $region123: #{tpu_custom_call.1} parent=107 // pred_region
          %810 = dma.done [#allocation9], 2048
        $region124: #{tpu_custom_call.1} parent=107 // pred_fallthru
          _
        // Predicated region
        $region125: #{tpu_custom_call.1} parent=107 // pred_check
          %p811 = pneg %p245
        $region126: #{tpu_custom_call.1} parent=107 // pred_check_branch
          %813 = sbr.rel (%p811) target = $region128
        $region127: #{tpu_custom_call.1} parent=107 // pred_region
          %815 = dma.done [#allocation9], 8192
        $region128: #{tpu_custom_call.1} parent=107 // pred_fallthru
          _
        // Predicated region
        $region129: #{tpu_custom_call.1} parent=107 // pred_check
          %p816 = pneg %p266
        $region130: #{tpu_custom_call.1} parent=107 // pred_check_branch
          %818 = sbr.rel (%p816) target = $region132
        $region131: #{tpu_custom_call.1} parent=107 // pred_region
          %820 = dma.done [#allocation12], 8192
        $region132: #{tpu_custom_call.1} parent=107 // pred_fallthru
          _
        // Predicated region
        $region133: #{tpu_custom_call.1} parent=107 // pred_check
          %p821 = pneg %p308
        $region134: #{tpu_custom_call.1} parent=107 // pred_check_branch
          %823 = sbr.rel (%p821) target = $region136
        $region135: #{tpu_custom_call.1} parent=107 // pred_region
          %825 = dma.done [#allocation12], 2048
        $region136: #{tpu_custom_call.1} parent=107 // pred_fallthru
          _
        // Predicated region
        $region137: #{tpu_custom_call.1} parent=107 // pred_check
          %p826 = pneg %p329
        $region138: #{tpu_custom_call.1} parent=107 // pred_check_branch
          %828 = sbr.rel (%p826) target = $region140
        $region139: #{tpu_custom_call.1} parent=107 // pred_region
          %830 = dma.done [#allocation15], 2048
        $region140: #{tpu_custom_call.1} parent=107 // pred_fallthru
          _
        // Predicated region
        $region141: #{tpu_custom_call.1} parent=107 // pred_check
          %p831 = pneg %p392
        $region142: #{tpu_custom_call.1} parent=107 // pred_check_branch
          %833 = sbr.rel (%p831) target = $region144
        $region143: #{tpu_custom_call.1} parent=107 // pred_region
          %835 = dma.done [#allocation15], 1024
        $region144: #{tpu_custom_call.1} parent=107 // pred_fallthru
          _
        // Predicated region
        $region145: #{tpu_custom_call.1} parent=107 // pred_check
          %p836 = pneg %p434
        $region146: #{tpu_custom_call.1} parent=107 // pred_check_branch
          %838 = sbr.rel (%p836) target = $region148
        $region147: #{tpu_custom_call.1} parent=107 // pred_region
          %840 = dma.done [#allocation18], 1024
        $region148: #{tpu_custom_call.1} parent=107 // pred_fallthru
          _
        // Predicated region
        $region149: #{tpu_custom_call.1} parent=107 // pred_check
          %p841 = pneg %p497
        $region150: #{tpu_custom_call.1} parent=107 // pred_check_branch
          %843 = sbr.rel (%p841) target = $region152
        $region151: #{tpu_custom_call.1} parent=107 // pred_region
          %845 = dma.done [#allocation18], 1024
        $region152: #{tpu_custom_call.1} parent=107 // pred_fallthru
          _
        %p846 = pneg %p62
        %p847 = pneg %p59
        %p848 = pneg %p83
        %p849 = pneg %p80
        %s850 = sand.u32 %s96, 1
        %s851 = scalar_lea.sflag [#allocation3], %s850
        %s852 = sand.u32 %s96, 1
        %s853 = smul.addr %s852, 128
        %s854 = scalar_lea.vmem [#allocation2], %s853
        %p855 = pneg %p109
        %p856 = pneg %p106
        %s857 = sand.u32 %s46, 1
        %s858 = scalar_lea.sflag [#allocation6], %s857
        %s859 = sand.u32 %s122, 1
        %s860 = smul.addr %s859, 64
        %s861 = scalar_lea.vmem [#allocation5], %s860
        %p862 = pneg %p135
        %p863 = pneg %p132
        %s864 = smul.u32 4, %s46
        %p865 = scmp.lt.s32.totalorder %s864, 7
        %s866 = scalar_select %p865, %s864, 7
        %s867 = smul.addr %s866, 8
        %s868 = scalar_lea.vmem %s4, %s867
        %p869 = pneg %p161
        %p870 = pneg %p158
        %p871 = pneg %p182
        %p872 = pneg %p179
        %p873 = pneg %p203
        %p874 = pneg %p200
        %p875 = pneg %p224
        %p876 = pneg %p221
        %p877 = pneg %p245
        %p878 = pneg %p242
        %p879 = pneg %p266
        %p880 = pneg %p263
        %p881 = pneg %p287
        %p882 = pneg %p284
        %p883 = pneg %p308
        %p884 = pneg %p305
        %p885 = pneg %p329
        %p886 = pneg %p326
        %p887 = pneg %p350
        %p888 = pneg %p347
        %p889 = pneg %p371
        %p890 = pneg %p368
        %p891 = pneg %p392
        %p892 = pneg %p389
        %p893 = pneg %p413
        %p894 = pneg %p410
        %p895 = pneg %p434
        %p896 = pneg %p431
        %p897 = pneg %p455
        %p898 = pneg %p452
        %p899 = pneg %p476
        %p900 = pneg %p473
        %p901 = pneg %p497
        %p902 = pneg %p494
        %p903 = pneg %p518
        %p904 = pneg %p515
        %p905 = pneg %p544
        %p906 = pneg %p541
        %s907 = sand.u32 %s531, 1
        %s908 = scalar_lea.sflag [#allocation4], %s907
        %s909 = sand.u32 %s531, 1
        %s910 = smul.addr %s909, 32
        %s911 = scalar_lea.vmem [#allocation20], %s910
        %s912 = smul.u32 4, %s46
        %s913 = smul.u32 4, %s46
        %s914 = smul.u32 4, %s46
        %p915 = scmp.lt.s32.totalorder %s914, 7
        %s916 = scalar_select %p915, %s914, 7
        %s917 = smul.addr %s916, 8
        %s918 = scalar_lea.vmem %s4, %s917
        %s919 = smul.u32 4, %s46
        %s920 = smul.u32 4, %s46
        %v922 = vld [vmem:[%s795] sm:$0xf]
        %v923 = vld [vmem:[%s795 + $0x4] sm:$0xf]
        %v924 = vld [vmem:[%s795 + $0x8] sm:$0xf]
        %v925 = vld [vmem:[%s795 + $0xc] sm:$0xf]
        %v926 = vld [vmem:[%s795 + $0x10] sm:$0xf]
        %v927 = vld [vmem:[%s795 + $0x14] sm:$0xf]
        %v928 = vld [vmem:[%s795 + $0x18] sm:$0xf]
        %v929 = vld [vmem:[%s795 + $0x1c] sm:$0xf]
        %v930 = vld [vmem:[%s795 + $0x20] sm:$0xf]
        %v931 = vld [vmem:[%s795 + $0x24] sm:$0xf]
        %v932 = vld [vmem:[%s795 + $0x28] sm:$0xf]
        %v933 = vld [vmem:[%s795 + $0x2c] sm:$0xf]
        %v934 = vld [vmem:[%s795 + $0x30] sm:$0xf]
        %v935 = vld [vmem:[%s795 + $0x34] sm:$0xf]
        %v936 = vld [vmem:[%s795 + $0x38] sm:$0xf]
        %v937 = vld [vmem:[%s795 + $0x3c] sm:$0xf]
        %v938 = vld [vmem:[%s785] sm:$0xff]
        %v939 = vld [vmem:[%s785 + $0x8] sm:$0xff]
        %v940 = vld [vmem:[%s785 + $0x10] sm:$0xff]
        %v941 = vld [vmem:[%s785 + $0x18] sm:$0xff]
        %v942 = vld [vmem:[%s785 + $0x20] sm:$0xff]
        %v943 = vld [vmem:[%s785 + $0x28] sm:$0xff]
        %v944 = vld [vmem:[%s785 + $0x30] sm:$0xff]
        %v945 = vld [vmem:[%s785 + $0x38] sm:$0xff]
        %v946 = vld [vmem:[%s785 + $0x40] sm:$0xff]
        %v947 = vld [vmem:[%s785 + $0x48] sm:$0xff]
        %v948 = vld [vmem:[%s785 + $0x50] sm:$0xff]
        %v949 = vld [vmem:[%s785 + $0x58] sm:$0xff]
        %v950 = vld [vmem:[%s785 + $0x60] sm:$0xff]
        %v951 = vld [vmem:[%s785 + $0x68] sm:$0xff]
        %v952 = vld [vmem:[%s785 + $0x70] sm:$0xff]
        %v953 = vld [vmem:[%s785 + $0x78] sm:$0xff]
        %v954 = vld [vmem:[%s0] sm:$0x1]
        %v956 = vperm.slane %v954, 0
        %v958 = vsub.f32 %v938, %v956
        %v959 = vsub.f32 %v939, %v956
        %v960 = vsub.f32 %v940, %v956
        %v961 = vsub.f32 %v941, %v956
        %v962 = vsub.f32 %v942, %v956
        %v963 = vsub.f32 %v943, %v956
        %v964 = vsub.f32 %v944, %v956
        %v965 = vsub.f32 %v945, %v956
        %v966 = vsub.f32 %v946, %v956
        %v967 = vsub.f32 %v947, %v956
        %v968 = vsub.f32 %v948, %v956
        %v969 = vsub.f32 %v949, %v956
        %v970 = vsub.f32 %v950, %v956
        %v971 = vsub.f32 %v951, %v956
        %v972 = vsub.f32 %v952, %v956
        %v973 = vsub.f32 %v953, %v956
        %v974 = vld [vmem:[%s1] sm:$0x1]
        %v976 = vperm.slane %v974, 0
        %v978 = vmul.f32 %v958, %v976
        %v979 = vmul.f32 %v959, %v976
        %v980 = vmul.f32 %v960, %v976
        %v981 = vmul.f32 %v961, %v976
        %v982 = vmul.f32 %v962, %v976
        %v983 = vmul.f32 %v963, %v976
        %v984 = vmul.f32 %v964, %v976
        %v985 = vmul.f32 %v965, %v976
        %v986 = vmul.f32 %v966, %v976
        %v987 = vmul.f32 %v967, %v976
        %v988 = vmul.f32 %v968, %v976
        %v989 = vmul.f32 %v969, %v976
        %v990 = vmul.f32 %v970, %v976
        %v991 = vmul.f32 %v971, %v976
        %v992 = vmul.f32 %v972, %v976
        %v993 = vmul.f32 %v973, %v976
        %v994 = vpack.c.bf16 %v978, %v978
        %v995 = vpack.c.bf16 %v979, %v979
        %v996 = vpack.c.bf16 %v980, %v980
        %v997 = vpack.c.bf16 %v981, %v981
        %v998 = vpack.c.bf16 %v982, %v982
        %v999 = vpack.c.bf16 %v983, %v983
        %v1000 = vpack.c.bf16 %v984, %v984
        %v1001 = vpack.c.bf16 %v985, %v985
        %v1002 = vpack.c.bf16 %v986, %v986
        %v1003 = vpack.c.bf16 %v987, %v987
        %v1004 = vpack.c.bf16 %v988, %v988
        %v1005 = vpack.c.bf16 %v989, %v989
        %v1006 = vpack.c.bf16 %v990, %v990
        %v1007 = vpack.c.bf16 %v991, %v991
        %v1008 = vpack.c.bf16 %v992, %v992
        %v1009 = vpack.c.bf16 %v993, %v993
        %v1010 = vld [vmem:[#allocation7] sm:$0xff]
        %v1011 = vld [vmem:[#allocation7 + $0x8] sm:$0xff]
        %v1012 = vld [vmem:[#allocation7 + $0x10] sm:$0xff]
        %v1013 = vld [vmem:[#allocation7 + $0x18] sm:$0xff]
        %v1014 = vld [vmem:[#allocation7 + $0x20] sm:$0xff]
        %v1015 = vld [vmem:[#allocation7 + $0x28] sm:$0xff]
        %v1016 = vld [vmem:[#allocation7 + $0x30] sm:$0xff]
        %v1017 = vld [vmem:[#allocation7 + $0x38] sm:$0xff]
        %v1018 = vld [vmem:[#allocation7 + $0x40] sm:$0xff]
        %v1019 = vld [vmem:[#allocation7 + $0x48] sm:$0xff]
        %v1020 = vld [vmem:[#allocation7 + $0x50] sm:$0xff]
        %v1021 = vld [vmem:[#allocation7 + $0x58] sm:$0xff]
        %v1022 = vld [vmem:[#allocation7 + $0x60] sm:$0xff]
        %v1023 = vld [vmem:[#allocation7 + $0x68] sm:$0xff]
        %v1024 = vld [vmem:[#allocation7 + $0x70] sm:$0xff]
        %v1025 = vld [vmem:[#allocation7 + $0x78] sm:$0xff]
        %v1026 = vld [vmem:[#allocation8] sm:$0xff]
        %v1027 = vld [vmem:[#allocation8 + $0x8] sm:$0xff]
        %v1028 = vld [vmem:[#allocation8 + $0x10] sm:$0xff]
        %v1029 = vld [vmem:[#allocation8 + $0x18] sm:$0xff]
        %v1030 = vld [vmem:[#allocation8 + $0x20] sm:$0xff]
        %v1031 = vld [vmem:[#allocation8 + $0x28] sm:$0xff]
        %v1032 = vld [vmem:[#allocation8 + $0x30] sm:$0xff]
        %v1033 = vld [vmem:[#allocation8 + $0x38] sm:$0xff]
        %v1034 = vld [vmem:[#allocation8 + $0x40] sm:$0xff]
        %v1035 = vld [vmem:[#allocation8 + $0x48] sm:$0xff]
        %v1036 = vld [vmem:[#allocation8 + $0x50] sm:$0xff]
        %v1037 = vld [vmem:[#allocation8 + $0x58] sm:$0xff]
        %v1038 = vld [vmem:[#allocation8 + $0x60] sm:$0xff]
        %v1039 = vld [vmem:[#allocation8 + $0x68] sm:$0xff]
        %v1040 = vld [vmem:[#allocation8 + $0x70] sm:$0xff]
        %v1041 = vld [vmem:[#allocation8 + $0x78] sm:$0xff]
        %v1046 = vunpack.c.l.b16 %v922
        %v1047 = vunpack.c.l.b16 %v923
        %v1048 = vunpack.c.l.b16 %v924
        %v1049 = vunpack.c.l.b16 %v925
        %v1050 = vpack.c.b16 %v1047, %v1046
        %v1051 = vpack.c.b16 %v1049, %v1048
        %v1056 = vunpack.c.l.b16 %v994
        %v1057 = vunpack.c.l.b16 %v995
        %v1058 = vunpack.c.l.b16 %v996
        %v1059 = vunpack.c.l.b16 %v997
        %v1060 = vpack.c.b16 %v1057, %v1056
        %v1061 = vpack.c.b16 %v1059, %v1058
        %vm1064 = vcmask 261120
        %v1066 = vsel %vm1064, %v1050, 0
        %v1069 = vsel %vm1064, %v1051, 0
        %1071 = vmatpush.bf16.msra.mxu0 0
        %1072 = vmatpush.bf16.msra.mxu0 0
        %1073 = vmatpush.bf16.msra.mxu0 0
        %1074 = vmatpush.bf16.msra.mxu0 0
        %1075 = vmatpush.bf16.msra.mxu0 0
        %1076 = vmatpush.bf16.msra.mxu0 0
        %1077 = vmatpush.bf16.msra.mxu0 %v1061
        %1078 = vmatpush.bf16.msra.mxu0 %v1060
        %1079 = vmatmul.bf16.gmra.mxu0 %v1066
        %v1080 = vpop.f32.mrf.mxu0
        %v1081 = vadd.f32 0.0, %v1080
        %v1082 = vpop.f32.mrf.mxu0
        %v1083 = vadd.f32 0.0, %v1082
        %1084 = vmatmul.bf16.gmra.mxu0 %v1069
        %v1085 = vpop.f32.mrf.mxu0
        %v1086 = vadd.f32 0.0, %v1085
        %v1087 = vpop.f32.mrf.mxu0
        %v1088 = vadd.f32 0.0, %v1087
        %1089 = vdwg.mxu0
        %v1094 = vunpack.c.l.b16 %v926
        %v1095 = vunpack.c.l.b16 %v927
        %v1096 = vunpack.c.l.b16 %v928
        %v1097 = vunpack.c.l.b16 %v929
        %v1098 = vpack.c.b16 %v1095, %v1094
        %v1099 = vpack.c.b16 %v1097, %v1096
        %v1104 = vunpack.c.l.b16 %v998
        %v1105 = vunpack.c.l.b16 %v999
        %v1106 = vunpack.c.l.b16 %v1000
        %v1107 = vunpack.c.l.b16 %v1001
        %v1108 = vpack.c.b16 %v1105, %v1104
        %v1109 = vpack.c.b16 %v1107, %v1106
        %v1113 = vsel %vm1064, %v1098, 0
        %v1116 = vsel %vm1064, %v1099, 0
        %1118 = vmatpush.bf16.msra.mxu0 0
        %1119 = vmatpush.bf16.msra.mxu0 0
        %1120 = vmatpush.bf16.msra.mxu0 0
        %1121 = vmatpush.bf16.msra.mxu0 0
        %1122 = vmatpush.bf16.msra.mxu0 0
        %1123 = vmatpush.bf16.msra.mxu0 0
        %1124 = vmatpush.bf16.msra.mxu0 %v1109
        %1125 = vmatpush.bf16.msra.mxu0 %v1108
        %1126 = vmatmul.bf16.gmra.mxu0 %v1113
        %v1127 = vpop.f32.mrf.mxu0
        %v1128 = vadd.f32 0.0, %v1127
        %v1129 = vpop.f32.mrf.mxu0
        %v1130 = vadd.f32 0.0, %v1129
        %1131 = vmatmul.bf16.gmra.mxu0 %v1116
        %v1132 = vpop.f32.mrf.mxu0
        %v1133 = vadd.f32 0.0, %v1132
        %v1134 = vpop.f32.mrf.mxu0
        %v1135 = vadd.f32 0.0, %v1134
        %1136 = vdwg.mxu0
        %v1141 = vunpack.c.l.b16 %v930
        %v1142 = vunpack.c.l.b16 %v931
        %v1143 = vunpack.c.l.b16 %v932
        %v1144 = vunpack.c.l.b16 %v933
        %v1145 = vpack.c.b16 %v1142, %v1141
        %v1146 = vpack.c.b16 %v1144, %v1143
        %v1151 = vunpack.c.l.b16 %v1002
        %v1152 = vunpack.c.l.b16 %v1003
        %v1153 = vunpack.c.l.b16 %v1004
        %v1154 = vunpack.c.l.b16 %v1005
        %v1155 = vpack.c.b16 %v1152, %v1151
        %v1156 = vpack.c.b16 %v1154, %v1153
        %v1160 = vsel %vm1064, %v1145, 0
        %v1163 = vsel %vm1064, %v1146, 0
        %1165 = vmatpush.bf16.msra.mxu0 0
        %1166 = vmatpush.bf16.msra.mxu0 0
        %1167 = vmatpush.bf16.msra.mxu0 0
        %1168 = vmatpush.bf16.msra.mxu0 0
        %1169 = vmatpush.bf16.msra.mxu0 0
        %1170 = vmatpush.bf16.msra.mxu0 0
        %1171 = vmatpush.bf16.msra.mxu0 %v1156
        %1172 = vmatpush.bf16.msra.mxu0 %v1155
        %1173 = vmatmul.bf16.gmra.mxu0 %v1160
        %v1174 = vpop.f32.mrf.mxu0
        %v1175 = vadd.f32 0.0, %v1174
        %v1176 = vpop.f32.mrf.mxu0
        %v1177 = vadd.f32 0.0, %v1176
        %1178 = vmatmul.bf16.gmra.mxu0 %v1163
        %v1179 = vpop.f32.mrf.mxu0
        %v1180 = vadd.f32 0.0, %v1179
        %v1181 = vpop.f32.mrf.mxu0
        %v1182 = vadd.f32 0.0, %v1181
        %1183 = vdwg.mxu0
        %v1188 = vunpack.c.l.b16 %v934
        %v1189 = vunpack.c.l.b16 %v935
        %v1190 = vunpack.c.l.b16 %v936
        %v1191 = vunpack.c.l.b16 %v937
        %v1192 = vpack.c.b16 %v1189, %v1188
        %v1193 = vpack.c.b16 %v1191, %v1190
        %v1198 = vunpack.c.l.b16 %v1006
        %v1199 = vunpack.c.l.b16 %v1007
        %v1200 = vunpack.c.l.b16 %v1008
        %v1201 = vunpack.c.l.b16 %v1009
        %v1202 = vpack.c.b16 %v1199, %v1198
        %v1203 = vpack.c.b16 %v1201, %v1200
        %v1207 = vsel %vm1064, %v1192, 0
        %v1210 = vsel %vm1064, %v1193, 0
        %1212 = vmatpush.bf16.msra.mxu0 0
        %1213 = vmatpush.bf16.msra.mxu0 0
        %1214 = vmatpush.bf16.msra.mxu0 0
        %1215 = vmatpush.bf16.msra.mxu0 0
        %1216 = vmatpush.bf16.msra.mxu0 0
        %1217 = vmatpush.bf16.msra.mxu0 0
        %1218 = vmatpush.bf16.msra.mxu0 %v1203
        %1219 = vmatpush.bf16.msra.mxu0 %v1202
        %1220 = vmatmul.bf16.gmra.mxu0 %v1207
        %v1221 = vpop.f32.mrf.mxu0
        %v1222 = vadd.f32 0.0, %v1221
        %v1223 = vpop.f32.mrf.mxu0
        %v1224 = vadd.f32 0.0, %v1223
        %1225 = vmatmul.bf16.gmra.mxu0 %v1210
        %v1226 = vpop.f32.mrf.mxu0
        %v1227 = vadd.f32 0.0, %v1226
        %v1228 = vpop.f32.mrf.mxu0
        %v1229 = vadd.f32 0.0, %v1228
        %1230 = vdwg.mxu0
        %v1231 = vpack.c.bf16 %v1081, %v1081
        %v1232 = vpack.c.bf16 %v1083, %v1083
        %v1233 = vpack.c.bf16 %v1086, %v1086
        %v1234 = vpack.c.bf16 %v1088, %v1088
        %v1235 = vpack.c.bf16 %v1128, %v1128
        %v1236 = vpack.c.bf16 %v1130, %v1130
        %v1237 = vpack.c.bf16 %v1133, %v1133
        %v1238 = vpack.c.bf16 %v1135, %v1135
        %v1239 = vpack.c.bf16 %v1175, %v1175
        %v1240 = vpack.c.bf16 %v1177, %v1177
        %v1241 = vpack.c.bf16 %v1180, %v1180
        %v1242 = vpack.c.bf16 %v1182, %v1182
        %v1243 = vpack.c.bf16 %v1222, %v1222
        %v1244 = vpack.c.bf16 %v1224, %v1224
        %v1245 = vpack.c.bf16 %v1227, %v1227
        %v1246 = vpack.c.bf16 %v1229, %v1229
        %v1263 = vunpack.c.l.b16 %v1231
        %v1264 = vunpack.c.l.b16 %v1232
        %v1265 = vunpack.c.l.b16 %v1233
        %v1266 = vunpack.c.l.b16 %v1234
        %v1267 = vunpack.c.l.b16 %v1235
        %v1268 = vunpack.c.l.b16 %v1236
        %v1269 = vunpack.c.l.b16 %v1237
        %v1270 = vunpack.c.l.b16 %v1238
        %v1271 = vunpack.c.l.b16 %v1239
        %v1272 = vunpack.c.l.b16 %v1240
        %v1273 = vunpack.c.l.b16 %v1241
        %v1274 = vunpack.c.l.b16 %v1242
        %v1275 = vunpack.c.l.b16 %v1243
        %v1276 = vunpack.c.l.b16 %v1244
        %v1277 = vunpack.c.l.b16 %v1245
        %v1278 = vunpack.c.l.b16 %v1246
        %v1279 = vpack.c.b16 %v1264, %v1263
        %v1280 = vpack.c.b16 %v1266, %v1265
        %v1281 = vpack.c.b16 %v1268, %v1267
        %v1282 = vpack.c.b16 %v1270, %v1269
        %v1283 = vpack.c.b16 %v1272, %v1271
        %v1284 = vpack.c.b16 %v1274, %v1273
        %v1285 = vpack.c.b16 %v1276, %v1275
        %v1286 = vpack.c.b16 %v1278, %v1277
        %v1303 = vunpack.c.l.b16 %v1026
        %v1304 = vunpack.c.h.b16 %v1026
        %v1305 = vunpack.c.l.b16 %v1027
        %v1306 = vunpack.c.h.b16 %v1027
        %v1307 = vunpack.c.l.b16 %v1028
        %v1308 = vunpack.c.h.b16 %v1028
        %v1309 = vunpack.c.l.b16 %v1029
        %v1310 = vunpack.c.h.b16 %v1029
        %v1311 = vunpack.c.l.b16 %v1030
        %v1312 = vunpack.c.h.b16 %v1030
        %v1313 = vunpack.c.l.b16 %v1031
        %v1314 = vunpack.c.h.b16 %v1031
        %v1315 = vunpack.c.l.b16 %v1032
        %v1316 = vunpack.c.h.b16 %v1032
        %v1317 = vunpack.c.l.b16 %v1033
        %v1318 = vunpack.c.h.b16 %v1033
        %v1319 = vunpack.c.l.b16 %v1034
        %v1320 = vunpack.c.h.b16 %v1034
        %v1321 = vunpack.c.l.b16 %v1035
        %v1322 = vunpack.c.h.b16 %v1035
        %v1323 = vunpack.c.l.b16 %v1036
        %v1324 = vunpack.c.h.b16 %v1036
        %v1325 = vunpack.c.l.b16 %v1037
        %v1326 = vunpack.c.h.b16 %v1037
        %v1327 = vunpack.c.l.b16 %v1038
        %v1328 = vunpack.c.h.b16 %v1038
        %v1329 = vunpack.c.l.b16 %v1039
        %v1330 = vunpack.c.h.b16 %v1039
        %v1331 = vunpack.c.l.b16 %v1040
        %v1332 = vunpack.c.h.b16 %v1040
        %v1333 = vunpack.c.l.b16 %v1041
        %v1334 = vunpack.c.h.b16 %v1041
        %v1335 = vpack.c.b16 %v1307, %v1303
        %v1336 = vpack.c.b16 %v1308, %v1304
        %v1337 = vpack.c.b16 %v1309, %v1305
        %v1338 = vpack.c.b16 %v1310, %v1306
        %v1339 = vpack.c.b16 %v1315, %v1311
        %v1340 = vpack.c.b16 %v1316, %v1312
        %v1341 = vpack.c.b16 %v1317, %v1313
        %v1342 = vpack.c.b16 %v1318, %v1314
        %v1343 = vpack.c.b16 %v1323, %v1319
        %v1344 = vpack.c.b16 %v1324, %v1320
        %v1345 = vpack.c.b16 %v1325, %v1321
        %v1346 = vpack.c.b16 %v1326, %v1322
        %v1347 = vpack.c.b16 %v1331, %v1327
        %v1348 = vpack.c.b16 %v1332, %v1328
        %v1349 = vpack.c.b16 %v1333, %v1329
        %v1350 = vpack.c.b16 %v1334, %v1330
        %vm1367 = vcmask 523264
        %v1369 = vsel %vm1367, %v1279, 0
        %v1372 = vsel %vm1367, %v1280, 0
        %v1375 = vsel %vm1367, %v1281, 0
        %v1378 = vsel %vm1367, %v1282, 0
        %v1381 = vsel %vm1367, %v1283, 0
        %v1384 = vsel %vm1367, %v1284, 0
        %v1387 = vsel %vm1367, %v1285, 0
        %v1390 = vsel %vm1367, %v1286, 0
        %1392 = vmatpush.bf16.msra.mxu0 0
        %1393 = vmatpush.bf16.msra.mxu0 0
        %1394 = vmatpush.bf16.msra.mxu0 0
        %1395 = vmatpush.bf16.msra.mxu0 0
        %1396 = vmatpush.bf16.msra.mxu0 %v1347
        %1397 = vmatpush.bf16.msra.mxu0 %v1343
        %1398 = vmatpush.bf16.msra.mxu0 %v1339
        %1399 = vmatpush.bf16.msra.mxu0 %v1335
        %1400 = vmatmul.bf16.gmra.mxu0 %v1369
        %v1401 = vpop.f32.mrf.mxu0
        %v1402 = vadd.f32 0.0, %v1401
        %v1403 = vpop.f32.mrf.mxu0
        %v1404 = vadd.f32 0.0, %v1403
        %1405 = vmatmul.bf16.gmra.mxu0 %v1372
        %v1406 = vpop.f32.mrf.mxu0
        %v1407 = vadd.f32 0.0, %v1406
        %v1408 = vpop.f32.mrf.mxu0
        %v1409 = vadd.f32 0.0, %v1408
        %1410 = vmatmul.bf16.gmra.mxu0 %v1375
        %v1411 = vpop.f32.mrf.mxu0
        %v1412 = vadd.f32 0.0, %v1411
        %v1413 = vpop.f32.mrf.mxu0
        %v1414 = vadd.f32 0.0, %v1413
        %1415 = vmatmul.bf16.gmra.mxu0 %v1378
        %v1416 = vpop.f32.mrf.mxu0
        %v1417 = vadd.f32 0.0, %v1416
        %v1418 = vpop.f32.mrf.mxu0
        %v1419 = vadd.f32 0.0, %v1418
        %1420 = vmatmul.bf16.gmra.mxu0 %v1381
        %v1421 = vpop.f32.mrf.mxu0
        %v1422 = vadd.f32 0.0, %v1421
        %v1423 = vpop.f32.mrf.mxu0
        %v1424 = vadd.f32 0.0, %v1423
        %1425 = vmatmul.bf16.gmra.mxu0 %v1384
        %v1426 = vpop.f32.mrf.mxu0
        %v1427 = vadd.f32 0.0, %v1426
        %v1428 = vpop.f32.mrf.mxu0
        %v1429 = vadd.f32 0.0, %v1428
        %1430 = vmatmul.bf16.gmra.mxu0 %v1387
        %v1431 = vpop.f32.mrf.mxu0
        %v1432 = vadd.f32 0.0, %v1431
        %v1433 = vpop.f32.mrf.mxu0
        %v1434 = vadd.f32 0.0, %v1433
        %1435 = vmatmul.bf16.gmra.mxu0 %v1390
        %v1436 = vpop.f32.mrf.mxu0
        %v1437 = vadd.f32 0.0, %v1436
        %v1438 = vpop.f32.mrf.mxu0
        %v1439 = vadd.f32 0.0, %v1438
        %1440 = vdwg.mxu0
        %1441 = vmatpush.bf16.msra.mxu0 0
        %1442 = vmatpush.bf16.msra.mxu0 0
        %1443 = vmatpush.bf16.msra.mxu0 0
        %1444 = vmatpush.bf16.msra.mxu0 0
        %1445 = vmatpush.bf16.msra.mxu0 %v1348
        %1446 = vmatpush.bf16.msra.mxu0 %v1344
        %1447 = vmatpush.bf16.msra.mxu0 %v1340
        %1448 = vmatpush.bf16.msra.mxu0 %v1336
        %1449 = vmatmul.bf16.gmra.mxu0 %v1369
        %v1450 = vpop.f32.mrf.mxu0
        %v1451 = vadd.f32 0.0, %v1450
        %v1452 = vpop.f32.mrf.mxu0
        %v1453 = vadd.f32 0.0, %v1452
        %1454 = vmatmul.bf16.gmra.mxu0 %v1372
        %v1455 = vpop.f32.mrf.mxu0
        %v1456 = vadd.f32 0.0, %v1455
        %v1457 = vpop.f32.mrf.mxu0
        %v1458 = vadd.f32 0.0, %v1457
        %1459 = vmatmul.bf16.gmra.mxu0 %v1375
        %v1460 = vpop.f32.mrf.mxu0
        %v1461 = vadd.f32 0.0, %v1460
        %v1462 = vpop.f32.mrf.mxu0
        %v1463 = vadd.f32 0.0, %v1462
        %1464 = vmatmul.bf16.gmra.mxu0 %v1378
        %v1465 = vpop.f32.mrf.mxu0
        %v1466 = vadd.f32 0.0, %v1465
        %v1467 = vpop.f32.mrf.mxu0
        %v1468 = vadd.f32 0.0, %v1467
        %1469 = vmatmul.bf16.gmra.mxu0 %v1381
        %v1470 = vpop.f32.mrf.mxu0
        %v1471 = vadd.f32 0.0, %v1470
        %v1472 = vpop.f32.mrf.mxu0
        %v1473 = vadd.f32 0.0, %v1472
        %1474 = vmatmul.bf16.gmra.mxu0 %v1384
        %v1475 = vpop.f32.mrf.mxu0
        %v1476 = vadd.f32 0.0, %v1475
        %v1477 = vpop.f32.mrf.mxu0
        %v1478 = vadd.f32 0.0, %v1477
        %1479 = vmatmul.bf16.gmra.mxu0 %v1387
        %v1480 = vpop.f32.mrf.mxu0
        %v1481 = vadd.f32 0.0, %v1480
        %v1482 = vpop.f32.mrf.mxu0
        %v1483 = vadd.f32 0.0, %v1482
        %1484 = vmatmul.bf16.gmra.mxu0 %v1390
        %v1485 = vpop.f32.mrf.mxu0
        %v1486 = vadd.f32 0.0, %v1485
        %v1487 = vpop.f32.mrf.mxu0
        %v1488 = vadd.f32 0.0, %v1487
        %1489 = vdwg.mxu0
        %1490 = vmatpush.bf16.msra.mxu0 0
        %1491 = vmatpush.bf16.msra.mxu0 0
        %1492 = vmatpush.bf16.msra.mxu0 0
        %1493 = vmatpush.bf16.msra.mxu0 0
        %1494 = vmatpush.bf16.msra.mxu0 %v1349
        %1495 = vmatpush.bf16.msra.mxu0 %v1345
        %1496 = vmatpush.bf16.msra.mxu0 %v1341
        %1497 = vmatpush.bf16.msra.mxu0 %v1337
        %1498 = vmatmul.bf16.gmra.mxu0 %v1369
        %v1499 = vpop.f32.mrf.mxu0
        %v1500 = vadd.f32 0.0, %v1499
        %v1501 = vpop.f32.mrf.mxu0
        %v1502 = vadd.f32 0.0, %v1501
        %1503 = vmatmul.bf16.gmra.mxu0 %v1372
        %v1504 = vpop.f32.mrf.mxu0
        %v1505 = vadd.f32 0.0, %v1504
        %v1506 = vpop.f32.mrf.mxu0
        %v1507 = vadd.f32 0.0, %v1506
        %1508 = vmatmul.bf16.gmra.mxu0 %v1375
        %v1509 = vpop.f32.mrf.mxu0
        %v1510 = vadd.f32 0.0, %v1509
        %v1511 = vpop.f32.mrf.mxu0
        %v1512 = vadd.f32 0.0, %v1511
        %1513 = vmatmul.bf16.gmra.mxu0 %v1378
        %v1514 = vpop.f32.mrf.mxu0
        %v1515 = vadd.f32 0.0, %v1514
        %v1516 = vpop.f32.mrf.mxu0
        %v1517 = vadd.f32 0.0, %v1516
        %1518 = vmatmul.bf16.gmra.mxu0 %v1381
        %v1519 = vpop.f32.mrf.mxu0
        %v1520 = vadd.f32 0.0, %v1519
        %v1521 = vpop.f32.mrf.mxu0
        %v1522 = vadd.f32 0.0, %v1521
        %1523 = vmatmul.bf16.gmra.mxu0 %v1384
        %v1524 = vpop.f32.mrf.mxu0
        %v1525 = vadd.f32 0.0, %v1524
        %v1526 = vpop.f32.mrf.mxu0
        %v1527 = vadd.f32 0.0, %v1526
        %1528 = vmatmul.bf16.gmra.mxu0 %v1387
        %v1529 = vpop.f32.mrf.mxu0
        %v1530 = vadd.f32 0.0, %v1529
        %v1531 = vpop.f32.mrf.mxu0
        %v1532 = vadd.f32 0.0, %v1531
        %1533 = vmatmul.bf16.gmra.mxu0 %v1390
        %v1534 = vpop.f32.mrf.mxu0
        %v1535 = vadd.f32 0.0, %v1534
        %v1536 = vpop.f32.mrf.mxu0
        %v1537 = vadd.f32 0.0, %v1536
        %1538 = vdwg.mxu0
        %1539 = vmatpush.bf16.msra.mxu0 0
        %1540 = vmatpush.bf16.msra.mxu0 0
        %1541 = vmatpush.bf16.msra.mxu0 0
        %1542 = vmatpush.bf16.msra.mxu0 0
        %1543 = vmatpush.bf16.msra.mxu0 %v1350
        %1544 = vmatpush.bf16.msra.mxu0 %v1346
        %1545 = vmatpush.bf16.msra.mxu0 %v1342
        %1546 = vmatpush.bf16.msra.mxu0 %v1338
        %1547 = vmatmul.bf16.gmra.mxu0 %v1369
        %v1548 = vpop.f32.mrf.mxu0
        %v1549 = vadd.f32 0.0, %v1548
        %v1550 = vpop.f32.mrf.mxu0
        %v1551 = vadd.f32 0.0, %v1550
        %1552 = vmatmul.bf16.gmra.mxu0 %v1372
        %v1553 = vpop.f32.mrf.mxu0
        %v1554 = vadd.f32 0.0, %v1553
        %v1555 = vpop.f32.mrf.mxu0
        %v1556 = vadd.f32 0.0, %v1555
        %1557 = vmatmul.bf16.gmra.mxu0 %v1375
        %v1558 = vpop.f32.mrf.mxu0
        %v1559 = vadd.f32 0.0, %v1558
        %v1560 = vpop.f32.mrf.mxu0
        %v1561 = vadd.f32 0.0, %v1560
        %1562 = vmatmul.bf16.gmra.mxu0 %v1378
        %v1563 = vpop.f32.mrf.mxu0
        %v1564 = vadd.f32 0.0, %v1563
        %v1565 = vpop.f32.mrf.mxu0
        %v1566 = vadd.f32 0.0, %v1565
        %1567 = vmatmul.bf16.gmra.mxu0 %v1381
        %v1568 = vpop.f32.mrf.mxu0
        %v1569 = vadd.f32 0.0, %v1568
        %v1570 = vpop.f32.mrf.mxu0
        %v1571 = vadd.f32 0.0, %v1570
        %1572 = vmatmul.bf16.gmra.mxu0 %v1384
        %v1573 = vpop.f32.mrf.mxu0
        %v1574 = vadd.f32 0.0, %v1573
        %v1575 = vpop.f32.mrf.mxu0
        %v1576 = vadd.f32 0.0, %v1575
        %1577 = vmatmul.bf16.gmra.mxu0 %v1387
        %v1578 = vpop.f32.mrf.mxu0
        %v1579 = vadd.f32 0.0, %v1578
        %v1580 = vpop.f32.mrf.mxu0
        %v1581 = vadd.f32 0.0, %v1580
        %1582 = vmatmul.bf16.gmra.mxu0 %v1390
        %v1583 = vpop.f32.mrf.mxu0
        %v1584 = vadd.f32 0.0, %v1583
        %v1585 = vpop.f32.mrf.mxu0
        %v1586 = vadd.f32 0.0, %v1585
        %1587 = vdwg.mxu0
        %v1604 = vunpack.c.l.b16 %v1010
        %v1605 = vunpack.c.h.b16 %v1010
        %v1606 = vunpack.c.l.b16 %v1011
        %v1607 = vunpack.c.h.b16 %v1011
        %v1608 = vunpack.c.l.b16 %v1012
        %v1609 = vunpack.c.h.b16 %v1012
        %v1610 = vunpack.c.l.b16 %v1013
        %v1611 = vunpack.c.h.b16 %v1013
        %v1612 = vunpack.c.l.b16 %v1014
        %v1613 = vunpack.c.h.b16 %v1014
        %v1614 = vunpack.c.l.b16 %v1015
        %v1615 = vunpack.c.h.b16 %v1015
        %v1616 = vunpack.c.l.b16 %v1016
        %v1617 = vunpack.c.h.b16 %v1016
        %v1618 = vunpack.c.l.b16 %v1017
        %v1619 = vunpack.c.h.b16 %v1017
        %v1620 = vunpack.c.l.b16 %v1018
        %v1621 = vunpack.c.h.b16 %v1018
        %v1622 = vunpack.c.l.b16 %v1019
        %v1623 = vunpack.c.h.b16 %v1019
        %v1624 = vunpack.c.l.b16 %v1020
        %v1625 = vunpack.c.h.b16 %v1020
        %v1626 = vunpack.c.l.b16 %v1021
        %v1627 = vunpack.c.h.b16 %v1021
        %v1628 = vunpack.c.l.b16 %v1022
        %v1629 = vunpack.c.h.b16 %v1022
        %v1630 = vunpack.c.l.b16 %v1023
        %v1631 = vunpack.c.h.b16 %v1023
        %v1632 = vunpack.c.l.b16 %v1024
        %v1633 = vunpack.c.h.b16 %v1024
        %v1634 = vunpack.c.l.b16 %v1025
        %v1635 = vunpack.c.h.b16 %v1025
        %v1636 = vpack.c.b16 %v1608, %v1604
        %v1637 = vpack.c.b16 %v1609, %v1605
        %v1638 = vpack.c.b16 %v1610, %v1606
        %v1639 = vpack.c.b16 %v1611, %v1607
        %v1640 = vpack.c.b16 %v1616, %v1612
        %v1641 = vpack.c.b16 %v1617, %v1613
        %v1642 = vpack.c.b16 %v1618, %v1614
        %v1643 = vpack.c.b16 %v1619, %v1615
        %v1644 = vpack.c.b16 %v1624, %v1620
        %v1645 = vpack.c.b16 %v1625, %v1621
        %v1646 = vpack.c.b16 %v1626, %v1622
        %v1647 = vpack.c.b16 %v1627, %v1623
        %v1648 = vpack.c.b16 %v1632, %v1628
        %v1649 = vpack.c.b16 %v1633, %v1629
        %v1650 = vpack.c.b16 %v1634, %v1630
        %v1651 = vpack.c.b16 %v1635, %v1631
        %v1669 = vsel %vm1367, %v1060, 0
        %v1672 = vsel %vm1367, %v1061, 0
        %v1675 = vsel %vm1367, %v1108, 0
        %v1678 = vsel %vm1367, %v1109, 0
        %v1681 = vsel %vm1367, %v1155, 0
        %v1684 = vsel %vm1367, %v1156, 0
        %v1687 = vsel %vm1367, %v1202, 0
        %v1690 = vsel %vm1367, %v1203, 0
        %1692 = vmatpush.bf16.msra.mxu0 0
        %1693 = vmatpush.bf16.msra.mxu0 0
        %1694 = vmatpush.bf16.msra.mxu0 0
        %1695 = vmatpush.bf16.msra.mxu0 0
        %1696 = vmatpush.bf16.msra.mxu0 %v1648
        %1697 = vmatpush.bf16.msra.mxu0 %v1644
        %1698 = vmatpush.bf16.msra.mxu0 %v1640
        %1699 = vmatpush.bf16.msra.mxu0 %v1636
        %1700 = vmatmul.bf16.gmra.mxu0 %v1669
        %v1701 = vpop.f32.mrf.mxu0
        %v1702 = vadd.f32 %v1402, %v1701
        %v1703 = vpop.f32.mrf.mxu0
        %v1704 = vadd.f32 %v1404, %v1703
        %1705 = vmatmul.bf16.gmra.mxu0 %v1672
        %v1706 = vpop.f32.mrf.mxu0
        %v1707 = vadd.f32 %v1407, %v1706
        %v1708 = vpop.f32.mrf.mxu0
        %v1709 = vadd.f32 %v1409, %v1708
        %1710 = vmatmul.bf16.gmra.mxu0 %v1675
        %v1711 = vpop.f32.mrf.mxu0
        %v1712 = vadd.f32 %v1412, %v1711
        %v1713 = vpop.f32.mrf.mxu0
        %v1714 = vadd.f32 %v1414, %v1713
        %1715 = vmatmul.bf16.gmra.mxu0 %v1678
        %v1716 = vpop.f32.mrf.mxu0
        %v1717 = vadd.f32 %v1417, %v1716
        %v1718 = vpop.f32.mrf.mxu0
        %v1719 = vadd.f32 %v1419, %v1718
        %1720 = vmatmul.bf16.gmra.mxu0 %v1681
        %v1721 = vpop.f32.mrf.mxu0
        %v1722 = vadd.f32 %v1422, %v1721
        %v1723 = vpop.f32.mrf.mxu0
        %v1724 = vadd.f32 %v1424, %v1723
        %1725 = vmatmul.bf16.gmra.mxu0 %v1684
        %v1726 = vpop.f32.mrf.mxu0
        %v1727 = vadd.f32 %v1427, %v1726
        %v1728 = vpop.f32.mrf.mxu0
        %v1729 = vadd.f32 %v1429, %v1728
        %1730 = vmatmul.bf16.gmra.mxu0 %v1687
        %v1731 = vpop.f32.mrf.mxu0
        %v1732 = vadd.f32 %v1432, %v1731
        %v1733 = vpop.f32.mrf.mxu0
        %v1734 = vadd.f32 %v1434, %v1733
        %1735 = vmatmul.bf16.gmra.mxu0 %v1690
        %v1736 = vpop.f32.mrf.mxu0
        %v1737 = vadd.f32 %v1437, %v1736
        %v1738 = vpop.f32.mrf.mxu0
        %v1739 = vadd.f32 %v1439, %v1738
        %1740 = vdwg.mxu0
        %1741 = vmatpush.bf16.msra.mxu0 0
        %1742 = vmatpush.bf16.msra.mxu0 0
        %1743 = vmatpush.bf16.msra.mxu0 0
        %1744 = vmatpush.bf16.msra.mxu0 0
        %1745 = vmatpush.bf16.msra.mxu0 %v1649
        %1746 = vmatpush.bf16.msra.mxu0 %v1645
        %1747 = vmatpush.bf16.msra.mxu0 %v1641
        %1748 = vmatpush.bf16.msra.mxu0 %v1637
        %1749 = vmatmul.bf16.gmra.mxu0 %v1669
        %v1750 = vpop.f32.mrf.mxu0
        %v1751 = vadd.f32 %v1451, %v1750
        %v1752 = vpop.f32.mrf.mxu0
        %v1753 = vadd.f32 %v1453, %v1752
        %1754 = vmatmul.bf16.gmra.mxu0 %v1672
        %v1755 = vpop.f32.mrf.mxu0
        %v1756 = vadd.f32 %v1456, %v1755
        %v1757 = vpop.f32.mrf.mxu0
        %v1758 = vadd.f32 %v1458, %v1757
        %1759 = vmatmul.bf16.gmra.mxu0 %v1675
        %v1760 = vpop.f32.mrf.mxu0
        %v1761 = vadd.f32 %v1461, %v1760
        %v1762 = vpop.f32.mrf.mxu0
        %v1763 = vadd.f32 %v1463, %v1762
        %1764 = vmatmul.bf16.gmra.mxu0 %v1678
        %v1765 = vpop.f32.mrf.mxu0
        %v1766 = vadd.f32 %v1466, %v1765
        %v1767 = vpop.f32.mrf.mxu0
        %v1768 = vadd.f32 %v1468, %v1767
        %1769 = vmatmul.bf16.gmra.mxu0 %v1681
        %v1770 = vpop.f32.mrf.mxu0
        %v1771 = vadd.f32 %v1471, %v1770
        %v1772 = vpop.f32.mrf.mxu0
        %v1773 = vadd.f32 %v1473, %v1772
        %1774 = vmatmul.bf16.gmra.mxu0 %v1684
        %v1775 = vpop.f32.mrf.mxu0
        %v1776 = vadd.f32 %v1476, %v1775
        %v1777 = vpop.f32.mrf.mxu0
        %v1778 = vadd.f32 %v1478, %v1777
        %1779 = vmatmul.bf16.gmra.mxu0 %v1687
        %v1780 = vpop.f32.mrf.mxu0
        %v1781 = vadd.f32 %v1481, %v1780
        %v1782 = vpop.f32.mrf.mxu0
        %v1783 = vadd.f32 %v1483, %v1782
        %1784 = vmatmul.bf16.gmra.mxu0 %v1690
        %v1785 = vpop.f32.mrf.mxu0
        %v1786 = vadd.f32 %v1486, %v1785
        %v1787 = vpop.f32.mrf.mxu0
        %v1788 = vadd.f32 %v1488, %v1787
        %1789 = vdwg.mxu0
        %1790 = vmatpush.bf16.msra.mxu0 0
        %1791 = vmatpush.bf16.msra.mxu0 0
        %1792 = vmatpush.bf16.msra.mxu0 0
        %1793 = vmatpush.bf16.msra.mxu0 0
        %1794 = vmatpush.bf16.msra.mxu0 %v1650
        %1795 = vmatpush.bf16.msra.mxu0 %v1646
        %1796 = vmatpush.bf16.msra.mxu0 %v1642
        %1797 = vmatpush.bf16.msra.mxu0 %v1638
        %1798 = vmatmul.bf16.gmra.mxu0 %v1669
        %v1799 = vpop.f32.mrf.mxu0
        %v1800 = vadd.f32 %v1500, %v1799
        %v1801 = vpop.f32.mrf.mxu0
        %v1802 = vadd.f32 %v1502, %v1801
        %1803 = vmatmul.bf16.gmra.mxu0 %v1672
        %v1804 = vpop.f32.mrf.mxu0
        %v1805 = vadd.f32 %v1505, %v1804
        %v1806 = vpop.f32.mrf.mxu0
        %v1807 = vadd.f32 %v1507, %v1806
        %1808 = vmatmul.bf16.gmra.mxu0 %v1675
        %v1809 = vpop.f32.mrf.mxu0
        %v1810 = vadd.f32 %v1510, %v1809
        %v1811 = vpop.f32.mrf.mxu0
        %v1812 = vadd.f32 %v1512, %v1811
        %1813 = vmatmul.bf16.gmra.mxu0 %v1678
        %v1814 = vpop.f32.mrf.mxu0
        %v1815 = vadd.f32 %v1515, %v1814
        %v1816 = vpop.f32.mrf.mxu0
        %v1817 = vadd.f32 %v1517, %v1816
        %1818 = vmatmul.bf16.gmra.mxu0 %v1681
        %v1819 = vpop.f32.mrf.mxu0
        %v1820 = vadd.f32 %v1520, %v1819
        %v1821 = vpop.f32.mrf.mxu0
        %v1822 = vadd.f32 %v1522, %v1821
        %1823 = vmatmul.bf16.gmra.mxu0 %v1684
        %v1824 = vpop.f32.mrf.mxu0
        %v1825 = vadd.f32 %v1525, %v1824
        %v1826 = vpop.f32.mrf.mxu0
        %v1827 = vadd.f32 %v1527, %v1826
        %1828 = vmatmul.bf16.gmra.mxu0 %v1687
        %v1829 = vpop.f32.mrf.mxu0
        %v1830 = vadd.f32 %v1530, %v1829
        %v1831 = vpop.f32.mrf.mxu0
        %v1832 = vadd.f32 %v1532, %v1831
        %1833 = vmatmul.bf16.gmra.mxu0 %v1690
        %v1834 = vpop.f32.mrf.mxu0
        %v1835 = vadd.f32 %v1535, %v1834
        %v1836 = vpop.f32.mrf.mxu0
        %v1837 = vadd.f32 %v1537, %v1836
        %1838 = vdwg.mxu0
        %1839 = vmatpush.bf16.msra.mxu0 0
        %1840 = vmatpush.bf16.msra.mxu0 0
        %1841 = vmatpush.bf16.msra.mxu0 0
        %1842 = vmatpush.bf16.msra.mxu0 0
        %1843 = vmatpush.bf16.msra.mxu0 %v1651
        %1844 = vmatpush.bf16.msra.mxu0 %v1647
        %1845 = vmatpush.bf16.msra.mxu0 %v1643
        %1846 = vmatpush.bf16.msra.mxu0 %v1639
        %1847 = vmatmul.bf16.gmra.mxu0 %v1669
        %v1848 = vpop.f32.mrf.mxu0
        %v1849 = vadd.f32 %v1549, %v1848
        %v1850 = vpop.f32.mrf.mxu0
        %v1851 = vadd.f32 %v1551, %v1850
        %1852 = vmatmul.bf16.gmra.mxu0 %v1672
        %v1853 = vpop.f32.mrf.mxu0
        %v1854 = vadd.f32 %v1554, %v1853
        %v1855 = vpop.f32.mrf.mxu0
        %v1856 = vadd.f32 %v1556, %v1855
        %1857 = vmatmul.bf16.gmra.mxu0 %v1675
        %v1858 = vpop.f32.mrf.mxu0
        %v1859 = vadd.f32 %v1559, %v1858
        %v1860 = vpop.f32.mrf.mxu0
        %v1861 = vadd.f32 %v1561, %v1860
        %1862 = vmatmul.bf16.gmra.mxu0 %v1678
        %v1863 = vpop.f32.mrf.mxu0
        %v1864 = vadd.f32 %v1564, %v1863
        %v1865 = vpop.f32.mrf.mxu0
        %v1866 = vadd.f32 %v1566, %v1865
        %1867 = vmatmul.bf16.gmra.mxu0 %v1681
        %v1868 = vpop.f32.mrf.mxu0
        %v1869 = vadd.f32 %v1569, %v1868
        %v1870 = vpop.f32.mrf.mxu0
        %v1871 = vadd.f32 %v1571, %v1870
        %1872 = vmatmul.bf16.gmra.mxu0 %v1684
        %v1873 = vpop.f32.mrf.mxu0
        %v1874 = vadd.f32 %v1574, %v1873
        %v1875 = vpop.f32.mrf.mxu0
        %v1876 = vadd.f32 %v1576, %v1875
        %1877 = vmatmul.bf16.gmra.mxu0 %v1687
        %v1878 = vpop.f32.mrf.mxu0
        %v1879 = vadd.f32 %v1579, %v1878
        %v1880 = vpop.f32.mrf.mxu0
        %v1881 = vadd.f32 %v1581, %v1880
        %1882 = vmatmul.bf16.gmra.mxu0 %v1690
        %v1883 = vpop.f32.mrf.mxu0
        %v1884 = vadd.f32 %v1584, %v1883
        %v1885 = vpop.f32.mrf.mxu0
        %v1886 = vadd.f32 %v1586, %v1885
        %1887 = vdwg.mxu0
        %v1888 = vld [vmem:[%s7] sm:$0xf]
        %v1890 = vperm.slane %v1888, 0
        %v1891 = vperm.slane %v1888, 1
        %v1892 = vperm.slane %v1888, 2
        %v1893 = vperm.slane %v1888, 3
        %v1898 = vadd.f32 %v1702, %v1890
        %v1899 = vadd.f32 %v1751, %v1891
        %v1900 = vadd.f32 %v1800, %v1892
        %v1901 = vadd.f32 %v1849, %v1893
        %v1902 = vadd.f32 %v1704, %v1890
        %v1903 = vadd.f32 %v1753, %v1891
        %v1904 = vadd.f32 %v1802, %v1892
        %v1905 = vadd.f32 %v1851, %v1893
        %v1906 = vadd.f32 %v1707, %v1890
        %v1907 = vadd.f32 %v1756, %v1891
        %v1908 = vadd.f32 %v1805, %v1892
        %v1909 = vadd.f32 %v1854, %v1893
        %v1910 = vadd.f32 %v1709, %v1890
        %v1911 = vadd.f32 %v1758, %v1891
        %v1912 = vadd.f32 %v1807, %v1892
        %v1913 = vadd.f32 %v1856, %v1893
        %v1914 = vadd.f32 %v1712, %v1890
        %v1915 = vadd.f32 %v1761, %v1891
        %v1916 = vadd.f32 %v1810, %v1892
        %v1917 = vadd.f32 %v1859, %v1893
        %v1918 = vadd.f32 %v1714, %v1890
        %v1919 = vadd.f32 %v1763, %v1891
        %v1920 = vadd.f32 %v1812, %v1892
        %v1921 = vadd.f32 %v1861, %v1893
        %v1922 = vadd.f32 %v1717, %v1890
        %v1923 = vadd.f32 %v1766, %v1891
        %v1924 = vadd.f32 %v1815, %v1892
        %v1925 = vadd.f32 %v1864, %v1893
        %v1926 = vadd.f32 %v1719, %v1890
        %v1927 = vadd.f32 %v1768, %v1891
        %v1928 = vadd.f32 %v1817, %v1892
        %v1929 = vadd.f32 %v1866, %v1893
        %v1930 = vadd.f32 %v1722, %v1890
        %v1931 = vadd.f32 %v1771, %v1891
        %v1932 = vadd.f32 %v1820, %v1892
        %v1933 = vadd.f32 %v1869, %v1893
        %v1934 = vadd.f32 %v1724, %v1890
        %v1935 = vadd.f32 %v1773, %v1891
        %v1936 = vadd.f32 %v1822, %v1892
        %v1937 = vadd.f32 %v1871, %v1893
        %v1938 = vadd.f32 %v1727, %v1890
        %v1939 = vadd.f32 %v1776, %v1891
        %v1940 = vadd.f32 %v1825, %v1892
        %v1941 = vadd.f32 %v1874, %v1893
        %v1942 = vadd.f32 %v1729, %v1890
        %v1943 = vadd.f32 %v1778, %v1891
        %v1944 = vadd.f32 %v1827, %v1892
        %v1945 = vadd.f32 %v1876, %v1893
        %v1946 = vadd.f32 %v1732, %v1890
        %v1947 = vadd.f32 %v1781, %v1891
        %v1948 = vadd.f32 %v1830, %v1892
        %v1949 = vadd.f32 %v1879, %v1893
        %v1950 = vadd.f32 %v1734, %v1890
        %v1951 = vadd.f32 %v1783, %v1891
        %v1952 = vadd.f32 %v1832, %v1892
        %v1953 = vadd.f32 %v1881, %v1893
        %v1954 = vadd.f32 %v1737, %v1890
        %v1955 = vadd.f32 %v1786, %v1891
        %v1956 = vadd.f32 %v1835, %v1892
        %v1957 = vadd.f32 %v1884, %v1893
        %v1958 = vadd.f32 %v1739, %v1890
        %v1959 = vadd.f32 %v1788, %v1891
        %v1960 = vadd.f32 %v1837, %v1892
        %v1961 = vadd.f32 %v1886, %v1893
        %v1962 = vmax.f32 %v1898, 0.0
        %v1963 = vmax.f32 %v1899, 0.0
        %v1964 = vmax.f32 %v1900, 0.0
        %v1965 = vmax.f32 %v1901, 0.0
        %v1966 = vmax.f32 %v1902, 0.0
        %v1967 = vmax.f32 %v1903, 0.0
        %v1968 = vmax.f32 %v1904, 0.0
        %v1969 = vmax.f32 %v1905, 0.0
        %v1970 = vmax.f32 %v1906, 0.0
        %v1971 = vmax.f32 %v1907, 0.0
        %v1972 = vmax.f32 %v1908, 0.0
        %v1973 = vmax.f32 %v1909, 0.0
        %v1974 = vmax.f32 %v1910, 0.0
        %v1975 = vmax.f32 %v1911, 0.0
        %v1976 = vmax.f32 %v1912, 0.0
        %v1977 = vmax.f32 %v1913, 0.0
        %v1978 = vmax.f32 %v1914, 0.0
        %v1979 = vmax.f32 %v1915, 0.0
        %v1980 = vmax.f32 %v1916, 0.0
        %v1981 = vmax.f32 %v1917, 0.0
        %v1982 = vmax.f32 %v1918, 0.0
        %v1983 = vmax.f32 %v1919, 0.0
        %v1984 = vmax.f32 %v1920, 0.0
        %v1985 = vmax.f32 %v1921, 0.0
        %v1986 = vmax.f32 %v1922, 0.0
        %v1987 = vmax.f32 %v1923, 0.0
        %v1988 = vmax.f32 %v1924, 0.0
        %v1989 = vmax.f32 %v1925, 0.0
        %v1990 = vmax.f32 %v1926, 0.0
        %v1991 = vmax.f32 %v1927, 0.0
        %v1992 = vmax.f32 %v1928, 0.0
        %v1993 = vmax.f32 %v1929, 0.0
        %v1994 = vmax.f32 %v1930, 0.0
        %v1995 = vmax.f32 %v1931, 0.0
        %v1996 = vmax.f32 %v1932, 0.0
        %v1997 = vmax.f32 %v1933, 0.0
        %v1998 = vmax.f32 %v1934, 0.0
        %v1999 = vmax.f32 %v1935, 0.0
        %v2000 = vmax.f32 %v1936, 0.0
        %v2001 = vmax.f32 %v1937, 0.0
        %v2002 = vmax.f32 %v1938, 0.0
        %v2003 = vmax.f32 %v1939, 0.0
        %v2004 = vmax.f32 %v1940, 0.0
        %v2005 = vmax.f32 %v1941, 0.0
        %v2006 = vmax.f32 %v1942, 0.0
        %v2007 = vmax.f32 %v1943, 0.0
        %v2008 = vmax.f32 %v1944, 0.0
        %v2009 = vmax.f32 %v1945, 0.0
        %v2010 = vmax.f32 %v1946, 0.0
        %v2011 = vmax.f32 %v1947, 0.0
        %v2012 = vmax.f32 %v1948, 0.0
        %v2013 = vmax.f32 %v1949, 0.0
        %v2014 = vmax.f32 %v1950, 0.0
        %v2015 = vmax.f32 %v1951, 0.0
        %v2016 = vmax.f32 %v1952, 0.0
        %v2017 = vmax.f32 %v1953, 0.0
        %v2018 = vmax.f32 %v1954, 0.0
        %v2019 = vmax.f32 %v1955, 0.0
        %v2020 = vmax.f32 %v1956, 0.0
        %v2021 = vmax.f32 %v1957, 0.0
        %v2022 = vmax.f32 %v1958, 0.0
        %v2023 = vmax.f32 %v1959, 0.0
        %v2024 = vmax.f32 %v1960, 0.0
        %v2025 = vmax.f32 %v1961, 0.0
        %v2026 = vpack.c.bf16 %v1966, %v1962
        %v2027 = vpack.c.bf16 %v1967, %v1963
        %v2028 = vpack.c.bf16 %v1968, %v1964
        %v2029 = vpack.c.bf16 %v1969, %v1965
        %v2030 = vpack.c.bf16 %v1974, %v1970
        %v2031 = vpack.c.bf16 %v1975, %v1971
        %v2032 = vpack.c.bf16 %v1976, %v1972
        %v2033 = vpack.c.bf16 %v1977, %v1973
        %v2034 = vpack.c.bf16 %v1982, %v1978
        %v2035 = vpack.c.bf16 %v1983, %v1979
        %v2036 = vpack.c.bf16 %v1984, %v1980
        %v2037 = vpack.c.bf16 %v1985, %v1981
        %v2038 = vpack.c.bf16 %v1990, %v1986
        %v2039 = vpack.c.bf16 %v1991, %v1987
        %v2040 = vpack.c.bf16 %v1992, %v1988
        %v2041 = vpack.c.bf16 %v1993, %v1989
        %v2042 = vpack.c.bf16 %v1998, %v1994
        %v2043 = vpack.c.bf16 %v1999, %v1995
        %v2044 = vpack.c.bf16 %v2000, %v1996
        %v2045 = vpack.c.bf16 %v2001, %v1997
        %v2046 = vpack.c.bf16 %v2006, %v2002
        %v2047 = vpack.c.bf16 %v2007, %v2003
        %v2048 = vpack.c.bf16 %v2008, %v2004
        %v2049 = vpack.c.bf16 %v2009, %v2005
        %v2050 = vpack.c.bf16 %v2014, %v2010
        %v2051 = vpack.c.bf16 %v2015, %v2011
        %v2052 = vpack.c.bf16 %v2016, %v2012
        %v2053 = vpack.c.bf16 %v2017, %v2013
        %v2054 = vpack.c.bf16 %v2022, %v2018
        %v2055 = vpack.c.bf16 %v2023, %v2019
        %v2056 = vpack.c.bf16 %v2024, %v2020
        %v2057 = vpack.c.bf16 %v2025, %v2021
        %v2058 = vld [vmem:[#allocation10] sm:$0xff]
        %v2059 = vld [vmem:[#allocation10 + $0x8] sm:$0xff]
        %v2060 = vld [vmem:[#allocation10 + $0x10] sm:$0xff]
        %v2061 = vld [vmem:[#allocation10 + $0x18] sm:$0xff]
        %v2062 = vld [vmem:[#allocation10 + $0x20] sm:$0xff]
        %v2063 = vld [vmem:[#allocation10 + $0x28] sm:$0xff]
        %v2064 = vld [vmem:[#allocation10 + $0x30] sm:$0xff]
        %v2065 = vld [vmem:[#allocation10 + $0x38] sm:$0xff]
        %v2066 = vld [vmem:[#allocation10 + $0x40] sm:$0xff]
        %v2067 = vld [vmem:[#allocation10 + $0x48] sm:$0xff]
        %v2068 = vld [vmem:[#allocation10 + $0x50] sm:$0xff]
        %v2069 = vld [vmem:[#allocation10 + $0x58] sm:$0xff]
        %v2070 = vld [vmem:[#allocation10 + $0x60] sm:$0xff]
        %v2071 = vld [vmem:[#allocation10 + $0x68] sm:$0xff]
        %v2072 = vld [vmem:[#allocation10 + $0x70] sm:$0xff]
        %v2073 = vld [vmem:[#allocation10 + $0x78] sm:$0xff]
        %v2074 = vld [vmem:[#allocation10 + $0x80] sm:$0xff]
        %v2075 = vld [vmem:[#allocation10 + $0x88] sm:$0xff]
        %v2076 = vld [vmem:[#allocation10 + $0x90] sm:$0xff]
        %v2077 = vld [vmem:[#allocation10 + $0x98] sm:$0xff]
        %v2078 = vld [vmem:[#allocation10 + $0xa0] sm:$0xff]
        %v2079 = vld [vmem:[#allocation10 + $0xa8] sm:$0xff]
        %v2080 = vld [vmem:[#allocation10 + $0xb0] sm:$0xff]
        %v2081 = vld [vmem:[#allocation10 + $0xb8] sm:$0xff]
        %v2082 = vld [vmem:[#allocation10 + $0xc0] sm:$0xff]
        %v2083 = vld [vmem:[#allocation10 + $0xc8] sm:$0xff]
        %v2084 = vld [vmem:[#allocation10 + $0xd0] sm:$0xff]
        %v2085 = vld [vmem:[#allocation10 + $0xd8] sm:$0xff]
        %v2086 = vld [vmem:[#allocation10 + $0xe0] sm:$0xff]
        %v2087 = vld [vmem:[#allocation10 + $0xe8] sm:$0xff]
        %v2088 = vld [vmem:[#allocation10 + $0xf0] sm:$0xff]
        %v2089 = vld [vmem:[#allocation10 + $0xf8] sm:$0xff]
        %v2090 = vld [vmem:[#allocation10 + $0x100] sm:$0xff]
        %v2091 = vld [vmem:[#allocation10 + $0x108] sm:$0xff]
        %v2092 = vld [vmem:[#allocation10 + $0x110] sm:$0xff]
        %v2093 = vld [vmem:[#allocation10 + $0x118] sm:$0xff]
        %v2094 = vld [vmem:[#allocation10 + $0x120] sm:$0xff]
        %v2095 = vld [vmem:[#allocation10 + $0x128] sm:$0xff]
        %v2096 = vld [vmem:[#allocation10 + $0x130] sm:$0xff]
        %v2097 = vld [vmem:[#allocation10 + $0x138] sm:$0xff]
        %v2098 = vld [vmem:[#allocation10 + $0x140] sm:$0xff]
        %v2099 = vld [vmem:[#allocation10 + $0x148] sm:$0xff]
        %v2100 = vld [vmem:[#allocation10 + $0x150] sm:$0xff]
        %v2101 = vld [vmem:[#allocation10 + $0x158] sm:$0xff]
        %v2102 = vld [vmem:[#allocation10 + $0x160] sm:$0xff]
        %v2103 = vld [vmem:[#allocation10 + $0x168] sm:$0xff]
        %v2104 = vld [vmem:[#allocation10 + $0x170] sm:$0xff]
        %v2105 = vld [vmem:[#allocation10 + $0x178] sm:$0xff]
        %v2106 = vld [vmem:[#allocation10 + $0x180] sm:$0xff]
        %v2107 = vld [vmem:[#allocation10 + $0x188] sm:$0xff]
        %v2108 = vld [vmem:[#allocation10 + $0x190] sm:$0xff]
        %v2109 = vld [vmem:[#allocation10 + $0x198] sm:$0xff]
        %v2110 = vld [vmem:[#allocation10 + $0x1a0] sm:$0xff]
        %v2111 = vld [vmem:[#allocation10 + $0x1a8] sm:$0xff]
        %v2112 = vld [vmem:[#allocation10 + $0x1b0] sm:$0xff]
        %v2113 = vld [vmem:[#allocation10 + $0x1b8] sm:$0xff]
        %v2114 = vld [vmem:[#allocation10 + $0x1c0] sm:$0xff]
        %v2115 = vld [vmem:[#allocation10 + $0x1c8] sm:$0xff]
        %v2116 = vld [vmem:[#allocation10 + $0x1d0] sm:$0xff]
        %v2117 = vld [vmem:[#allocation10 + $0x1d8] sm:$0xff]
        %v2118 = vld [vmem:[#allocation10 + $0x1e0] sm:$0xff]
        %v2119 = vld [vmem:[#allocation10 + $0x1e8] sm:$0xff]
        %v2120 = vld [vmem:[#allocation10 + $0x1f0] sm:$0xff]
        %v2121 = vld [vmem:[#allocation10 + $0x1f8] sm:$0xff]
        %v2122 = vld [vmem:[#allocation11] sm:$0xff]
        %v2123 = vld [vmem:[#allocation11 + $0x8] sm:$0xff]
        %v2124 = vld [vmem:[#allocation11 + $0x10] sm:$0xff]
        %v2125 = vld [vmem:[#allocation11 + $0x18] sm:$0xff]
        %v2126 = vld [vmem:[#allocation11 + $0x20] sm:$0xff]
        %v2127 = vld [vmem:[#allocation11 + $0x28] sm:$0xff]
        %v2128 = vld [vmem:[#allocation11 + $0x30] sm:$0xff]
        %v2129 = vld [vmem:[#allocation11 + $0x38] sm:$0xff]
        %v2130 = vld [vmem:[#allocation11 + $0x40] sm:$0xff]
        %v2131 = vld [vmem:[#allocation11 + $0x48] sm:$0xff]
        %v2132 = vld [vmem:[#allocation11 + $0x50] sm:$0xff]
        %v2133 = vld [vmem:[#allocation11 + $0x58] sm:$0xff]
        %v2134 = vld [vmem:[#allocation11 + $0x60] sm:$0xff]
        %v2135 = vld [vmem:[#allocation11 + $0x68] sm:$0xff]
        %v2136 = vld [vmem:[#allocation11 + $0x70] sm:$0xff]
        %v2137 = vld [vmem:[#allocation11 + $0x78] sm:$0xff]
        %v2138 = vld [vmem:[#allocation11 + $0x80] sm:$0xff]
        %v2139 = vld [vmem:[#allocation11 + $0x88] sm:$0xff]
        %v2140 = vld [vmem:[#allocation11 + $0x90] sm:$0xff]
        %v2141 = vld [vmem:[#allocation11 + $0x98] sm:$0xff]
        %v2142 = vld [vmem:[#allocation11 + $0xa0] sm:$0xff]
        %v2143 = vld [vmem:[#allocation11 + $0xa8] sm:$0xff]
        %v2144 = vld [vmem:[#allocation11 + $0xb0] sm:$0xff]
        %v2145 = vld [vmem:[#allocation11 + $0xb8] sm:$0xff]
        %v2146 = vld [vmem:[#allocation11 + $0xc0] sm:$0xff]
        %v2147 = vld [vmem:[#allocation11 + $0xc8] sm:$0xff]
        %v2148 = vld [vmem:[#allocation11 + $0xd0] sm:$0xff]
        %v2149 = vld [vmem:[#allocation11 + $0xd8] sm:$0xff]
        %v2150 = vld [vmem:[#allocation11 + $0xe0] sm:$0xff]
        %v2151 = vld [vmem:[#allocation11 + $0xe8] sm:$0xff]
        %v2152 = vld [vmem:[#allocation11 + $0xf0] sm:$0xff]
        %v2153 = vld [vmem:[#allocation11 + $0xf8] sm:$0xff]
        %v2154 = vld [vmem:[#allocation11 + $0x100] sm:$0xff]
        %v2155 = vld [vmem:[#allocation11 + $0x108] sm:$0xff]
        %v2156 = vld [vmem:[#allocation11 + $0x110] sm:$0xff]
        %v2157 = vld [vmem:[#allocation11 + $0x118] sm:$0xff]
        %v2158 = vld [vmem:[#allocation11 + $0x120] sm:$0xff]
        %v2159 = vld [vmem:[#allocation11 + $0x128] sm:$0xff]
        %v2160 = vld [vmem:[#allocation11 + $0x130] sm:$0xff]
        %v2161 = vld [vmem:[#allocation11 + $0x138] sm:$0xff]
        %v2162 = vld [vmem:[#allocation11 + $0x140] sm:$0xff]
        %v2163 = vld [vmem:[#allocation11 + $0x148] sm:$0xff]
        %v2164 = vld [vmem:[#allocation11 + $0x150] sm:$0xff]
        %v2165 = vld [vmem:[#allocation11 + $0x158] sm:$0xff]
        %v2166 = vld [vmem:[#allocation11 + $0x160] sm:$0xff]
        %v2167 = vld [vmem:[#allocation11 + $0x168] sm:$0xff]
        %v2168 = vld [vmem:[#allocation11 + $0x170] sm:$0xff]
        %v2169 = vld [vmem:[#allocation11 + $0x178] sm:$0xff]
        %v2170 = vld [vmem:[#allocation11 + $0x180] sm:$0xff]
        %v2171 = vld [vmem:[#allocation11 + $0x188] sm:$0xff]
        %v2172 = vld [vmem:[#allocation11 + $0x190] sm:$0xff]
        %v2173 = vld [vmem:[#allocation11 + $0x198] sm:$0xff]
        %v2174 = vld [vmem:[#allocation11 + $0x1a0] sm:$0xff]
        %v2175 = vld [vmem:[#allocation11 + $0x1a8] sm:$0xff]
        %v2176 = vld [vmem:[#allocation11 + $0x1b0] sm:$0xff]
        %v2177 = vld [vmem:[#allocation11 + $0x1b8] sm:$0xff]
        %v2178 = vld [vmem:[#allocation11 + $0x1c0] sm:$0xff]
        %v2179 = vld [vmem:[#allocation11 + $0x1c8] sm:$0xff]
        %v2180 = vld [vmem:[#allocation11 + $0x1d0] sm:$0xff]
        %v2181 = vld [vmem:[#allocation11 + $0x1d8] sm:$0xff]
        %v2182 = vld [vmem:[#allocation11 + $0x1e0] sm:$0xff]
        %v2183 = vld [vmem:[#allocation11 + $0x1e8] sm:$0xff]
        %v2184 = vld [vmem:[#allocation11 + $0x1f0] sm:$0xff]
        %v2185 = vld [vmem:[#allocation11 + $0x1f8] sm:$0xff]
        %v2250 = vunpack.c.l.b16 %v2122
        %v2251 = vunpack.c.h.b16 %v2122
        %v2252 = vunpack.c.l.b16 %v2123
        %v2253 = vunpack.c.h.b16 %v2123
        %v2254 = vunpack.c.l.b16 %v2124
        %v2255 = vunpack.c.h.b16 %v2124
        %v2256 = vunpack.c.l.b16 %v2125
        %v2257 = vunpack.c.h.b16 %v2125
        %v2258 = vunpack.c.l.b16 %v2126
        %v2259 = vunpack.c.h.b16 %v2126
        %v2260 = vunpack.c.l.b16 %v2127
        %v2261 = vunpack.c.h.b16 %v2127
        %v2262 = vunpack.c.l.b16 %v2128
        %v2263 = vunpack.c.h.b16 %v2128
        %v2264 = vunpack.c.l.b16 %v2129
        %v2265 = vunpack.c.h.b16 %v2129
        %v2266 = vunpack.c.l.b16 %v2130
        %v2267 = vunpack.c.h.b16 %v2130
        %v2268 = vunpack.c.l.b16 %v2131
        %v2269 = vunpack.c.h.b16 %v2131
        %v2270 = vunpack.c.l.b16 %v2132
        %v2271 = vunpack.c.h.b16 %v2132
        %v2272 = vunpack.c.l.b16 %v2133
        %v2273 = vunpack.c.h.b16 %v2133
        %v2274 = vunpack.c.l.b16 %v2134
        %v2275 = vunpack.c.h.b16 %v2134
        %v2276 = vunpack.c.l.b16 %v2135
        %v2277 = vunpack.c.h.b16 %v2135
        %v2278 = vunpack.c.l.b16 %v2136
        %v2279 = vunpack.c.h.b16 %v2136
        %v2280 = vunpack.c.l.b16 %v2137
        %v2281 = vunpack.c.h.b16 %v2137
        %v2282 = vunpack.c.l.b16 %v2138
        %v2283 = vunpack.c.h.b16 %v2138
        %v2284 = vunpack.c.l.b16 %v2139
        %v2285 = vunpack.c.h.b16 %v2139
        %v2286 = vunpack.c.l.b16 %v2140
        %v2287 = vunpack.c.h.b16 %v2140
        %v2288 = vunpack.c.l.b16 %v2141
        %v2289 = vunpack.c.h.b16 %v2141
        %v2290 = vunpack.c.l.b16 %v2142
        %v2291 = vunpack.c.h.b16 %v2142
        %v2292 = vunpack.c.l.b16 %v2143
        %v2293 = vunpack.c.h.b16 %v2143
        %v2294 = vunpack.c.l.b16 %v2144
        %v2295 = vunpack.c.h.b16 %v2144
        %v2296 = vunpack.c.l.b16 %v2145
        %v2297 = vunpack.c.h.b16 %v2145
        %v2298 = vunpack.c.l.b16 %v2146
        %v2299 = vunpack.c.h.b16 %v2146
        %v2300 = vunpack.c.l.b16 %v2147
        %v2301 = vunpack.c.h.b16 %v2147
        %v2302 = vunpack.c.l.b16 %v2148
        %v2303 = vunpack.c.h.b16 %v2148
        %v2304 = vunpack.c.l.b16 %v2149
        %v2305 = vunpack.c.h.b16 %v2149
        %v2306 = vunpack.c.l.b16 %v2150
        %v2307 = vunpack.c.h.b16 %v2150
        %v2308 = vunpack.c.l.b16 %v2151
        %v2309 = vunpack.c.h.b16 %v2151
        %v2310 = vunpack.c.l.b16 %v2152
        %v2311 = vunpack.c.h.b16 %v2152
        %v2312 = vunpack.c.l.b16 %v2153
        %v2313 = vunpack.c.h.b16 %v2153
        %v2314 = vunpack.c.l.b16 %v2154
        %v2315 = vunpack.c.h.b16 %v2154
        %v2316 = vunpack.c.l.b16 %v2155
        %v2317 = vunpack.c.h.b16 %v2155
        %v2318 = vunpack.c.l.b16 %v2156
        %v2319 = vunpack.c.h.b16 %v2156
        %v2320 = vunpack.c.l.b16 %v2157
        %v2321 = vunpack.c.h.b16 %v2157
        %v2322 = vunpack.c.l.b16 %v2158
        %v2323 = vunpack.c.h.b16 %v2158
        %v2324 = vunpack.c.l.b16 %v2159
        %v2325 = vunpack.c.h.b16 %v2159
        %v2326 = vunpack.c.l.b16 %v2160
        %v2327 = vunpack.c.h.b16 %v2160
        %v2328 = vunpack.c.l.b16 %v2161
        %v2329 = vunpack.c.h.b16 %v2161
        %v2330 = vunpack.c.l.b16 %v2162
        %v2331 = vunpack.c.h.b16 %v2162
        %v2332 = vunpack.c.l.b16 %v2163
        %v2333 = vunpack.c.h.b16 %v2163
        %v2334 = vunpack.c.l.b16 %v2164
        %v2335 = vunpack.c.h.b16 %v2164
        %v2336 = vunpack.c.l.b16 %v2165
        %v2337 = vunpack.c.h.b16 %v2165
        %v2338 = vunpack.c.l.b16 %v2166
        %v2339 = vunpack.c.h.b16 %v2166
        %v2340 = vunpack.c.l.b16 %v2167
        %v2341 = vunpack.c.h.b16 %v2167
        %v2342 = vunpack.c.l.b16 %v2168
        %v2343 = vunpack.c.h.b16 %v2168
        %v2344 = vunpack.c.l.b16 %v2169
        %v2345 = vunpack.c.h.b16 %v2169
        %v2346 = vunpack.c.l.b16 %v2170
        %v2347 = vunpack.c.h.b16 %v2170
        %v2348 = vunpack.c.l.b16 %v2171
        %v2349 = vunpack.c.h.b16 %v2171
        %v2350 = vunpack.c.l.b16 %v2172
        %v2351 = vunpack.c.h.b16 %v2172
        %v2352 = vunpack.c.l.b16 %v2173
        %v2353 = vunpack.c.h.b16 %v2173
        %v2354 = vunpack.c.l.b16 %v2174
        %v2355 = vunpack.c.h.b16 %v2174
        %v2356 = vunpack.c.l.b16 %v2175
        %v2357 = vunpack.c.h.b16 %v2175
        %v2358 = vunpack.c.l.b16 %v2176
        %v2359 = vunpack.c.h.b16 %v2176
        %v2360 = vunpack.c.l.b16 %v2177
        %v2361 = vunpack.c.h.b16 %v2177
        %v2362 = vunpack.c.l.b16 %v2178
        %v2363 = vunpack.c.h.b16 %v2178
        %v2364 = vunpack.c.l.b16 %v2179
        %v2365 = vunpack.c.h.b16 %v2179
        %v2366 = vunpack.c.l.b16 %v2180
        %v2367 = vunpack.c.h.b16 %v2180
        %v2368 = vunpack.c.l.b16 %v2181
        %v2369 = vunpack.c.h.b16 %v2181
        %v2370 = vunpack.c.l.b16 %v2182
        %v2371 = vunpack.c.h.b16 %v2182
        %v2372 = vunpack.c.l.b16 %v2183
        %v2373 = vunpack.c.h.b16 %v2183
        %v2374 = vunpack.c.l.b16 %v2184
        %v2375 = vunpack.c.h.b16 %v2184
        %v2376 = vunpack.c.l.b16 %v2185
        %v2377 = vunpack.c.h.b16 %v2185
        %v2378 = vpack.c.b16 %v2252, %v2250
        %v2379 = vpack.c.b16 %v2253, %v2251
        %v2380 = vpack.c.b16 %v2256, %v2254
        %v2381 = vpack.c.b16 %v2257, %v2255
        %v2382 = vpack.c.b16 %v2260, %v2258
        %v2383 = vpack.c.b16 %v2261, %v2259
        %v2384 = vpack.c.b16 %v2264, %v2262
        %v2385 = vpack.c.b16 %v2265, %v2263
        %v2386 = vpack.c.b16 %v2268, %v2266
        %v2387 = vpack.c.b16 %v2269, %v2267
        %v2388 = vpack.c.b16 %v2272, %v2270
        %v2389 = vpack.c.b16 %v2273, %v2271
        %v2390 = vpack.c.b16 %v2276, %v2274
        %v2391 = vpack.c.b16 %v2277, %v2275
        %v2392 = vpack.c.b16 %v2280, %v2278
        %v2393 = vpack.c.b16 %v2281, %v2279
        %v2394 = vpack.c.b16 %v2284, %v2282
        %v2395 = vpack.c.b16 %v2285, %v2283
        %v2396 = vpack.c.b16 %v2288, %v2286
        %v2397 = vpack.c.b16 %v2289, %v2287
        %v2398 = vpack.c.b16 %v2292, %v2290
        %v2399 = vpack.c.b16 %v2293, %v2291
        %v2400 = vpack.c.b16 %v2296, %v2294
        %v2401 = vpack.c.b16 %v2297, %v2295
        %v2402 = vpack.c.b16 %v2300, %v2298
        %v2403 = vpack.c.b16 %v2301, %v2299
        %v2404 = vpack.c.b16 %v2304, %v2302
        %v2405 = vpack.c.b16 %v2305, %v2303
        %v2406 = vpack.c.b16 %v2308, %v2306
        %v2407 = vpack.c.b16 %v2309, %v2307
        %v2408 = vpack.c.b16 %v2312, %v2310
        %v2409 = vpack.c.b16 %v2313, %v2311
        %v2410 = vpack.c.b16 %v2316, %v2314
        %v2411 = vpack.c.b16 %v2317, %v2315
        %v2412 = vpack.c.b16 %v2320, %v2318
        %v2413 = vpack.c.b16 %v2321, %v2319
        %v2414 = vpack.c.b16 %v2324, %v2322
        %v2415 = vpack.c.b16 %v2325, %v2323
        %v2416 = vpack.c.b16 %v2328, %v2326
        %v2417 = vpack.c.b16 %v2329, %v2327
        %v2418 = vpack.c.b16 %v2332, %v2330
        %v2419 = vpack.c.b16 %v2333, %v2331
        %v2420 = vpack.c.b16 %v2336, %v2334
        %v2421 = vpack.c.b16 %v2337, %v2335
        %v2422 = vpack.c.b16 %v2340, %v2338
        %v2423 = vpack.c.b16 %v2341, %v2339
        %v2424 = vpack.c.b16 %v2344, %v2342
        %v2425 = vpack.c.b16 %v2345, %v2343
        %v2426 = vpack.c.b16 %v2348, %v2346
        %v2427 = vpack.c.b16 %v2349, %v2347
        %v2428 = vpack.c.b16 %v2352, %v2350
        %v2429 = vpack.c.b16 %v2353, %v2351
        %v2430 = vpack.c.b16 %v2356, %v2354
        %v2431 = vpack.c.b16 %v2357, %v2355
        %v2432 = vpack.c.b16 %v2360, %v2358
        %v2433 = vpack.c.b16 %v2361, %v2359
        %v2434 = vpack.c.b16 %v2364, %v2362
        %v2435 = vpack.c.b16 %v2365, %v2363
        %v2436 = vpack.c.b16 %v2368, %v2366
        %v2437 = vpack.c.b16 %v2369, %v2367
        %v2438 = vpack.c.b16 %v2372, %v2370
        %v2439 = vpack.c.b16 %v2373, %v2371
        %v2440 = vpack.c.b16 %v2376, %v2374
        %v2441 = vpack.c.b16 %v2377, %v2375
        %2506 = vmatpush.bf16.msra.mxu0 %v2392
        %2507 = vmatpush.bf16.msra.mxu0 %v2390
        %2508 = vmatpush.bf16.msra.mxu0 %v2388
        %2509 = vmatpush.bf16.msra.mxu0 %v2386
        %2510 = vmatpush.bf16.msra.mxu0 %v2384
        %2511 = vmatpush.bf16.msra.mxu0 %v2382
        %2512 = vmatpush.bf16.msra.mxu0 %v2380
        %2513 = vmatpush.bf16.msra.mxu0 %v2378
        %2514 = vmatmul.bf16.gmra.mxu0 %v2026
        %v2515 = vpop.f32.mrf.mxu0
        %v2516 = vadd.f32 0.0, %v2515
        %v2517 = vpop.f32.mrf.mxu0
        %v2518 = vadd.f32 0.0, %v2517
        %2519 = vmatmul.bf16.gmra.mxu0 %v2030
        %v2520 = vpop.f32.mrf.mxu0
        %v2521 = vadd.f32 0.0, %v2520
        %v2522 = vpop.f32.mrf.mxu0
        %v2523 = vadd.f32 0.0, %v2522
        %2524 = vmatmul.bf16.gmra.mxu0 %v2034
        %v2525 = vpop.f32.mrf.mxu0
        %v2526 = vadd.f32 0.0, %v2525
        %v2527 = vpop.f32.mrf.mxu0
        %v2528 = vadd.f32 0.0, %v2527
        %2529 = vmatmul.bf16.gmra.mxu0 %v2038
        %v2530 = vpop.f32.mrf.mxu0
        %v2531 = vadd.f32 0.0, %v2530
        %v2532 = vpop.f32.mrf.mxu0
        %v2533 = vadd.f32 0.0, %v2532
        %2534 = vmatmul.bf16.gmra.mxu0 %v2042
        %v2535 = vpop.f32.mrf.mxu0
        %v2536 = vadd.f32 0.0, %v2535
        %v2537 = vpop.f32.mrf.mxu0
        %v2538 = vadd.f32 0.0, %v2537
        %2539 = vmatmul.bf16.gmra.mxu0 %v2046
        %v2540 = vpop.f32.mrf.mxu0
        %v2541 = vadd.f32 0.0, %v2540
        %v2542 = vpop.f32.mrf.mxu0
        %v2543 = vadd.f32 0.0, %v2542
        %2544 = vmatmul.bf16.gmra.mxu0 %v2050
        %v2545 = vpop.f32.mrf.mxu0
        %v2546 = vadd.f32 0.0, %v2545
        %v2547 = vpop.f32.mrf.mxu0
        %v2548 = vadd.f32 0.0, %v2547
        %2549 = vmatmul.bf16.gmra.mxu0 %v2054
        %v2550 = vpop.f32.mrf.mxu0
        %v2551 = vadd.f32 0.0, %v2550
        %v2552 = vpop.f32.mrf.mxu0
        %v2553 = vadd.f32 0.0, %v2552
        %2554 = vdwg.mxu0
        %2555 = vmatpush.bf16.msra.mxu0 %v2408
        %2556 = vmatpush.bf16.msra.mxu0 %v2406
        %2557 = vmatpush.bf16.msra.mxu0 %v2404
        %2558 = vmatpush.bf16.msra.mxu0 %v2402
        %2559 = vmatpush.bf16.msra.mxu0 %v2400
        %2560 = vmatpush.bf16.msra.mxu0 %v2398
        %2561 = vmatpush.bf16.msra.mxu0 %v2396
        %2562 = vmatpush.bf16.msra.mxu0 %v2394
        %2563 = vmatmul.bf16.gmra.mxu0 %v2027
        %v2564 = vpop.f32.mrf.mxu0
        %v2565 = vadd.f32 %v2516, %v2564
        %v2566 = vpop.f32.mrf.mxu0
        %v2567 = vadd.f32 %v2518, %v2566
        %2568 = vmatmul.bf16.gmra.mxu0 %v2031
        %v2569 = vpop.f32.mrf.mxu0
        %v2570 = vadd.f32 %v2521, %v2569
        %v2571 = vpop.f32.mrf.mxu0
        %v2572 = vadd.f32 %v2523, %v2571
        %2573 = vmatmul.bf16.gmra.mxu0 %v2035
        %v2574 = vpop.f32.mrf.mxu0
        %v2575 = vadd.f32 %v2526, %v2574
        %v2576 = vpop.f32.mrf.mxu0
        %v2577 = vadd.f32 %v2528, %v2576
        %2578 = vmatmul.bf16.gmra.mxu0 %v2039
        %v2579 = vpop.f32.mrf.mxu0
        %v2580 = vadd.f32 %v2531, %v2579
        %v2581 = vpop.f32.mrf.mxu0
        %v2582 = vadd.f32 %v2533, %v2581
        %2583 = vmatmul.bf16.gmra.mxu0 %v2043
        %v2584 = vpop.f32.mrf.mxu0
        %v2585 = vadd.f32 %v2536, %v2584
        %v2586 = vpop.f32.mrf.mxu0
        %v2587 = vadd.f32 %v2538, %v2586
        %2588 = vmatmul.bf16.gmra.mxu0 %v2047
        %v2589 = vpop.f32.mrf.mxu0
        %v2590 = vadd.f32 %v2541, %v2589
        %v2591 = vpop.f32.mrf.mxu0
        %v2592 = vadd.f32 %v2543, %v2591
        %2593 = vmatmul.bf16.gmra.mxu0 %v2051
        %v2594 = vpop.f32.mrf.mxu0
        %v2595 = vadd.f32 %v2546, %v2594
        %v2596 = vpop.f32.mrf.mxu0
        %v2597 = vadd.f32 %v2548, %v2596
        %2598 = vmatmul.bf16.gmra.mxu0 %v2055
        %v2599 = vpop.f32.mrf.mxu0
        %v2600 = vadd.f32 %v2551, %v2599
        %v2601 = vpop.f32.mrf.mxu0
        %v2602 = vadd.f32 %v2553, %v2601
        %2603 = vdwg.mxu0
        %2604 = vmatpush.bf16.msra.mxu0 %v2424
        %2605 = vmatpush.bf16.msra.mxu0 %v2422
        %2606 = vmatpush.bf16.msra.mxu0 %v2420
        %2607 = vmatpush.bf16.msra.mxu0 %v2418
        %2608 = vmatpush.bf16.msra.mxu0 %v2416
        %2609 = vmatpush.bf16.msra.mxu0 %v2414
        %2610 = vmatpush.bf16.msra.mxu0 %v2412
        %2611 = vmatpush.bf16.msra.mxu0 %v2410
        %2612 = vmatmul.bf16.gmra.mxu0 %v2028
        %v2613 = vpop.f32.mrf.mxu0
        %v2614 = vadd.f32 %v2565, %v2613
        %v2615 = vpop.f32.mrf.mxu0
        %v2616 = vadd.f32 %v2567, %v2615
        %2617 = vmatmul.bf16.gmra.mxu0 %v2032
        %v2618 = vpop.f32.mrf.mxu0
        %v2619 = vadd.f32 %v2570, %v2618
        %v2620 = vpop.f32.mrf.mxu0
        %v2621 = vadd.f32 %v2572, %v2620
        %2622 = vmatmul.bf16.gmra.mxu0 %v2036
        %v2623 = vpop.f32.mrf.mxu0
        %v2624 = vadd.f32 %v2575, %v2623
        %v2625 = vpop.f32.mrf.mxu0
        %v2626 = vadd.f32 %v2577, %v2625
        %2627 = vmatmul.bf16.gmra.mxu0 %v2040
        %v2628 = vpop.f32.mrf.mxu0
        %v2629 = vadd.f32 %v2580, %v2628
        %v2630 = vpop.f32.mrf.mxu0
        %v2631 = vadd.f32 %v2582, %v2630
        %2632 = vmatmul.bf16.gmra.mxu0 %v2044
        %v2633 = vpop.f32.mrf.mxu0
        %v2634 = vadd.f32 %v2585, %v2633
        %v2635 = vpop.f32.mrf.mxu0
        %v2636 = vadd.f32 %v2587, %v2635
        %2637 = vmatmul.bf16.gmra.mxu0 %v2048
        %v2638 = vpop.f32.mrf.mxu0
        %v2639 = vadd.f32 %v2590, %v2638
        %v2640 = vpop.f32.mrf.mxu0
        %v2641 = vadd.f32 %v2592, %v2640
        %2642 = vmatmul.bf16.gmra.mxu0 %v2052
        %v2643 = vpop.f32.mrf.mxu0
        %v2644 = vadd.f32 %v2595, %v2643
        %v2645 = vpop.f32.mrf.mxu0
        %v2646 = vadd.f32 %v2597, %v2645
        %2647 = vmatmul.bf16.gmra.mxu0 %v2056
        %v2648 = vpop.f32.mrf.mxu0
        %v2649 = vadd.f32 %v2600, %v2648
        %v2650 = vpop.f32.mrf.mxu0
        %v2651 = vadd.f32 %v2602, %v2650
        %2652 = vdwg.mxu0
        %2653 = vmatpush.bf16.msra.mxu0 %v2440
        %2654 = vmatpush.bf16.msra.mxu0 %v2438
        %2655 = vmatpush.bf16.msra.mxu0 %v2436
        %2656 = vmatpush.bf16.msra.mxu0 %v2434
        %2657 = vmatpush.bf16.msra.mxu0 %v2432
        %2658 = vmatpush.bf16.msra.mxu0 %v2430
        %2659 = vmatpush.bf16.msra.mxu0 %v2428
        %2660 = vmatpush.bf16.msra.mxu0 %v2426
        %2661 = vmatmul.bf16.gmra.mxu0 %v2029
        %v2662 = vpop.f32.mrf.mxu0
        %v2663 = vadd.f32 %v2614, %v2662
        %v2664 = vpop.f32.mrf.mxu0
        %v2665 = vadd.f32 %v2616, %v2664
        %2666 = vmatmul.bf16.gmra.mxu0 %v2033
        %v2667 = vpop.f32.mrf.mxu0
        %v2668 = vadd.f32 %v2619, %v2667
        %v2669 = vpop.f32.mrf.mxu0
        %v2670 = vadd.f32 %v2621, %v2669
        %2671 = vmatmul.bf16.gmra.mxu0 %v2037
        %v2672 = vpop.f32.mrf.mxu0
        %v2673 = vadd.f32 %v2624, %v2672
        %v2674 = vpop.f32.mrf.mxu0
        %v2675 = vadd.f32 %v2626, %v2674
        %2676 = vmatmul.bf16.gmra.mxu0 %v2041
        %v2677 = vpop.f32.mrf.mxu0
        %v2678 = vadd.f32 %v2629, %v2677
        %v2679 = vpop.f32.mrf.mxu0
        %v2680 = vadd.f32 %v2631, %v2679
        %2681 = vmatmul.bf16.gmra.mxu0 %v2045
        %v2682 = vpop.f32.mrf.mxu0
        %v2683 = vadd.f32 %v2634, %v2682
        %v2684 = vpop.f32.mrf.mxu0
        %v2685 = vadd.f32 %v2636, %v2684
        %2686 = vmatmul.bf16.gmra.mxu0 %v2049
        %v2687 = vpop.f32.mrf.mxu0
        %v2688 = vadd.f32 %v2639, %v2687
        %v2689 = vpop.f32.mrf.mxu0
        %v2690 = vadd.f32 %v2641, %v2689
        %2691 = vmatmul.bf16.gmra.mxu0 %v2053
        %v2692 = vpop.f32.mrf.mxu0
        %v2693 = vadd.f32 %v2644, %v2692
        %v2694 = vpop.f32.mrf.mxu0
        %v2695 = vadd.f32 %v2646, %v2694
        %2696 = vmatmul.bf16.gmra.mxu0 %v2057
        %v2697 = vpop.f32.mrf.mxu0
        %v2698 = vadd.f32 %v2649, %v2697
        %v2699 = vpop.f32.mrf.mxu0
        %v2700 = vadd.f32 %v2651, %v2699
        %2701 = vdwg.mxu0
        %2702 = vmatpush.bf16.msra.mxu0 %v2393
        %2703 = vmatpush.bf16.msra.mxu0 %v2391
        %2704 = vmatpush.bf16.msra.mxu0 %v2389
        %2705 = vmatpush.bf16.msra.mxu0 %v2387
        %2706 = vmatpush.bf16.msra.mxu0 %v2385
        %2707 = vmatpush.bf16.msra.mxu0 %v2383
        %2708 = vmatpush.bf16.msra.mxu0 %v2381
        %2709 = vmatpush.bf16.msra.mxu0 %v2379
        %2710 = vmatmul.bf16.gmra.mxu0 %v2026
        %v2711 = vpop.f32.mrf.mxu0
        %v2712 = vadd.f32 0.0, %v2711
        %v2713 = vpop.f32.mrf.mxu0
        %v2714 = vadd.f32 0.0, %v2713
        %2715 = vmatmul.bf16.gmra.mxu0 %v2030
        %v2716 = vpop.f32.mrf.mxu0
        %v2717 = vadd.f32 0.0, %v2716
        %v2718 = vpop.f32.mrf.mxu0
        %v2719 = vadd.f32 0.0, %v2718
        %2720 = vmatmul.bf16.gmra.mxu0 %v2034
        %v2721 = vpop.f32.mrf.mxu0
        %v2722 = vadd.f32 0.0, %v2721
        %v2723 = vpop.f32.mrf.mxu0
        %v2724 = vadd.f32 0.0, %v2723
        %2725 = vmatmul.bf16.gmra.mxu0 %v2038
        %v2726 = vpop.f32.mrf.mxu0
        %v2727 = vadd.f32 0.0, %v2726
        %v2728 = vpop.f32.mrf.mxu0
        %v2729 = vadd.f32 0.0, %v2728
        %2730 = vmatmul.bf16.gmra.mxu0 %v2042
        %v2731 = vpop.f32.mrf.mxu0
        %v2732 = vadd.f32 0.0, %v2731
        %v2733 = vpop.f32.mrf.mxu0
        %v2734 = vadd.f32 0.0, %v2733
        %2735 = vmatmul.bf16.gmra.mxu0 %v2046
        %v2736 = vpop.f32.mrf.mxu0
        %v2737 = vadd.f32 0.0, %v2736
        %v2738 = vpop.f32.mrf.mxu0
        %v2739 = vadd.f32 0.0, %v2738
        %2740 = vmatmul.bf16.gmra.mxu0 %v2050
        %v2741 = vpop.f32.mrf.mxu0
        %v2742 = vadd.f32 0.0, %v2741
        %v2743 = vpop.f32.mrf.mxu0
        %v2744 = vadd.f32 0.0, %v2743
        %2745 = vmatmul.bf16.gmra.mxu0 %v2054
        %v2746 = vpop.f32.mrf.mxu0
        %v2747 = vadd.f32 0.0, %v2746
        %v2748 = vpop.f32.mrf.mxu0
        %v2749 = vadd.f32 0.0, %v2748
        %2750 = vdwg.mxu0
        %2751 = vmatpush.bf16.msra.mxu0 %v2409
        %2752 = vmatpush.bf16.msra.mxu0 %v2407
        %2753 = vmatpush.bf16.msra.mxu0 %v2405
        %2754 = vmatpush.bf16.msra.mxu0 %v2403
        %2755 = vmatpush.bf16.msra.mxu0 %v2401
        %2756 = vmatpush.bf16.msra.mxu0 %v2399
        %2757 = vmatpush.bf16.msra.mxu0 %v2397
        %2758 = vmatpush.bf16.msra.mxu0 %v2395
        %2759 = vmatmul.bf16.gmra.mxu0 %v2027
        %v2760 = vpop.f32.mrf.mxu0
        %v2761 = vadd.f32 %v2712, %v2760
        %v2762 = vpop.f32.mrf.mxu0
        %v2763 = vadd.f32 %v2714, %v2762
        %2764 = vmatmul.bf16.gmra.mxu0 %v2031
        %v2765 = vpop.f32.mrf.mxu0
        %v2766 = vadd.f32 %v2717, %v2765
        %v2767 = vpop.f32.mrf.mxu0
        %v2768 = vadd.f32 %v2719, %v2767
        %2769 = vmatmul.bf16.gmra.mxu0 %v2035
        %v2770 = vpop.f32.mrf.mxu0
        %v2771 = vadd.f32 %v2722, %v2770
        %v2772 = vpop.f32.mrf.mxu0
        %v2773 = vadd.f32 %v2724, %v2772
        %2774 = vmatmul.bf16.gmra.mxu0 %v2039
        %v2775 = vpop.f32.mrf.mxu0
        %v2776 = vadd.f32 %v2727, %v2775
        %v2777 = vpop.f32.mrf.mxu0
        %v2778 = vadd.f32 %v2729, %v2777
        %2779 = vmatmul.bf16.gmra.mxu0 %v2043
        %v2780 = vpop.f32.mrf.mxu0
        %v2781 = vadd.f32 %v2732, %v2780
        %v2782 = vpop.f32.mrf.mxu0
        %v2783 = vadd.f32 %v2734, %v2782
        %2784 = vmatmul.bf16.gmra.mxu0 %v2047
        %v2785 = vpop.f32.mrf.mxu0
        %v2786 = vadd.f32 %v2737, %v2785
        %v2787 = vpop.f32.mrf.mxu0
        %v2788 = vadd.f32 %v2739, %v2787
        %2789 = vmatmul.bf16.gmra.mxu0 %v2051
        %v2790 = vpop.f32.mrf.mxu0
        %v2791 = vadd.f32 %v2742, %v2790
        %v2792 = vpop.f32.mrf.mxu0
        %v2793 = vadd.f32 %v2744, %v2792
        %2794 = vmatmul.bf16.gmra.mxu0 %v2055
        %v2795 = vpop.f32.mrf.mxu0
        %v2796 = vadd.f32 %v2747, %v2795
        %v2797 = vpop.f32.mrf.mxu0
        %v2798 = vadd.f32 %v2749, %v2797
        %2799 = vdwg.mxu0
        %2800 = vmatpush.bf16.msra.mxu0 %v2425
        %2801 = vmatpush.bf16.msra.mxu0 %v2423
        %2802 = vmatpush.bf16.msra.mxu0 %v2421
        %2803 = vmatpush.bf16.msra.mxu0 %v2419
        %2804 = vmatpush.bf16.msra.mxu0 %v2417
        %2805 = vmatpush.bf16.msra.mxu0 %v2415
        %2806 = vmatpush.bf16.msra.mxu0 %v2413
        %2807 = vmatpush.bf16.msra.mxu0 %v2411
        %2808 = vmatmul.bf16.gmra.mxu0 %v2028
        %v2809 = vpop.f32.mrf.mxu0
        %v2810 = vadd.f32 %v2761, %v2809
        %v2811 = vpop.f32.mrf.mxu0
        %v2812 = vadd.f32 %v2763, %v2811
        %2813 = vmatmul.bf16.gmra.mxu0 %v2032
        %v2814 = vpop.f32.mrf.mxu0
        %v2815 = vadd.f32 %v2766, %v2814
        %v2816 = vpop.f32.mrf.mxu0
        %v2817 = vadd.f32 %v2768, %v2816
        %2818 = vmatmul.bf16.gmra.mxu0 %v2036
        %v2819 = vpop.f32.mrf.mxu0
        %v2820 = vadd.f32 %v2771, %v2819
        %v2821 = vpop.f32.mrf.mxu0
        %v2822 = vadd.f32 %v2773, %v2821
        %2823 = vmatmul.bf16.gmra.mxu0 %v2040
        %v2824 = vpop.f32.mrf.mxu0
        %v2825 = vadd.f32 %v2776, %v2824
        %v2826 = vpop.f32.mrf.mxu0
        %v2827 = vadd.f32 %v2778, %v2826
        %2828 = vmatmul.bf16.gmra.mxu0 %v2044
        %v2829 = vpop.f32.mrf.mxu0
        %v2830 = vadd.f32 %v2781, %v2829
        %v2831 = vpop.f32.mrf.mxu0
        %v2832 = vadd.f32 %v2783, %v2831
        %2833 = vmatmul.bf16.gmra.mxu0 %v2048
        %v2834 = vpop.f32.mrf.mxu0
        %v2835 = vadd.f32 %v2786, %v2834
        %v2836 = vpop.f32.mrf.mxu0
        %v2837 = vadd.f32 %v2788, %v2836
        %2838 = vmatmul.bf16.gmra.mxu0 %v2052
        %v2839 = vpop.f32.mrf.mxu0
        %v2840 = vadd.f32 %v2791, %v2839
        %v2841 = vpop.f32.mrf.mxu0
        %v2842 = vadd.f32 %v2793, %v2841
        %2843 = vmatmul.bf16.gmra.mxu0 %v2056
        %v2844 = vpop.f32.mrf.mxu0
        %v2845 = vadd.f32 %v2796, %v2844
        %v2846 = vpop.f32.mrf.mxu0
        %v2847 = vadd.f32 %v2798, %v2846
        %2848 = vdwg.mxu0
        %2849 = vmatpush.bf16.msra.mxu0 %v2441
        %2850 = vmatpush.bf16.msra.mxu0 %v2439
        %2851 = vmatpush.bf16.msra.mxu0 %v2437
        %2852 = vmatpush.bf16.msra.mxu0 %v2435
        %2853 = vmatpush.bf16.msra.mxu0 %v2433
        %2854 = vmatpush.bf16.msra.mxu0 %v2431
        %2855 = vmatpush.bf16.msra.mxu0 %v2429
        %2856 = vmatpush.bf16.msra.mxu0 %v2427
        %2857 = vmatmul.bf16.gmra.mxu0 %v2029
        %v2858 = vpop.f32.mrf.mxu0
        %v2859 = vadd.f32 %v2810, %v2858
        %v2860 = vpop.f32.mrf.mxu0
        %v2861 = vadd.f32 %v2812, %v2860
        %2862 = vmatmul.bf16.gmra.mxu0 %v2033
        %v2863 = vpop.f32.mrf.mxu0
        %v2864 = vadd.f32 %v2815, %v2863
        %v2865 = vpop.f32.mrf.mxu0
        %v2866 = vadd.f32 %v2817, %v2865
        %2867 = vmatmul.bf16.gmra.mxu0 %v2037
        %v2868 = vpop.f32.mrf.mxu0
        %v2869 = vadd.f32 %v2820, %v2868
        %v2870 = vpop.f32.mrf.mxu0
        %v2871 = vadd.f32 %v2822, %v2870
        %2872 = vmatmul.bf16.gmra.mxu0 %v2041
        %v2873 = vpop.f32.mrf.mxu0
        %v2874 = vadd.f32 %v2825, %v2873
        %v2875 = vpop.f32.mrf.mxu0
        %v2876 = vadd.f32 %v2827, %v2875
        %2877 = vmatmul.bf16.gmra.mxu0 %v2045
        %v2878 = vpop.f32.mrf.mxu0
        %v2879 = vadd.f32 %v2830, %v2878
        %v2880 = vpop.f32.mrf.mxu0
        %v2881 = vadd.f32 %v2832, %v2880
        %2882 = vmatmul.bf16.gmra.mxu0 %v2049
        %v2883 = vpop.f32.mrf.mxu0
        %v2884 = vadd.f32 %v2835, %v2883
        %v2885 = vpop.f32.mrf.mxu0
        %v2886 = vadd.f32 %v2837, %v2885
        %2887 = vmatmul.bf16.gmra.mxu0 %v2053
        %v2888 = vpop.f32.mrf.mxu0
        %v2889 = vadd.f32 %v2840, %v2888
        %v2890 = vpop.f32.mrf.mxu0
        %v2891 = vadd.f32 %v2842, %v2890
        %2892 = vmatmul.bf16.gmra.mxu0 %v2057
        %v2893 = vpop.f32.mrf.mxu0
        %v2894 = vadd.f32 %v2845, %v2893
        %v2895 = vpop.f32.mrf.mxu0
        %v2896 = vadd.f32 %v2847, %v2895
        %2897 = vdwg.mxu0
        %v2898 = vpack.c.bf16 %v2859, %v2663
        %v2899 = vpack.c.bf16 %v2861, %v2665
        %v2900 = vpack.c.bf16 %v2864, %v2668
        %v2901 = vpack.c.bf16 %v2866, %v2670
        %v2902 = vpack.c.bf16 %v2869, %v2673
        %v2903 = vpack.c.bf16 %v2871, %v2675
        %v2904 = vpack.c.bf16 %v2874, %v2678
        %v2905 = vpack.c.bf16 %v2876, %v2680
        %v2906 = vpack.c.bf16 %v2879, %v2683
        %v2907 = vpack.c.bf16 %v2881, %v2685
        %v2908 = vpack.c.bf16 %v2884, %v2688
        %v2909 = vpack.c.bf16 %v2886, %v2690
        %v2910 = vpack.c.bf16 %v2889, %v2693
        %v2911 = vpack.c.bf16 %v2891, %v2695
        %v2912 = vpack.c.bf16 %v2894, %v2698
        %v2913 = vpack.c.bf16 %v2896, %v2700
        %v2918 = vunpack.c.l.b16 %v2898
        %v2919 = vunpack.c.h.b16 %v2898
        %v2920 = vunpack.c.l.b16 %v2899
        %v2921 = vunpack.c.h.b16 %v2899
        %v2922 = vunpack.c.l.b16 %v2900
        %v2923 = vunpack.c.h.b16 %v2900
        %v2924 = vunpack.c.l.b16 %v2901
        %v2925 = vunpack.c.h.b16 %v2901
        %v2926 = vpack.c.b16 %v2920, %v2918
        %v2927 = vpack.c.b16 %v2921, %v2919
        %v2928 = vpack.c.b16 %v2924, %v2922
        %v2929 = vpack.c.b16 %v2925, %v2923
        %2934 = vmatpush.bf16.msra.mxu0 0
        %2935 = vmatpush.bf16.msra.mxu0 0
        %2936 = vmatpush.bf16.msra.mxu0 0
        %2937 = vmatpush.bf16.msra.mxu0 0
        %2938 = vmatpush.bf16.msra.mxu0 0
        %2939 = vmatpush.bf16.msra.mxu0 0
        %2940 = vmatpush.bf16.msra.mxu0 %v2928
        %2941 = vmatpush.bf16.msra.mxu0 %v2926
        %2942 = vmatmul.bf16.gmra.mxu0 %v1066
        %v2943 = vpop.f32.mrf.mxu0
        %v2944 = vadd.f32 0.0, %v2943
        %v2945 = vpop.f32.mrf.mxu0
        %v2946 = vadd.f32 0.0, %v2945
        %2947 = vmatmul.bf16.gmra.mxu0 %v1069
        %v2948 = vpop.f32.mrf.mxu0
        %v2949 = vadd.f32 0.0, %v2948
        %v2950 = vpop.f32.mrf.mxu0
        %v2951 = vadd.f32 0.0, %v2950
        %2952 = vdwg.mxu0
        %2953 = vmatpush.bf16.msra.mxu0 0
        %2954 = vmatpush.bf16.msra.mxu0 0
        %2955 = vmatpush.bf16.msra.mxu0 0
        %2956 = vmatpush.bf16.msra.mxu0 0
        %2957 = vmatpush.bf16.msra.mxu0 0
        %2958 = vmatpush.bf16.msra.mxu0 0
        %2959 = vmatpush.bf16.msra.mxu0 %v2929
        %2960 = vmatpush.bf16.msra.mxu0 %v2927
        %2961 = vmatmul.bf16.gmra.mxu0 %v1066
        %v2962 = vpop.f32.mrf.mxu0
        %v2963 = vadd.f32 0.0, %v2962
        %v2964 = vpop.f32.mrf.mxu0
        %v2965 = vadd.f32 0.0, %v2964
        %2966 = vmatmul.bf16.gmra.mxu0 %v1069
        %v2967 = vpop.f32.mrf.mxu0
        %v2968 = vadd.f32 0.0, %v2967
        %v2969 = vpop.f32.mrf.mxu0
        %v2970 = vadd.f32 0.0, %v2969
        %2971 = vdwg.mxu0
        %v2976 = vunpack.c.l.b16 %v2902
        %v2977 = vunpack.c.h.b16 %v2902
        %v2978 = vunpack.c.l.b16 %v2903
        %v2979 = vunpack.c.h.b16 %v2903
        %v2980 = vunpack.c.l.b16 %v2904
        %v2981 = vunpack.c.h.b16 %v2904
        %v2982 = vunpack.c.l.b16 %v2905
        %v2983 = vunpack.c.h.b16 %v2905
        %v2984 = vpack.c.b16 %v2978, %v2976
        %v2985 = vpack.c.b16 %v2979, %v2977
        %v2986 = vpack.c.b16 %v2982, %v2980
        %v2987 = vpack.c.b16 %v2983, %v2981
        %2992 = vmatpush.bf16.msra.mxu0 0
        %2993 = vmatpush.bf16.msra.mxu0 0
        %2994 = vmatpush.bf16.msra.mxu0 0
        %2995 = vmatpush.bf16.msra.mxu0 0
        %2996 = vmatpush.bf16.msra.mxu0 0
        %2997 = vmatpush.bf16.msra.mxu0 0
        %2998 = vmatpush.bf16.msra.mxu0 %v2986
        %2999 = vmatpush.bf16.msra.mxu0 %v2984
        %3000 = vmatmul.bf16.gmra.mxu0 %v1113
        %v3001 = vpop.f32.mrf.mxu0
        %v3002 = vadd.f32 0.0, %v3001
        %v3003 = vpop.f32.mrf.mxu0
        %v3004 = vadd.f32 0.0, %v3003
        %3005 = vmatmul.bf16.gmra.mxu0 %v1116
        %v3006 = vpop.f32.mrf.mxu0
        %v3007 = vadd.f32 0.0, %v3006
        %v3008 = vpop.f32.mrf.mxu0
        %v3009 = vadd.f32 0.0, %v3008
        %3010 = vdwg.mxu0
        %3011 = vmatpush.bf16.msra.mxu0 0
        %3012 = vmatpush.bf16.msra.mxu0 0
        %3013 = vmatpush.bf16.msra.mxu0 0
        %3014 = vmatpush.bf16.msra.mxu0 0
        %3015 = vmatpush.bf16.msra.mxu0 0
        %3016 = vmatpush.bf16.msra.mxu0 0
        %3017 = vmatpush.bf16.msra.mxu0 %v2987
        %3018 = vmatpush.bf16.msra.mxu0 %v2985
        %3019 = vmatmul.bf16.gmra.mxu0 %v1113
        %v3020 = vpop.f32.mrf.mxu0
        %v3021 = vadd.f32 0.0, %v3020
        %v3022 = vpop.f32.mrf.mxu0
        %v3023 = vadd.f32 0.0, %v3022
        %3024 = vmatmul.bf16.gmra.mxu0 %v1116
        %v3025 = vpop.f32.mrf.mxu0
        %v3026 = vadd.f32 0.0, %v3025
        %v3027 = vpop.f32.mrf.mxu0
        %v3028 = vadd.f32 0.0, %v3027
        %3029 = vdwg.mxu0
        %v3034 = vunpack.c.l.b16 %v2906
        %v3035 = vunpack.c.h.b16 %v2906
        %v3036 = vunpack.c.l.b16 %v2907
        %v3037 = vunpack.c.h.b16 %v2907
        %v3038 = vunpack.c.l.b16 %v2908
        %v3039 = vunpack.c.h.b16 %v2908
        %v3040 = vunpack.c.l.b16 %v2909
        %v3041 = vunpack.c.h.b16 %v2909
        %v3042 = vpack.c.b16 %v3036, %v3034
        %v3043 = vpack.c.b16 %v3037, %v3035
        %v3044 = vpack.c.b16 %v3040, %v3038
        %v3045 = vpack.c.b16 %v3041, %v3039
        %3050 = vmatpush.bf16.msra.mxu0 0
        %3051 = vmatpush.bf16.msra.mxu0 0
        %3052 = vmatpush.bf16.msra.mxu0 0
        %3053 = vmatpush.bf16.msra.mxu0 0
        %3054 = vmatpush.bf16.msra.mxu0 0
        %3055 = vmatpush.bf16.msra.mxu0 0
        %3056 = vmatpush.bf16.msra.mxu0 %v3044
        %3057 = vmatpush.bf16.msra.mxu0 %v3042
        %3058 = vmatmul.bf16.gmra.mxu0 %v1160
        %v3059 = vpop.f32.mrf.mxu0
        %v3060 = vadd.f32 0.0, %v3059
        %v3061 = vpop.f32.mrf.mxu0
        %v3062 = vadd.f32 0.0, %v3061
        %3063 = vmatmul.bf16.gmra.mxu0 %v1163
        %v3064 = vpop.f32.mrf.mxu0
        %v3065 = vadd.f32 0.0, %v3064
        %v3066 = vpop.f32.mrf.mxu0
        %v3067 = vadd.f32 0.0, %v3066
        %3068 = vdwg.mxu0
        %3069 = vmatpush.bf16.msra.mxu0 0
        %3070 = vmatpush.bf16.msra.mxu0 0
        %3071 = vmatpush.bf16.msra.mxu0 0
        %3072 = vmatpush.bf16.msra.mxu0 0
        %3073 = vmatpush.bf16.msra.mxu0 0
        %3074 = vmatpush.bf16.msra.mxu0 0
        %3075 = vmatpush.bf16.msra.mxu0 %v3045
        %3076 = vmatpush.bf16.msra.mxu0 %v3043
        %3077 = vmatmul.bf16.gmra.mxu0 %v1160
        %v3078 = vpop.f32.mrf.mxu0
        %v3079 = vadd.f32 0.0, %v3078
        %v3080 = vpop.f32.mrf.mxu0
        %v3081 = vadd.f32 0.0, %v3080
        %3082 = vmatmul.bf16.gmra.mxu0 %v1163
        %v3083 = vpop.f32.mrf.mxu0
        %v3084 = vadd.f32 0.0, %v3083
        %v3085 = vpop.f32.mrf.mxu0
        %v3086 = vadd.f32 0.0, %v3085
        %3087 = vdwg.mxu0
        %v3092 = vunpack.c.l.b16 %v2910
        %v3093 = vunpack.c.h.b16 %v2910
        %v3094 = vunpack.c.l.b16 %v2911
        %v3095 = vunpack.c.h.b16 %v2911
        %v3096 = vunpack.c.l.b16 %v2912
        %v3097 = vunpack.c.h.b16 %v2912
        %v3098 = vunpack.c.l.b16 %v2913
        %v3099 = vunpack.c.h.b16 %v2913
        %v3100 = vpack.c.b16 %v3094, %v3092
        %v3101 = vpack.c.b16 %v3095, %v3093
        %v3102 = vpack.c.b16 %v3098, %v3096
        %v3103 = vpack.c.b16 %v3099, %v3097
        %3108 = vmatpush.bf16.msra.mxu0 0
        %3109 = vmatpush.bf16.msra.mxu0 0
        %3110 = vmatpush.bf16.msra.mxu0 0
        %3111 = vmatpush.bf16.msra.mxu0 0
        %3112 = vmatpush.bf16.msra.mxu0 0
        %3113 = vmatpush.bf16.msra.mxu0 0
        %3114 = vmatpush.bf16.msra.mxu0 %v3102
        %3115 = vmatpush.bf16.msra.mxu0 %v3100
        %3116 = vmatmul.bf16.gmra.mxu0 %v1207
        %v3117 = vpop.f32.mrf.mxu0
        %v3118 = vadd.f32 0.0, %v3117
        %v3119 = vpop.f32.mrf.mxu0
        %v3120 = vadd.f32 0.0, %v3119
        %3121 = vmatmul.bf16.gmra.mxu0 %v1210
        %v3122 = vpop.f32.mrf.mxu0
        %v3123 = vadd.f32 0.0, %v3122
        %v3124 = vpop.f32.mrf.mxu0
        %v3125 = vadd.f32 0.0, %v3124
        %3126 = vdwg.mxu0
        %3127 = vmatpush.bf16.msra.mxu0 0
        %3128 = vmatpush.bf16.msra.mxu0 0
        %3129 = vmatpush.bf16.msra.mxu0 0
        %3130 = vmatpush.bf16.msra.mxu0 0
        %3131 = vmatpush.bf16.msra.mxu0 0
        %3132 = vmatpush.bf16.msra.mxu0 0
        %3133 = vmatpush.bf16.msra.mxu0 %v3103
        %3134 = vmatpush.bf16.msra.mxu0 %v3101
        %3135 = vmatmul.bf16.gmra.mxu0 %v1207
        %v3136 = vpop.f32.mrf.mxu0
        %v3137 = vadd.f32 0.0, %v3136
        %v3138 = vpop.f32.mrf.mxu0
        %v3139 = vadd.f32 0.0, %v3138
        %3140 = vmatmul.bf16.gmra.mxu0 %v1210
        %v3141 = vpop.f32.mrf.mxu0
        %v3142 = vadd.f32 0.0, %v3141
        %v3143 = vpop.f32.mrf.mxu0
        %v3144 = vadd.f32 0.0, %v3143
        %3145 = vdwg.mxu0
        %v3210 = vunpack.c.l.b16 %v2058
        %v3211 = vunpack.c.h.b16 %v2058
        %v3212 = vunpack.c.l.b16 %v2059
        %v3213 = vunpack.c.h.b16 %v2059
        %v3214 = vunpack.c.l.b16 %v2060
        %v3215 = vunpack.c.h.b16 %v2060
        %v3216 = vunpack.c.l.b16 %v2061
        %v3217 = vunpack.c.h.b16 %v2061
        %v3218 = vunpack.c.l.b16 %v2062
        %v3219 = vunpack.c.h.b16 %v2062
        %v3220 = vunpack.c.l.b16 %v2063
        %v3221 = vunpack.c.h.b16 %v2063
        %v3222 = vunpack.c.l.b16 %v2064
        %v3223 = vunpack.c.h.b16 %v2064
        %v3224 = vunpack.c.l.b16 %v2065
        %v3225 = vunpack.c.h.b16 %v2065
        %v3226 = vunpack.c.l.b16 %v2066
        %v3227 = vunpack.c.h.b16 %v2066
        %v3228 = vunpack.c.l.b16 %v2067
        %v3229 = vunpack.c.h.b16 %v2067
        %v3230 = vunpack.c.l.b16 %v2068
        %v3231 = vunpack.c.h.b16 %v2068
        %v3232 = vunpack.c.l.b16 %v2069
        %v3233 = vunpack.c.h.b16 %v2069
        %v3234 = vunpack.c.l.b16 %v2070
        %v3235 = vunpack.c.h.b16 %v2070
        %v3236 = vunpack.c.l.b16 %v2071
        %v3237 = vunpack.c.h.b16 %v2071
        %v3238 = vunpack.c.l.b16 %v2072
        %v3239 = vunpack.c.h.b16 %v2072
        %v3240 = vunpack.c.l.b16 %v2073
        %v3241 = vunpack.c.h.b16 %v2073
        %v3242 = vunpack.c.l.b16 %v2074
        %v3243 = vunpack.c.h.b16 %v2074
        %v3244 = vunpack.c.l.b16 %v2075
        %v3245 = vunpack.c.h.b16 %v2075
        %v3246 = vunpack.c.l.b16 %v2076
        %v3247 = vunpack.c.h.b16 %v2076
        %v3248 = vunpack.c.l.b16 %v2077
        %v3249 = vunpack.c.h.b16 %v2077
        %v3250 = vunpack.c.l.b16 %v2078
        %v3251 = vunpack.c.h.b16 %v2078
        %v3252 = vunpack.c.l.b16 %v2079
        %v3253 = vunpack.c.h.b16 %v2079
        %v3254 = vunpack.c.l.b16 %v2080
        %v3255 = vunpack.c.h.b16 %v2080
        %v3256 = vunpack.c.l.b16 %v2081
        %v3257 = vunpack.c.h.b16 %v2081
        %v3258 = vunpack.c.l.b16 %v2082
        %v3259 = vunpack.c.h.b16 %v2082
        %v3260 = vunpack.c.l.b16 %v2083
        %v3261 = vunpack.c.h.b16 %v2083
        %v3262 = vunpack.c.l.b16 %v2084
        %v3263 = vunpack.c.h.b16 %v2084
        %v3264 = vunpack.c.l.b16 %v2085
        %v3265 = vunpack.c.h.b16 %v2085
        %v3266 = vunpack.c.l.b16 %v2086
        %v3267 = vunpack.c.h.b16 %v2086
        %v3268 = vunpack.c.l.b16 %v2087
        %v3269 = vunpack.c.h.b16 %v2087
        %v3270 = vunpack.c.l.b16 %v2088
        %v3271 = vunpack.c.h.b16 %v2088
        %v3272 = vunpack.c.l.b16 %v2089
        %v3273 = vunpack.c.h.b16 %v2089
        %v3274 = vunpack.c.l.b16 %v2090
        %v3275 = vunpack.c.h.b16 %v2090
        %v3276 = vunpack.c.l.b16 %v2091
        %v3277 = vunpack.c.h.b16 %v2091
        %v3278 = vunpack.c.l.b16 %v2092
        %v3279 = vunpack.c.h.b16 %v2092
        %v3280 = vunpack.c.l.b16 %v2093
        %v3281 = vunpack.c.h.b16 %v2093
        %v3282 = vunpack.c.l.b16 %v2094
        %v3283 = vunpack.c.h.b16 %v2094
        %v3284 = vunpack.c.l.b16 %v2095
        %v3285 = vunpack.c.h.b16 %v2095
        %v3286 = vunpack.c.l.b16 %v2096
        %v3287 = vunpack.c.h.b16 %v2096
        %v3288 = vunpack.c.l.b16 %v2097
        %v3289 = vunpack.c.h.b16 %v2097
        %v3290 = vunpack.c.l.b16 %v2098
        %v3291 = vunpack.c.h.b16 %v2098
        %v3292 = vunpack.c.l.b16 %v2099
        %v3293 = vunpack.c.h.b16 %v2099
        %v3294 = vunpack.c.l.b16 %v2100
        %v3295 = vunpack.c.h.b16 %v2100
        %v3296 = vunpack.c.l.b16 %v2101
        %v3297 = vunpack.c.h.b16 %v2101
        %v3298 = vunpack.c.l.b16 %v2102
        %v3299 = vunpack.c.h.b16 %v2102
        %v3300 = vunpack.c.l.b16 %v2103
        %v3301 = vunpack.c.h.b16 %v2103
        %v3302 = vunpack.c.l.b16 %v2104
        %v3303 = vunpack.c.h.b16 %v2104
        %v3304 = vunpack.c.l.b16 %v2105
        %v3305 = vunpack.c.h.b16 %v2105
        %v3306 = vunpack.c.l.b16 %v2106
        %v3307 = vunpack.c.h.b16 %v2106
        %v3308 = vunpack.c.l.b16 %v2107
        %v3309 = vunpack.c.h.b16 %v2107
        %v3310 = vunpack.c.l.b16 %v2108
        %v3311 = vunpack.c.h.b16 %v2108
        %v3312 = vunpack.c.l.b16 %v2109
        %v3313 = vunpack.c.h.b16 %v2109
        %v3314 = vunpack.c.l.b16 %v2110
        %v3315 = vunpack.c.h.b16 %v2110
        %v3316 = vunpack.c.l.b16 %v2111
        %v3317 = vunpack.c.h.b16 %v2111
        %v3318 = vunpack.c.l.b16 %v2112
        %v3319 = vunpack.c.h.b16 %v2112
        %v3320 = vunpack.c.l.b16 %v2113
        %v3321 = vunpack.c.h.b16 %v2113
        %v3322 = vunpack.c.l.b16 %v2114
        %v3323 = vunpack.c.h.b16 %v2114
        %v3324 = vunpack.c.l.b16 %v2115
        %v3325 = vunpack.c.h.b16 %v2115
        %v3326 = vunpack.c.l.b16 %v2116
        %v3327 = vunpack.c.h.b16 %v2116
        %v3328 = vunpack.c.l.b16 %v2117
        %v3329 = vunpack.c.h.b16 %v2117
        %v3330 = vunpack.c.l.b16 %v2118
        %v3331 = vunpack.c.h.b16 %v2118
        %v3332 = vunpack.c.l.b16 %v2119
        %v3333 = vunpack.c.h.b16 %v2119
        %v3334 = vunpack.c.l.b16 %v2120
        %v3335 = vunpack.c.h.b16 %v2120
        %v3336 = vunpack.c.l.b16 %v2121
        %v3337 = vunpack.c.h.b16 %v2121
        %v3338 = vpack.c.b16 %v3212, %v3210
        %v3339 = vpack.c.b16 %v3213, %v3211
        %v3340 = vpack.c.b16 %v3216, %v3214
        %v3341 = vpack.c.b16 %v3217, %v3215
        %v3342 = vpack.c.b16 %v3220, %v3218
        %v3343 = vpack.c.b16 %v3221, %v3219
        %v3344 = vpack.c.b16 %v3224, %v3222
        %v3345 = vpack.c.b16 %v3225, %v3223
        %v3346 = vpack.c.b16 %v3228, %v3226
        %v3347 = vpack.c.b16 %v3229, %v3227
        %v3348 = vpack.c.b16 %v3232, %v3230
        %v3349 = vpack.c.b16 %v3233, %v3231
        %v3350 = vpack.c.b16 %v3236, %v3234
        %v3351 = vpack.c.b16 %v3237, %v3235
        %v3352 = vpack.c.b16 %v3240, %v3238
        %v3353 = vpack.c.b16 %v3241, %v3239
        %v3354 = vpack.c.b16 %v3244, %v3242
        %v3355 = vpack.c.b16 %v3245, %v3243
        %v3356 = vpack.c.b16 %v3248, %v3246
        %v3357 = vpack.c.b16 %v3249, %v3247
        %v3358 = vpack.c.b16 %v3252, %v3250
        %v3359 = vpack.c.b16 %v3253, %v3251
        %v3360 = vpack.c.b16 %v3256, %v3254
        %v3361 = vpack.c.b16 %v3257, %v3255
        %v3362 = vpack.c.b16 %v3260, %v3258
        %v3363 = vpack.c.b16 %v3261, %v3259
        %v3364 = vpack.c.b16 %v3264, %v3262
        %v3365 = vpack.c.b16 %v3265, %v3263
        %v3366 = vpack.c.b16 %v3268, %v3266
        %v3367 = vpack.c.b16 %v3269, %v3267
        %v3368 = vpack.c.b16 %v3272, %v3270
        %v3369 = vpack.c.b16 %v3273, %v3271
        %v3370 = vpack.c.b16 %v3276, %v3274
        %v3371 = vpack.c.b16 %v3277, %v3275
        %v3372 = vpack.c.b16 %v3280, %v3278
        %v3373 = vpack.c.b16 %v3281, %v3279
        %v3374 = vpack.c.b16 %v3284, %v3282
        %v3375 = vpack.c.b16 %v3285, %v3283
        %v3376 = vpack.c.b16 %v3288, %v3286
        %v3377 = vpack.c.b16 %v3289, %v3287
        %v3378 = vpack.c.b16 %v3292, %v3290
        %v3379 = vpack.c.b16 %v3293, %v3291
        %v3380 = vpack.c.b16 %v3296, %v3294
        %v3381 = vpack.c.b16 %v3297, %v3295
        %v3382 = vpack.c.b16 %v3300, %v3298
        %v3383 = vpack.c.b16 %v3301, %v3299
        %v3384 = vpack.c.b16 %v3304, %v3302
        %v3385 = vpack.c.b16 %v3305, %v3303
        %v3386 = vpack.c.b16 %v3308, %v3306
        %v3387 = vpack.c.b16 %v3309, %v3307
        %v3388 = vpack.c.b16 %v3312, %v3310
        %v3389 = vpack.c.b16 %v3313, %v3311
        %v3390 = vpack.c.b16 %v3316, %v3314
        %v3391 = vpack.c.b16 %v3317, %v3315
        %v3392 = vpack.c.b16 %v3320, %v3318
        %v3393 = vpack.c.b16 %v3321, %v3319
        %v3394 = vpack.c.b16 %v3324, %v3322
        %v3395 = vpack.c.b16 %v3325, %v3323
        %v3396 = vpack.c.b16 %v3328, %v3326
        %v3397 = vpack.c.b16 %v3329, %v3327
        %v3398 = vpack.c.b16 %v3332, %v3330
        %v3399 = vpack.c.b16 %v3333, %v3331
        %v3400 = vpack.c.b16 %v3336, %v3334
        %v3401 = vpack.c.b16 %v3337, %v3335
        %3466 = vmatpush.bf16.msra.mxu0 %v3352
        %3467 = vmatpush.bf16.msra.mxu0 %v3350
        %3468 = vmatpush.bf16.msra.mxu0 %v3348
        %3469 = vmatpush.bf16.msra.mxu0 %v3346
        %3470 = vmatpush.bf16.msra.mxu0 %v3344
        %3471 = vmatpush.bf16.msra.mxu0 %v3342
        %3472 = vmatpush.bf16.msra.mxu0 %v3340
        %3473 = vmatpush.bf16.msra.mxu0 %v3338
        %3474 = vmatmul.bf16.gmra.mxu0 %v2026
        %v3475 = vpop.f32.mrf.mxu0
        %v3476 = vadd.f32 %v2944, %v3475
        %v3477 = vpop.f32.mrf.mxu0
        %v3478 = vadd.f32 %v2946, %v3477
        %3479 = vmatmul.bf16.gmra.mxu0 %v2030
        %v3480 = vpop.f32.mrf.mxu0
        %v3481 = vadd.f32 %v2949, %v3480
        %v3482 = vpop.f32.mrf.mxu0
        %v3483 = vadd.f32 %v2951, %v3482
        %3484 = vmatmul.bf16.gmra.mxu0 %v2034
        %v3485 = vpop.f32.mrf.mxu0
        %v3486 = vadd.f32 %v3002, %v3485
        %v3487 = vpop.f32.mrf.mxu0
        %v3488 = vadd.f32 %v3004, %v3487
        %3489 = vmatmul.bf16.gmra.mxu0 %v2038
        %v3490 = vpop.f32.mrf.mxu0
        %v3491 = vadd.f32 %v3007, %v3490
        %v3492 = vpop.f32.mrf.mxu0
        %v3493 = vadd.f32 %v3009, %v3492
        %3494 = vmatmul.bf16.gmra.mxu0 %v2042
        %v3495 = vpop.f32.mrf.mxu0
        %v3496 = vadd.f32 %v3060, %v3495
        %v3497 = vpop.f32.mrf.mxu0
        %v3498 = vadd.f32 %v3062, %v3497
        %3499 = vmatmul.bf16.gmra.mxu0 %v2046
        %v3500 = vpop.f32.mrf.mxu0
        %v3501 = vadd.f32 %v3065, %v3500
        %v3502 = vpop.f32.mrf.mxu0
        %v3503 = vadd.f32 %v3067, %v3502
        %3504 = vmatmul.bf16.gmra.mxu0 %v2050
        %v3505 = vpop.f32.mrf.mxu0
        %v3506 = vadd.f32 %v3118, %v3505
        %v3507 = vpop.f32.mrf.mxu0
        %v3508 = vadd.f32 %v3120, %v3507
        %3509 = vmatmul.bf16.gmra.mxu0 %v2054
        %v3510 = vpop.f32.mrf.mxu0
        %v3511 = vadd.f32 %v3123, %v3510
        %v3512 = vpop.f32.mrf.mxu0
        %v3513 = vadd.f32 %v3125, %v3512
        %3514 = vdwg.mxu0
        %3515 = vmatpush.bf16.msra.mxu0 %v3368
        %3516 = vmatpush.bf16.msra.mxu0 %v3366
        %3517 = vmatpush.bf16.msra.mxu0 %v3364
        %3518 = vmatpush.bf16.msra.mxu0 %v3362
        %3519 = vmatpush.bf16.msra.mxu0 %v3360
        %3520 = vmatpush.bf16.msra.mxu0 %v3358
        %3521 = vmatpush.bf16.msra.mxu0 %v3356
        %3522 = vmatpush.bf16.msra.mxu0 %v3354
        %3523 = vmatmul.bf16.gmra.mxu0 %v2027
        %v3524 = vpop.f32.mrf.mxu0
        %v3525 = vadd.f32 %v3476, %v3524
        %v3526 = vpop.f32.mrf.mxu0
        %v3527 = vadd.f32 %v3478, %v3526
        %3528 = vmatmul.bf16.gmra.mxu0 %v2031
        %v3529 = vpop.f32.mrf.mxu0
        %v3530 = vadd.f32 %v3481, %v3529
        %v3531 = vpop.f32.mrf.mxu0
        %v3532 = vadd.f32 %v3483, %v3531
        %3533 = vmatmul.bf16.gmra.mxu0 %v2035
        %v3534 = vpop.f32.mrf.mxu0
        %v3535 = vadd.f32 %v3486, %v3534
        %v3536 = vpop.f32.mrf.mxu0
        %v3537 = vadd.f32 %v3488, %v3536
        %3538 = vmatmul.bf16.gmra.mxu0 %v2039
        %v3539 = vpop.f32.mrf.mxu0
        %v3540 = vadd.f32 %v3491, %v3539
        %v3541 = vpop.f32.mrf.mxu0
        %v3542 = vadd.f32 %v3493, %v3541
        %3543 = vmatmul.bf16.gmra.mxu0 %v2043
        %v3544 = vpop.f32.mrf.mxu0
        %v3545 = vadd.f32 %v3496, %v3544
        %v3546 = vpop.f32.mrf.mxu0
        %v3547 = vadd.f32 %v3498, %v3546
        %3548 = vmatmul.bf16.gmra.mxu0 %v2047
        %v3549 = vpop.f32.mrf.mxu0
        %v3550 = vadd.f32 %v3501, %v3549
        %v3551 = vpop.f32.mrf.mxu0
        %v3552 = vadd.f32 %v3503, %v3551
        %3553 = vmatmul.bf16.gmra.mxu0 %v2051
        %v3554 = vpop.f32.mrf.mxu0
        %v3555 = vadd.f32 %v3506, %v3554
        %v3556 = vpop.f32.mrf.mxu0
        %v3557 = vadd.f32 %v3508, %v3556
        %3558 = vmatmul.bf16.gmra.mxu0 %v2055
        %v3559 = vpop.f32.mrf.mxu0
        %v3560 = vadd.f32 %v3511, %v3559
        %v3561 = vpop.f32.mrf.mxu0
        %v3562 = vadd.f32 %v3513, %v3561
        %3563 = vdwg.mxu0
        %3564 = vmatpush.bf16.msra.mxu0 %v3384
        %3565 = vmatpush.bf16.msra.mxu0 %v3382
        %3566 = vmatpush.bf16.msra.mxu0 %v3380
        %3567 = vmatpush.bf16.msra.mxu0 %v3378
        %3568 = vmatpush.bf16.msra.mxu0 %v3376
        %3569 = vmatpush.bf16.msra.mxu0 %v3374
        %3570 = vmatpush.bf16.msra.mxu0 %v3372
        %3571 = vmatpush.bf16.msra.mxu0 %v3370
        %3572 = vmatmul.bf16.gmra.mxu0 %v2028
        %v3573 = vpop.f32.mrf.mxu0
        %v3574 = vadd.f32 %v3525, %v3573
        %v3575 = vpop.f32.mrf.mxu0
        %v3576 = vadd.f32 %v3527, %v3575
        %3577 = vmatmul.bf16.gmra.mxu0 %v2032
        %v3578 = vpop.f32.mrf.mxu0
        %v3579 = vadd.f32 %v3530, %v3578
        %v3580 = vpop.f32.mrf.mxu0
        %v3581 = vadd.f32 %v3532, %v3580
        %3582 = vmatmul.bf16.gmra.mxu0 %v2036
        %v3583 = vpop.f32.mrf.mxu0
        %v3584 = vadd.f32 %v3535, %v3583
        %v3585 = vpop.f32.mrf.mxu0
        %v3586 = vadd.f32 %v3537, %v3585
        %3587 = vmatmul.bf16.gmra.mxu0 %v2040
        %v3588 = vpop.f32.mrf.mxu0
        %v3589 = vadd.f32 %v3540, %v3588
        %v3590 = vpop.f32.mrf.mxu0
        %v3591 = vadd.f32 %v3542, %v3590
        %3592 = vmatmul.bf16.gmra.mxu0 %v2044
        %v3593 = vpop.f32.mrf.mxu0
        %v3594 = vadd.f32 %v3545, %v3593
        %v3595 = vpop.f32.mrf.mxu0
        %v3596 = vadd.f32 %v3547, %v3595
        %3597 = vmatmul.bf16.gmra.mxu0 %v2048
        %v3598 = vpop.f32.mrf.mxu0
        %v3599 = vadd.f32 %v3550, %v3598
        %v3600 = vpop.f32.mrf.mxu0
        %v3601 = vadd.f32 %v3552, %v3600
        %3602 = vmatmul.bf16.gmra.mxu0 %v2052
        %v3603 = vpop.f32.mrf.mxu0
        %v3604 = vadd.f32 %v3555, %v3603
        %v3605 = vpop.f32.mrf.mxu0
        %v3606 = vadd.f32 %v3557, %v3605
        %3607 = vmatmul.bf16.gmra.mxu0 %v2056
        %v3608 = vpop.f32.mrf.mxu0
        %v3609 = vadd.f32 %v3560, %v3608
        %v3610 = vpop.f32.mrf.mxu0
        %v3611 = vadd.f32 %v3562, %v3610
        %3612 = vdwg.mxu0
        %3613 = vmatpush.bf16.msra.mxu0 %v3400
        %3614 = vmatpush.bf16.msra.mxu0 %v3398
        %3615 = vmatpush.bf16.msra.mxu0 %v3396
        %3616 = vmatpush.bf16.msra.mxu0 %v3394
        %3617 = vmatpush.bf16.msra.mxu0 %v3392
        %3618 = vmatpush.bf16.msra.mxu0 %v3390
        %3619 = vmatpush.bf16.msra.mxu0 %v3388
        %3620 = vmatpush.bf16.msra.mxu0 %v3386
        %3621 = vmatmul.bf16.gmra.mxu0 %v2029
        %v3622 = vpop.f32.mrf.mxu0
        %v3623 = vadd.f32 %v3574, %v3622
        %v3624 = vpop.f32.mrf.mxu0
        %v3625 = vadd.f32 %v3576, %v3624
        %3626 = vmatmul.bf16.gmra.mxu0 %v2033
        %v3627 = vpop.f32.mrf.mxu0
        %v3628 = vadd.f32 %v3579, %v3627
        %v3629 = vpop.f32.mrf.mxu0
        %v3630 = vadd.f32 %v3581, %v3629
        %3631 = vmatmul.bf16.gmra.mxu0 %v2037
        %v3632 = vpop.f32.mrf.mxu0
        %v3633 = vadd.f32 %v3584, %v3632
        %v3634 = vpop.f32.mrf.mxu0
        %v3635 = vadd.f32 %v3586, %v3634
        %3636 = vmatmul.bf16.gmra.mxu0 %v2041
        %v3637 = vpop.f32.mrf.mxu0
        %v3638 = vadd.f32 %v3589, %v3637
        %v3639 = vpop.f32.mrf.mxu0
        %v3640 = vadd.f32 %v3591, %v3639
        %3641 = vmatmul.bf16.gmra.mxu0 %v2045
        %v3642 = vpop.f32.mrf.mxu0
        %v3643 = vadd.f32 %v3594, %v3642
        %v3644 = vpop.f32.mrf.mxu0
        %v3645 = vadd.f32 %v3596, %v3644
        %3646 = vmatmul.bf16.gmra.mxu0 %v2049
        %v3647 = vpop.f32.mrf.mxu0
        %v3648 = vadd.f32 %v3599, %v3647
        %v3649 = vpop.f32.mrf.mxu0
        %v3650 = vadd.f32 %v3601, %v3649
        %3651 = vmatmul.bf16.gmra.mxu0 %v2053
        %v3652 = vpop.f32.mrf.mxu0
        %v3653 = vadd.f32 %v3604, %v3652
        %v3654 = vpop.f32.mrf.mxu0
        %v3655 = vadd.f32 %v3606, %v3654
        %3656 = vmatmul.bf16.gmra.mxu0 %v2057
        %v3657 = vpop.f32.mrf.mxu0
        %v3658 = vadd.f32 %v3609, %v3657
        %v3659 = vpop.f32.mrf.mxu0
        %v3660 = vadd.f32 %v3611, %v3659
        %3661 = vdwg.mxu0
        %3662 = vmatpush.bf16.msra.mxu0 %v3353
        %3663 = vmatpush.bf16.msra.mxu0 %v3351
        %3664 = vmatpush.bf16.msra.mxu0 %v3349
        %3665 = vmatpush.bf16.msra.mxu0 %v3347
        %3666 = vmatpush.bf16.msra.mxu0 %v3345
        %3667 = vmatpush.bf16.msra.mxu0 %v3343
        %3668 = vmatpush.bf16.msra.mxu0 %v3341
        %3669 = vmatpush.bf16.msra.mxu0 %v3339
        %3670 = vmatmul.bf16.gmra.mxu0 %v2026
        %v3671 = vpop.f32.mrf.mxu0
        %v3672 = vadd.f32 %v2963, %v3671
        %v3673 = vpop.f32.mrf.mxu0
        %v3674 = vadd.f32 %v2965, %v3673
        %3675 = vmatmul.bf16.gmra.mxu0 %v2030
        %v3676 = vpop.f32.mrf.mxu0
        %v3677 = vadd.f32 %v2968, %v3676
        %v3678 = vpop.f32.mrf.mxu0
        %v3679 = vadd.f32 %v2970, %v3678
        %3680 = vmatmul.bf16.gmra.mxu0 %v2034
        %v3681 = vpop.f32.mrf.mxu0
        %v3682 = vadd.f32 %v3021, %v3681
        %v3683 = vpop.f32.mrf.mxu0
        %v3684 = vadd.f32 %v3023, %v3683
        %3685 = vmatmul.bf16.gmra.mxu0 %v2038
        %v3686 = vpop.f32.mrf.mxu0
        %v3687 = vadd.f32 %v3026, %v3686
        %v3688 = vpop.f32.mrf.mxu0
        %v3689 = vadd.f32 %v3028, %v3688
        %3690 = vmatmul.bf16.gmra.mxu0 %v2042
        %v3691 = vpop.f32.mrf.mxu0
        %v3692 = vadd.f32 %v3079, %v3691
        %v3693 = vpop.f32.mrf.mxu0
        %v3694 = vadd.f32 %v3081, %v3693
        %3695 = vmatmul.bf16.gmra.mxu0 %v2046
        %v3696 = vpop.f32.mrf.mxu0
        %v3697 = vadd.f32 %v3084, %v3696
        %v3698 = vpop.f32.mrf.mxu0
        %v3699 = vadd.f32 %v3086, %v3698
        %3700 = vmatmul.bf16.gmra.mxu0 %v2050
        %v3701 = vpop.f32.mrf.mxu0
        %v3702 = vadd.f32 %v3137, %v3701
        %v3703 = vpop.f32.mrf.mxu0
        %v3704 = vadd.f32 %v3139, %v3703
        %3705 = vmatmul.bf16.gmra.mxu0 %v2054
        %v3706 = vpop.f32.mrf.mxu0
        %v3707 = vadd.f32 %v3142, %v3706
        %v3708 = vpop.f32.mrf.mxu0
        %v3709 = vadd.f32 %v3144, %v3708
        %3710 = vdwg.mxu0
        %3711 = vmatpush.bf16.msra.mxu0 %v3369
        %3712 = vmatpush.bf16.msra.mxu0 %v3367
        %3713 = vmatpush.bf16.msra.mxu0 %v3365
        %3714 = vmatpush.bf16.msra.mxu0 %v3363
        %3715 = vmatpush.bf16.msra.mxu0 %v3361
        %3716 = vmatpush.bf16.msra.mxu0 %v3359
        %3717 = vmatpush.bf16.msra.mxu0 %v3357
        %3718 = vmatpush.bf16.msra.mxu0 %v3355
        %3719 = vmatmul.bf16.gmra.mxu0 %v2027
        %v3720 = vpop.f32.mrf.mxu0
        %v3721 = vadd.f32 %v3672, %v3720
        %v3722 = vpop.f32.mrf.mxu0
        %v3723 = vadd.f32 %v3674, %v3722
        %3724 = vmatmul.bf16.gmra.mxu0 %v2031
        %v3725 = vpop.f32.mrf.mxu0
        %v3726 = vadd.f32 %v3677, %v3725
        %v3727 = vpop.f32.mrf.mxu0
        %v3728 = vadd.f32 %v3679, %v3727
        %3729 = vmatmul.bf16.gmra.mxu0 %v2035
        %v3730 = vpop.f32.mrf.mxu0
        %v3731 = vadd.f32 %v3682, %v3730
        %v3732 = vpop.f32.mrf.mxu0
        %v3733 = vadd.f32 %v3684, %v3732
        %3734 = vmatmul.bf16.gmra.mxu0 %v2039
        %v3735 = vpop.f32.mrf.mxu0
        %v3736 = vadd.f32 %v3687, %v3735
        %v3737 = vpop.f32.mrf.mxu0
        %v3738 = vadd.f32 %v3689, %v3737
        %3739 = vmatmul.bf16.gmra.mxu0 %v2043
        %v3740 = vpop.f32.mrf.mxu0
        %v3741 = vadd.f32 %v3692, %v3740
        %v3742 = vpop.f32.mrf.mxu0
        %v3743 = vadd.f32 %v3694, %v3742
        %3744 = vmatmul.bf16.gmra.mxu0 %v2047
        %v3745 = vpop.f32.mrf.mxu0
        %v3746 = vadd.f32 %v3697, %v3745
        %v3747 = vpop.f32.mrf.mxu0
        %v3748 = vadd.f32 %v3699, %v3747
        %3749 = vmatmul.bf16.gmra.mxu0 %v2051
        %v3750 = vpop.f32.mrf.mxu0
        %v3751 = vadd.f32 %v3702, %v3750
        %v3752 = vpop.f32.mrf.mxu0
        %v3753 = vadd.f32 %v3704, %v3752
        %3754 = vmatmul.bf16.gmra.mxu0 %v2055
        %v3755 = vpop.f32.mrf.mxu0
        %v3756 = vadd.f32 %v3707, %v3755
        %v3757 = vpop.f32.mrf.mxu0
        %v3758 = vadd.f32 %v3709, %v3757
        %3759 = vdwg.mxu0
        %3760 = vmatpush.bf16.msra.mxu0 %v3385
        %3761 = vmatpush.bf16.msra.mxu0 %v3383
        %3762 = vmatpush.bf16.msra.mxu0 %v3381
        %3763 = vmatpush.bf16.msra.mxu0 %v3379
        %3764 = vmatpush.bf16.msra.mxu0 %v3377
        %3765 = vmatpush.bf16.msra.mxu0 %v3375
        %3766 = vmatpush.bf16.msra.mxu0 %v3373
        %3767 = vmatpush.bf16.msra.mxu0 %v3371
        %3768 = vmatmul.bf16.gmra.mxu0 %v2028
        %v3769 = vpop.f32.mrf.mxu0
        %v3770 = vadd.f32 %v3721, %v3769
        %v3771 = vpop.f32.mrf.mxu0
        %v3772 = vadd.f32 %v3723, %v3771
        %3773 = vmatmul.bf16.gmra.mxu0 %v2032
        %v3774 = vpop.f32.mrf.mxu0
        %v3775 = vadd.f32 %v3726, %v3774
        %v3776 = vpop.f32.mrf.mxu0
        %v3777 = vadd.f32 %v3728, %v3776
        %3778 = vmatmul.bf16.gmra.mxu0 %v2036
        %v3779 = vpop.f32.mrf.mxu0
        %v3780 = vadd.f32 %v3731, %v3779
        %v3781 = vpop.f32.mrf.mxu0
        %v3782 = vadd.f32 %v3733, %v3781
        %3783 = vmatmul.bf16.gmra.mxu0 %v2040
        %v3784 = vpop.f32.mrf.mxu0
        %v3785 = vadd.f32 %v3736, %v3784
        %v3786 = vpop.f32.mrf.mxu0
        %v3787 = vadd.f32 %v3738, %v3786
        %3788 = vmatmul.bf16.gmra.mxu0 %v2044
        %v3789 = vpop.f32.mrf.mxu0
        %v3790 = vadd.f32 %v3741, %v3789
        %v3791 = vpop.f32.mrf.mxu0
        %v3792 = vadd.f32 %v3743, %v3791
        %3793 = vmatmul.bf16.gmra.mxu0 %v2048
        %v3794 = vpop.f32.mrf.mxu0
        %v3795 = vadd.f32 %v3746, %v3794
        %v3796 = vpop.f32.mrf.mxu0
        %v3797 = vadd.f32 %v3748, %v3796
        %3798 = vmatmul.bf16.gmra.mxu0 %v2052
        %v3799 = vpop.f32.mrf.mxu0
        %v3800 = vadd.f32 %v3751, %v3799
        %v3801 = vpop.f32.mrf.mxu0
        %v3802 = vadd.f32 %v3753, %v3801
        %3803 = vmatmul.bf16.gmra.mxu0 %v2056
        %v3804 = vpop.f32.mrf.mxu0
        %v3805 = vadd.f32 %v3756, %v3804
        %v3806 = vpop.f32.mrf.mxu0
        %v3807 = vadd.f32 %v3758, %v3806
        %3808 = vdwg.mxu0
        %3809 = vmatpush.bf16.msra.mxu0 %v3401
        %3810 = vmatpush.bf16.msra.mxu0 %v3399
        %3811 = vmatpush.bf16.msra.mxu0 %v3397
        %3812 = vmatpush.bf16.msra.mxu0 %v3395
        %3813 = vmatpush.bf16.msra.mxu0 %v3393
        %3814 = vmatpush.bf16.msra.mxu0 %v3391
        %3815 = vmatpush.bf16.msra.mxu0 %v3389
        %3816 = vmatpush.bf16.msra.mxu0 %v3387
        %3817 = vmatmul.bf16.gmra.mxu0 %v2029
        %v3818 = vpop.f32.mrf.mxu0
        %v3819 = vadd.f32 %v3770, %v3818
        %v3820 = vpop.f32.mrf.mxu0
        %v3821 = vadd.f32 %v3772, %v3820
        %3822 = vmatmul.bf16.gmra.mxu0 %v2033
        %v3823 = vpop.f32.mrf.mxu0
        %v3824 = vadd.f32 %v3775, %v3823
        %v3825 = vpop.f32.mrf.mxu0
        %v3826 = vadd.f32 %v3777, %v3825
        %3827 = vmatmul.bf16.gmra.mxu0 %v2037
        %v3828 = vpop.f32.mrf.mxu0
        %v3829 = vadd.f32 %v3780, %v3828
        %v3830 = vpop.f32.mrf.mxu0
        %v3831 = vadd.f32 %v3782, %v3830
        %3832 = vmatmul.bf16.gmra.mxu0 %v2041
        %v3833 = vpop.f32.mrf.mxu0
        %v3834 = vadd.f32 %v3785, %v3833
        %v3835 = vpop.f32.mrf.mxu0
        %v3836 = vadd.f32 %v3787, %v3835
        %3837 = vmatmul.bf16.gmra.mxu0 %v2045
        %v3838 = vpop.f32.mrf.mxu0
        %v3839 = vadd.f32 %v3790, %v3838
        %v3840 = vpop.f32.mrf.mxu0
        %v3841 = vadd.f32 %v3792, %v3840
        %3842 = vmatmul.bf16.gmra.mxu0 %v2049
        %v3843 = vpop.f32.mrf.mxu0
        %v3844 = vadd.f32 %v3795, %v3843
        %v3845 = vpop.f32.mrf.mxu0
        %v3846 = vadd.f32 %v3797, %v3845
        %3847 = vmatmul.bf16.gmra.mxu0 %v2053
        %v3848 = vpop.f32.mrf.mxu0
        %v3849 = vadd.f32 %v3800, %v3848
        %v3850 = vpop.f32.mrf.mxu0
        %v3851 = vadd.f32 %v3802, %v3850
        %3852 = vmatmul.bf16.gmra.mxu0 %v2057
        %v3853 = vpop.f32.mrf.mxu0
        %v3854 = vadd.f32 %v3805, %v3853
        %v3855 = vpop.f32.mrf.mxu0
        %v3856 = vadd.f32 %v3807, %v3855
        %3857 = vdwg.mxu0
        %v3858 = vld [vmem:[%s10] sm:$0x3]
        %v3860 = vperm.slane %v3858, 0
        %v3861 = vperm.slane %v3858, 1
        %v3864 = vadd.f32 %v3623, %v3860
        %v3865 = vadd.f32 %v3819, %v3861
        %v3866 = vadd.f32 %v3625, %v3860
        %v3867 = vadd.f32 %v3821, %v3861
        %v3868 = vadd.f32 %v3628, %v3860
        %v3869 = vadd.f32 %v3824, %v3861
        %v3870 = vadd.f32 %v3630, %v3860
        %v3871 = vadd.f32 %v3826, %v3861
        %v3872 = vadd.f32 %v3633, %v3860
        %v3873 = vadd.f32 %v3829, %v3861
        %v3874 = vadd.f32 %v3635, %v3860
        %v3875 = vadd.f32 %v3831, %v3861
        %v3876 = vadd.f32 %v3638, %v3860
        %v3877 = vadd.f32 %v3834, %v3861
        %v3878 = vadd.f32 %v3640, %v3860
        %v3879 = vadd.f32 %v3836, %v3861
        %v3880 = vadd.f32 %v3643, %v3860
        %v3881 = vadd.f32 %v3839, %v3861
        %v3882 = vadd.f32 %v3645, %v3860
        %v3883 = vadd.f32 %v3841, %v3861
        %v3884 = vadd.f32 %v3648, %v3860
        %v3885 = vadd.f32 %v3844, %v3861
        %v3886 = vadd.f32 %v3650, %v3860
        %v3887 = vadd.f32 %v3846, %v3861
        %v3888 = vadd.f32 %v3653, %v3860
        %v3889 = vadd.f32 %v3849, %v3861
        %v3890 = vadd.f32 %v3655, %v3860
        %v3891 = vadd.f32 %v3851, %v3861
        %v3892 = vadd.f32 %v3658, %v3860
        %v3893 = vadd.f32 %v3854, %v3861
        %v3894 = vadd.f32 %v3660, %v3860
        %v3895 = vadd.f32 %v3856, %v3861
        %v3896 = vmax.f32 %v3864, 0.0
        %v3897 = vmax.f32 %v3865, 0.0
        %v3898 = vmax.f32 %v3866, 0.0
        %v3899 = vmax.f32 %v3867, 0.0
        %v3900 = vmax.f32 %v3868, 0.0
        %v3901 = vmax.f32 %v3869, 0.0
        %v3902 = vmax.f32 %v3870, 0.0
        %v3903 = vmax.f32 %v3871, 0.0
        %v3904 = vmax.f32 %v3872, 0.0
        %v3905 = vmax.f32 %v3873, 0.0
        %v3906 = vmax.f32 %v3874, 0.0
        %v3907 = vmax.f32 %v3875, 0.0
        %v3908 = vmax.f32 %v3876, 0.0
        %v3909 = vmax.f32 %v3877, 0.0
        %v3910 = vmax.f32 %v3878, 0.0
        %v3911 = vmax.f32 %v3879, 0.0
        %v3912 = vmax.f32 %v3880, 0.0
        %v3913 = vmax.f32 %v3881, 0.0
        %v3914 = vmax.f32 %v3882, 0.0
        %v3915 = vmax.f32 %v3883, 0.0
        %v3916 = vmax.f32 %v3884, 0.0
        %v3917 = vmax.f32 %v3885, 0.0
        %v3918 = vmax.f32 %v3886, 0.0
        %v3919 = vmax.f32 %v3887, 0.0
        %v3920 = vmax.f32 %v3888, 0.0
        %v3921 = vmax.f32 %v3889, 0.0
        %v3922 = vmax.f32 %v3890, 0.0
        %v3923 = vmax.f32 %v3891, 0.0
        %v3924 = vmax.f32 %v3892, 0.0
        %v3925 = vmax.f32 %v3893, 0.0
        %v3926 = vmax.f32 %v3894, 0.0
        %v3927 = vmax.f32 %v3895, 0.0
        %v3928 = vpack.c.bf16 %v3898, %v3896
        %v3929 = vpack.c.bf16 %v3899, %v3897
        %v3930 = vpack.c.bf16 %v3902, %v3900
        %v3931 = vpack.c.bf16 %v3903, %v3901
        %v3932 = vpack.c.bf16 %v3906, %v3904
        %v3933 = vpack.c.bf16 %v3907, %v3905
        %v3934 = vpack.c.bf16 %v3910, %v3908
        %v3935 = vpack.c.bf16 %v3911, %v3909
        %v3936 = vpack.c.bf16 %v3914, %v3912
        %v3937 = vpack.c.bf16 %v3915, %v3913
        %v3938 = vpack.c.bf16 %v3918, %v3916
        %v3939 = vpack.c.bf16 %v3919, %v3917
        %v3940 = vpack.c.bf16 %v3922, %v3920
        %v3941 = vpack.c.bf16 %v3923, %v3921
        %v3942 = vpack.c.bf16 %v3926, %v3924
        %v3943 = vpack.c.bf16 %v3927, %v3925
        %v3944 = vld [vmem:[#allocation13] sm:$0xf]
        %v3945 = vld [vmem:[#allocation13 + $0x4] sm:$0xf]
        %v3946 = vld [vmem:[#allocation13 + $0x8] sm:$0xf]
        %v3947 = vld [vmem:[#allocation13 + $0xc] sm:$0xf]
        %v3948 = vld [vmem:[#allocation13 + $0x10] sm:$0xf]
        %v3949 = vld [vmem:[#allocation13 + $0x14] sm:$0xf]
        %v3950 = vld [vmem:[#allocation13 + $0x18] sm:$0xf]
        %v3951 = vld [vmem:[#allocation13 + $0x1c] sm:$0xf]
        %v3952 = vld [vmem:[#allocation13 + $0x20] sm:$0xf]
        %v3953 = vld [vmem:[#allocation13 + $0x24] sm:$0xf]
        %v3954 = vld [vmem:[#allocation13 + $0x28] sm:$0xf]
        %v3955 = vld [vmem:[#allocation13 + $0x2c] sm:$0xf]
        %v3956 = vld [vmem:[#allocation13 + $0x30] sm:$0xf]
        %v3957 = vld [vmem:[#allocation13 + $0x34] sm:$0xf]
        %v3958 = vld [vmem:[#allocation13 + $0x38] sm:$0xf]
        %v3959 = vld [vmem:[#allocation13 + $0x3c] sm:$0xf]
        %v3960 = vld [vmem:[#allocation13 + $0x40] sm:$0xf]
        %v3961 = vld [vmem:[#allocation13 + $0x44] sm:$0xf]
        %v3962 = vld [vmem:[#allocation13 + $0x48] sm:$0xf]
        %v3963 = vld [vmem:[#allocation13 + $0x4c] sm:$0xf]
        %v3964 = vld [vmem:[#allocation13 + $0x50] sm:$0xf]
        %v3965 = vld [vmem:[#allocation13 + $0x54] sm:$0xf]
        %v3966 = vld [vmem:[#allocation13 + $0x58] sm:$0xf]
        %v3967 = vld [vmem:[#allocation13 + $0x5c] sm:$0xf]
        %v3968 = vld [vmem:[#allocation13 + $0x60] sm:$0xf]
        %v3969 = vld [vmem:[#allocation13 + $0x64] sm:$0xf]
        %v3970 = vld [vmem:[#allocation13 + $0x68] sm:$0xf]
        %v3971 = vld [vmem:[#allocation13 + $0x6c] sm:$0xf]
        %v3972 = vld [vmem:[#allocation13 + $0x70] sm:$0xf]
        %v3973 = vld [vmem:[#allocation13 + $0x74] sm:$0xf]
        %v3974 = vld [vmem:[#allocation13 + $0x78] sm:$0xf]
        %v3975 = vld [vmem:[#allocation13 + $0x7c] sm:$0xf]
        %v3976 = vld [vmem:[#allocation14] sm:$0xf]
        %v3977 = vld [vmem:[#allocation14 + $0x4] sm:$0xf]
        %v3978 = vld [vmem:[#allocation14 + $0x8] sm:$0xf]
        %v3979 = vld [vmem:[#allocation14 + $0xc] sm:$0xf]
        %v3980 = vld [vmem:[#allocation14 + $0x10] sm:$0xf]
        %v3981 = vld [vmem:[#allocation14 + $0x14] sm:$0xf]
        %v3982 = vld [vmem:[#allocation14 + $0x18] sm:$0xf]
        %v3983 = vld [vmem:[#allocation14 + $0x1c] sm:$0xf]
        %v3984 = vld [vmem:[#allocation14 + $0x20] sm:$0xf]
        %v3985 = vld [vmem:[#allocation14 + $0x24] sm:$0xf]
        %v3986 = vld [vmem:[#allocation14 + $0x28] sm:$0xf]
        %v3987 = vld [vmem:[#allocation14 + $0x2c] sm:$0xf]
        %v3988 = vld [vmem:[#allocation14 + $0x30] sm:$0xf]
        %v3989 = vld [vmem:[#allocation14 + $0x34] sm:$0xf]
        %v3990 = vld [vmem:[#allocation14 + $0x38] sm:$0xf]
        %v3991 = vld [vmem:[#allocation14 + $0x3c] sm:$0xf]
        %v3992 = vld [vmem:[#allocation14 + $0x40] sm:$0xf]
        %v3993 = vld [vmem:[#allocation14 + $0x44] sm:$0xf]
        %v3994 = vld [vmem:[#allocation14 + $0x48] sm:$0xf]
        %v3995 = vld [vmem:[#allocation14 + $0x4c] sm:$0xf]
        %v3996 = vld [vmem:[#allocation14 + $0x50] sm:$0xf]
        %v3997 = vld [vmem:[#allocation14 + $0x54] sm:$0xf]
        %v3998 = vld [vmem:[#allocation14 + $0x58] sm:$0xf]
        %v3999 = vld [vmem:[#allocation14 + $0x5c] sm:$0xf]
        %v4000 = vld [vmem:[#allocation14 + $0x60] sm:$0xf]
        %v4001 = vld [vmem:[#allocation14 + $0x64] sm:$0xf]
        %v4002 = vld [vmem:[#allocation14 + $0x68] sm:$0xf]
        %v4003 = vld [vmem:[#allocation14 + $0x6c] sm:$0xf]
        %v4004 = vld [vmem:[#allocation14 + $0x70] sm:$0xf]
        %v4005 = vld [vmem:[#allocation14 + $0x74] sm:$0xf]
        %v4006 = vld [vmem:[#allocation14 + $0x78] sm:$0xf]
        %v4007 = vld [vmem:[#allocation14 + $0x7c] sm:$0xf]
        %v4040 = vunpack.c.l.b16 %v3976
        %v4041 = vunpack.c.l.b16 %v3977
        %v4042 = vunpack.c.l.b16 %v3978
        %v4043 = vunpack.c.l.b16 %v3979
        %v4044 = vunpack.c.l.b16 %v3980
        %v4045 = vunpack.c.l.b16 %v3981
        %v4046 = vunpack.c.l.b16 %v3982
        %v4047 = vunpack.c.l.b16 %v3983
        %v4048 = vunpack.c.l.b16 %v3984
        %v4049 = vunpack.c.l.b16 %v3985
        %v4050 = vunpack.c.l.b16 %v3986
        %v4051 = vunpack.c.l.b16 %v3987
        %v4052 = vunpack.c.l.b16 %v3988
        %v4053 = vunpack.c.l.b16 %v3989
        %v4054 = vunpack.c.l.b16 %v3990
        %v4055 = vunpack.c.l.b16 %v3991
        %v4056 = vunpack.c.l.b16 %v3992
        %v4057 = vunpack.c.l.b16 %v3993
        %v4058 = vunpack.c.l.b16 %v3994
        %v4059 = vunpack.c.l.b16 %v3995
        %v4060 = vunpack.c.l.b16 %v3996
        %v4061 = vunpack.c.l.b16 %v3997
        %v4062 = vunpack.c.l.b16 %v3998
        %v4063 = vunpack.c.l.b16 %v3999
        %v4064 = vunpack.c.l.b16 %v4000
        %v4065 = vunpack.c.l.b16 %v4001
        %v4066 = vunpack.c.l.b16 %v4002
        %v4067 = vunpack.c.l.b16 %v4003
        %v4068 = vunpack.c.l.b16 %v4004
        %v4069 = vunpack.c.l.b16 %v4005
        %v4070 = vunpack.c.l.b16 %v4006
        %v4071 = vunpack.c.l.b16 %v4007
        %v4072 = vpack.c.b16 %v4041, %v4040
        %v4073 = vpack.c.b16 %v4043, %v4042
        %v4074 = vpack.c.b16 %v4045, %v4044
        %v4075 = vpack.c.b16 %v4047, %v4046
        %v4076 = vpack.c.b16 %v4049, %v4048
        %v4077 = vpack.c.b16 %v4051, %v4050
        %v4078 = vpack.c.b16 %v4053, %v4052
        %v4079 = vpack.c.b16 %v4055, %v4054
        %v4080 = vpack.c.b16 %v4057, %v4056
        %v4081 = vpack.c.b16 %v4059, %v4058
        %v4082 = vpack.c.b16 %v4061, %v4060
        %v4083 = vpack.c.b16 %v4063, %v4062
        %v4084 = vpack.c.b16 %v4065, %v4064
        %v4085 = vpack.c.b16 %v4067, %v4066
        %v4086 = vpack.c.b16 %v4069, %v4068
        %v4087 = vpack.c.b16 %v4071, %v4070
        %4104 = vmatpush.bf16.msra.mxu0 %v4079
        %4105 = vmatpush.bf16.msra.mxu0 %v4078
        %4106 = vmatpush.bf16.msra.mxu0 %v4077
        %4107 = vmatpush.bf16.msra.mxu0 %v4076
        %4108 = vmatpush.bf16.msra.mxu0 %v4075
        %4109 = vmatpush.bf16.msra.mxu0 %v4074
        %4110 = vmatpush.bf16.msra.mxu0 %v4073
        %4111 = vmatpush.bf16.msra.mxu0 %v4072
        %4112 = vmatmul.bf16.gmra.mxu0 %v3928
        %v4113 = vpop.f32.mrf.mxu0
        %v4114 = vadd.f32 0.0, %v4113
        %v4115 = vpop.f32.mrf.mxu0
        %v4116 = vadd.f32 0.0, %v4115
        %4117 = vmatmul.bf16.gmra.mxu0 %v3930
        %v4118 = vpop.f32.mrf.mxu0
        %v4119 = vadd.f32 0.0, %v4118
        %v4120 = vpop.f32.mrf.mxu0
        %v4121 = vadd.f32 0.0, %v4120
        %4122 = vmatmul.bf16.gmra.mxu0 %v3932
        %v4123 = vpop.f32.mrf.mxu0
        %v4124 = vadd.f32 0.0, %v4123
        %v4125 = vpop.f32.mrf.mxu0
        %v4126 = vadd.f32 0.0, %v4125
        %4127 = vmatmul.bf16.gmra.mxu0 %v3934
        %v4128 = vpop.f32.mrf.mxu0
        %v4129 = vadd.f32 0.0, %v4128
        %v4130 = vpop.f32.mrf.mxu0
        %v4131 = vadd.f32 0.0, %v4130
        %4132 = vmatmul.bf16.gmra.mxu0 %v3936
        %v4133 = vpop.f32.mrf.mxu0
        %v4134 = vadd.f32 0.0, %v4133
        %v4135 = vpop.f32.mrf.mxu0
        %v4136 = vadd.f32 0.0, %v4135
        %4137 = vmatmul.bf16.gmra.mxu0 %v3938
        %v4138 = vpop.f32.mrf.mxu0
        %v4139 = vadd.f32 0.0, %v4138
        %v4140 = vpop.f32.mrf.mxu0
        %v4141 = vadd.f32 0.0, %v4140
        %4142 = vmatmul.bf16.gmra.mxu0 %v3940
        %v4143 = vpop.f32.mrf.mxu0
        %v4144 = vadd.f32 0.0, %v4143
        %v4145 = vpop.f32.mrf.mxu0
        %v4146 = vadd.f32 0.0, %v4145
        %4147 = vmatmul.bf16.gmra.mxu0 %v3942
        %v4148 = vpop.f32.mrf.mxu0
        %v4149 = vadd.f32 0.0, %v4148
        %v4150 = vpop.f32.mrf.mxu0
        %v4151 = vadd.f32 0.0, %v4150
        %4152 = vdwg.mxu0
        %4153 = vmatpush.bf16.msra.mxu0 %v4087
        %4154 = vmatpush.bf16.msra.mxu0 %v4086
        %4155 = vmatpush.bf16.msra.mxu0 %v4085
        %4156 = vmatpush.bf16.msra.mxu0 %v4084
        %4157 = vmatpush.bf16.msra.mxu0 %v4083
        %4158 = vmatpush.bf16.msra.mxu0 %v4082
        %4159 = vmatpush.bf16.msra.mxu0 %v4081
        %4160 = vmatpush.bf16.msra.mxu0 %v4080
        %4161 = vmatmul.bf16.gmra.mxu0 %v3929
        %v4162 = vpop.f32.mrf.mxu0
        %v4163 = vadd.f32 %v4114, %v4162
        %v4164 = vpop.f32.mrf.mxu0
        %v4165 = vadd.f32 %v4116, %v4164
        %4166 = vmatmul.bf16.gmra.mxu0 %v3931
        %v4167 = vpop.f32.mrf.mxu0
        %v4168 = vadd.f32 %v4119, %v4167
        %v4169 = vpop.f32.mrf.mxu0
        %v4170 = vadd.f32 %v4121, %v4169
        %4171 = vmatmul.bf16.gmra.mxu0 %v3933
        %v4172 = vpop.f32.mrf.mxu0
        %v4173 = vadd.f32 %v4124, %v4172
        %v4174 = vpop.f32.mrf.mxu0
        %v4175 = vadd.f32 %v4126, %v4174
        %4176 = vmatmul.bf16.gmra.mxu0 %v3935
        %v4177 = vpop.f32.mrf.mxu0
        %v4178 = vadd.f32 %v4129, %v4177
        %v4179 = vpop.f32.mrf.mxu0
        %v4180 = vadd.f32 %v4131, %v4179
        %4181 = vmatmul.bf16.gmra.mxu0 %v3937
        %v4182 = vpop.f32.mrf.mxu0
        %v4183 = vadd.f32 %v4134, %v4182
        %v4184 = vpop.f32.mrf.mxu0
        %v4185 = vadd.f32 %v4136, %v4184
        %4186 = vmatmul.bf16.gmra.mxu0 %v3939
        %v4187 = vpop.f32.mrf.mxu0
        %v4188 = vadd.f32 %v4139, %v4187
        %v4189 = vpop.f32.mrf.mxu0
        %v4190 = vadd.f32 %v4141, %v4189
        %4191 = vmatmul.bf16.gmra.mxu0 %v3941
        %v4192 = vpop.f32.mrf.mxu0
        %v4193 = vadd.f32 %v4144, %v4192
        %v4194 = vpop.f32.mrf.mxu0
        %v4195 = vadd.f32 %v4146, %v4194
        %4196 = vmatmul.bf16.gmra.mxu0 %v3943
        %v4197 = vpop.f32.mrf.mxu0
        %v4198 = vadd.f32 %v4149, %v4197
        %v4199 = vpop.f32.mrf.mxu0
        %v4200 = vadd.f32 %v4151, %v4199
        %4201 = vdwg.mxu0
        %v4202 = vpack.c.bf16 %v4163, %v4163
        %v4203 = vpack.c.bf16 %v4165, %v4165
        %v4204 = vpack.c.bf16 %v4168, %v4168
        %v4205 = vpack.c.bf16 %v4170, %v4170
        %v4206 = vpack.c.bf16 %v4173, %v4173
        %v4207 = vpack.c.bf16 %v4175, %v4175
        %v4208 = vpack.c.bf16 %v4178, %v4178
        %v4209 = vpack.c.bf16 %v4180, %v4180
        %v4210 = vpack.c.bf16 %v4183, %v4183
        %v4211 = vpack.c.bf16 %v4185, %v4185
        %v4212 = vpack.c.bf16 %v4188, %v4188
        %v4213 = vpack.c.bf16 %v4190, %v4190
        %v4214 = vpack.c.bf16 %v4193, %v4193
        %v4215 = vpack.c.bf16 %v4195, %v4195
        %v4216 = vpack.c.bf16 %v4198, %v4198
        %v4217 = vpack.c.bf16 %v4200, %v4200
        %v4222 = vunpack.c.l.b16 %v4202
        %v4223 = vunpack.c.l.b16 %v4203
        %v4224 = vunpack.c.l.b16 %v4204
        %v4225 = vunpack.c.l.b16 %v4205
        %v4226 = vpack.c.b16 %v4223, %v4222
        %v4227 = vpack.c.b16 %v4225, %v4224
        %4230 = vmatpush.bf16.msra.mxu0 0
        %4231 = vmatpush.bf16.msra.mxu0 0
        %4232 = vmatpush.bf16.msra.mxu0 0
        %4233 = vmatpush.bf16.msra.mxu0 0
        %4234 = vmatpush.bf16.msra.mxu0 0
        %4235 = vmatpush.bf16.msra.mxu0 0
        %4236 = vmatpush.bf16.msra.mxu0 %v4227
        %4237 = vmatpush.bf16.msra.mxu0 %v4226
        %4238 = vmatmul.bf16.gmra.mxu0 %v1066
        %v4239 = vpop.f32.mrf.mxu0
        %v4240 = vadd.f32 0.0, %v4239
        %v4241 = vpop.f32.mrf.mxu0
        %v4242 = vadd.f32 0.0, %v4241
        %4243 = vmatmul.bf16.gmra.mxu0 %v1069
        %v4244 = vpop.f32.mrf.mxu0
        %v4245 = vadd.f32 0.0, %v4244
        %v4246 = vpop.f32.mrf.mxu0
        %v4247 = vadd.f32 0.0, %v4246
        %4248 = vdwg.mxu0
        %v4253 = vunpack.c.l.b16 %v4206
        %v4254 = vunpack.c.l.b16 %v4207
        %v4255 = vunpack.c.l.b16 %v4208
        %v4256 = vunpack.c.l.b16 %v4209
        %v4257 = vpack.c.b16 %v4254, %v4253
        %v4258 = vpack.c.b16 %v4256, %v4255
        %4261 = vmatpush.bf16.msra.mxu0 0
        %4262 = vmatpush.bf16.msra.mxu0 0
        %4263 = vmatpush.bf16.msra.mxu0 0
        %4264 = vmatpush.bf16.msra.mxu0 0
        %4265 = vmatpush.bf16.msra.mxu0 0
        %4266 = vmatpush.bf16.msra.mxu0 0
        %4267 = vmatpush.bf16.msra.mxu0 %v4258
        %4268 = vmatpush.bf16.msra.mxu0 %v4257
        %4269 = vmatmul.bf16.gmra.mxu0 %v1113
        %v4270 = vpop.f32.mrf.mxu0
        %v4271 = vadd.f32 0.0, %v4270
        %v4272 = vpop.f32.mrf.mxu0
        %v4273 = vadd.f32 0.0, %v4272
        %4274 = vmatmul.bf16.gmra.mxu0 %v1116
        %v4275 = vpop.f32.mrf.mxu0
        %v4276 = vadd.f32 0.0, %v4275
        %v4277 = vpop.f32.mrf.mxu0
        %v4278 = vadd.f32 0.0, %v4277
        %4279 = vdwg.mxu0
        %v4284 = vunpack.c.l.b16 %v4210
        %v4285 = vunpack.c.l.b16 %v4211
        %v4286 = vunpack.c.l.b16 %v4212
        %v4287 = vunpack.c.l.b16 %v4213
        %v4288 = vpack.c.b16 %v4285, %v4284
        %v4289 = vpack.c.b16 %v4287, %v4286
        %4292 = vmatpush.bf16.msra.mxu0 0
        %4293 = vmatpush.bf16.msra.mxu0 0
        %4294 = vmatpush.bf16.msra.mxu0 0
        %4295 = vmatpush.bf16.msra.mxu0 0
        %4296 = vmatpush.bf16.msra.mxu0 0
        %4297 = vmatpush.bf16.msra.mxu0 0
        %4298 = vmatpush.bf16.msra.mxu0 %v4289
        %4299 = vmatpush.bf16.msra.mxu0 %v4288
        %4300 = vmatmul.bf16.gmra.mxu0 %v1160
        %v4301 = vpop.f32.mrf.mxu0
        %v4302 = vadd.f32 0.0, %v4301
        %v4303 = vpop.f32.mrf.mxu0
        %v4304 = vadd.f32 0.0, %v4303
        %4305 = vmatmul.bf16.gmra.mxu0 %v1163
        %v4306 = vpop.f32.mrf.mxu0
        %v4307 = vadd.f32 0.0, %v4306
        %v4308 = vpop.f32.mrf.mxu0
        %v4309 = vadd.f32 0.0, %v4308
        %4310 = vdwg.mxu0
        %v4315 = vunpack.c.l.b16 %v4214
        %v4316 = vunpack.c.l.b16 %v4215
        %v4317 = vunpack.c.l.b16 %v4216
        %v4318 = vunpack.c.l.b16 %v4217
        %v4319 = vpack.c.b16 %v4316, %v4315
        %v4320 = vpack.c.b16 %v4318, %v4317
        %4323 = vmatpush.bf16.msra.mxu0 0
        %4324 = vmatpush.bf16.msra.mxu0 0
        %4325 = vmatpush.bf16.msra.mxu0 0
        %4326 = vmatpush.bf16.msra.mxu0 0
        %4327 = vmatpush.bf16.msra.mxu0 0
        %4328 = vmatpush.bf16.msra.mxu0 0
        %4329 = vmatpush.bf16.msra.mxu0 %v4320
        %4330 = vmatpush.bf16.msra.mxu0 %v4319
        %4331 = vmatmul.bf16.gmra.mxu0 %v1207
        %v4332 = vpop.f32.mrf.mxu0
        %v4333 = vadd.f32 0.0, %v4332
        %v4334 = vpop.f32.mrf.mxu0
        %v4335 = vadd.f32 0.0, %v4334
        %4336 = vmatmul.bf16.gmra.mxu0 %v1210
        %v4337 = vpop.f32.mrf.mxu0
        %v4338 = vadd.f32 0.0, %v4337
        %v4339 = vpop.f32.mrf.mxu0
        %v4340 = vadd.f32 0.0, %v4339
        %4341 = vdwg.mxu0
        %v4374 = vunpack.c.l.b16 %v3944
        %v4375 = vunpack.c.l.b16 %v3945
        %v4376 = vunpack.c.l.b16 %v3946
        %v4377 = vunpack.c.l.b16 %v3947
        %v4378 = vunpack.c.l.b16 %v3948
        %v4379 = vunpack.c.l.b16 %v3949
        %v4380 = vunpack.c.l.b16 %v3950
        %v4381 = vunpack.c.l.b16 %v3951
        %v4382 = vunpack.c.l.b16 %v3952
        %v4383 = vunpack.c.l.b16 %v3953
        %v4384 = vunpack.c.l.b16 %v3954
        %v4385 = vunpack.c.l.b16 %v3955
        %v4386 = vunpack.c.l.b16 %v3956
        %v4387 = vunpack.c.l.b16 %v3957
        %v4388 = vunpack.c.l.b16 %v3958
        %v4389 = vunpack.c.l.b16 %v3959
        %v4390 = vunpack.c.l.b16 %v3960
        %v4391 = vunpack.c.l.b16 %v3961
        %v4392 = vunpack.c.l.b16 %v3962
        %v4393 = vunpack.c.l.b16 %v3963
        %v4394 = vunpack.c.l.b16 %v3964
        %v4395 = vunpack.c.l.b16 %v3965
        %v4396 = vunpack.c.l.b16 %v3966
        %v4397 = vunpack.c.l.b16 %v3967
        %v4398 = vunpack.c.l.b16 %v3968
        %v4399 = vunpack.c.l.b16 %v3969
        %v4400 = vunpack.c.l.b16 %v3970
        %v4401 = vunpack.c.l.b16 %v3971
        %v4402 = vunpack.c.l.b16 %v3972
        %v4403 = vunpack.c.l.b16 %v3973
        %v4404 = vunpack.c.l.b16 %v3974
        %v4405 = vunpack.c.l.b16 %v3975
        %v4406 = vpack.c.b16 %v4375, %v4374
        %v4407 = vpack.c.b16 %v4377, %v4376
        %v4408 = vpack.c.b16 %v4379, %v4378
        %v4409 = vpack.c.b16 %v4381, %v4380
        %v4410 = vpack.c.b16 %v4383, %v4382
        %v4411 = vpack.c.b16 %v4385, %v4384
        %v4412 = vpack.c.b16 %v4387, %v4386
        %v4413 = vpack.c.b16 %v4389, %v4388
        %v4414 = vpack.c.b16 %v4391, %v4390
        %v4415 = vpack.c.b16 %v4393, %v4392
        %v4416 = vpack.c.b16 %v4395, %v4394
        %v4417 = vpack.c.b16 %v4397, %v4396
        %v4418 = vpack.c.b16 %v4399, %v4398
        %v4419 = vpack.c.b16 %v4401, %v4400
        %v4420 = vpack.c.b16 %v4403, %v4402
        %v4421 = vpack.c.b16 %v4405, %v4404
        %4438 = vmatpush.bf16.msra.mxu0 %v4413
        %4439 = vmatpush.bf16.msra.mxu0 %v4412
        %4440 = vmatpush.bf16.msra.mxu0 %v4411
        %4441 = vmatpush.bf16.msra.mxu0 %v4410
        %4442 = vmatpush.bf16.msra.mxu0 %v4409
        %4443 = vmatpush.bf16.msra.mxu0 %v4408
        %4444 = vmatpush.bf16.msra.mxu0 %v4407
        %4445 = vmatpush.bf16.msra.mxu0 %v4406
        %4446 = vmatmul.bf16.gmra.mxu0 %v3928
        %v4447 = vpop.f32.mrf.mxu0
        %v4448 = vadd.f32 %v4240, %v4447
        %v4449 = vpop.f32.mrf.mxu0
        %v4450 = vadd.f32 %v4242, %v4449
        %4451 = vmatmul.bf16.gmra.mxu0 %v3930
        %v4452 = vpop.f32.mrf.mxu0
        %v4453 = vadd.f32 %v4245, %v4452
        %v4454 = vpop.f32.mrf.mxu0
        %v4455 = vadd.f32 %v4247, %v4454
        %4456 = vmatmul.bf16.gmra.mxu0 %v3932
        %v4457 = vpop.f32.mrf.mxu0
        %v4458 = vadd.f32 %v4271, %v4457
        %v4459 = vpop.f32.mrf.mxu0
        %v4460 = vadd.f32 %v4273, %v4459
        %4461 = vmatmul.bf16.gmra.mxu0 %v3934
        %v4462 = vpop.f32.mrf.mxu0
        %v4463 = vadd.f32 %v4276, %v4462
        %v4464 = vpop.f32.mrf.mxu0
        %v4465 = vadd.f32 %v4278, %v4464
        %4466 = vmatmul.bf16.gmra.mxu0 %v3936
        %v4467 = vpop.f32.mrf.mxu0
        %v4468 = vadd.f32 %v4302, %v4467
        %v4469 = vpop.f32.mrf.mxu0
        %v4470 = vadd.f32 %v4304, %v4469
        %4471 = vmatmul.bf16.gmra.mxu0 %v3938
        %v4472 = vpop.f32.mrf.mxu0
        %v4473 = vadd.f32 %v4307, %v4472
        %v4474 = vpop.f32.mrf.mxu0
        %v4475 = vadd.f32 %v4309, %v4474
        %4476 = vmatmul.bf16.gmra.mxu0 %v3940
        %v4477 = vpop.f32.mrf.mxu0
        %v4478 = vadd.f32 %v4333, %v4477
        %v4479 = vpop.f32.mrf.mxu0
        %v4480 = vadd.f32 %v4335, %v4479
        %4481 = vmatmul.bf16.gmra.mxu0 %v3942
        %v4482 = vpop.f32.mrf.mxu0
        %v4483 = vadd.f32 %v4338, %v4482
        %v4484 = vpop.f32.mrf.mxu0
        %v4485 = vadd.f32 %v4340, %v4484
        %4486 = vdwg.mxu0
        %4487 = vmatpush.bf16.msra.mxu0 %v4421
        %4488 = vmatpush.bf16.msra.mxu0 %v4420
        %4489 = vmatpush.bf16.msra.mxu0 %v4419
        %4490 = vmatpush.bf16.msra.mxu0 %v4418
        %4491 = vmatpush.bf16.msra.mxu0 %v4417
        %4492 = vmatpush.bf16.msra.mxu0 %v4416
        %4493 = vmatpush.bf16.msra.mxu0 %v4415
        %4494 = vmatpush.bf16.msra.mxu0 %v4414
        %4495 = vmatmul.bf16.gmra.mxu0 %v3929
        %v4496 = vpop.f32.mrf.mxu0
        %v4497 = vadd.f32 %v4448, %v4496
        %v4498 = vpop.f32.mrf.mxu0
        %v4499 = vadd.f32 %v4450, %v4498
        %4500 = vmatmul.bf16.gmra.mxu0 %v3931
        %v4501 = vpop.f32.mrf.mxu0
        %v4502 = vadd.f32 %v4453, %v4501
        %v4503 = vpop.f32.mrf.mxu0
        %v4504 = vadd.f32 %v4455, %v4503
        %4505 = vmatmul.bf16.gmra.mxu0 %v3933
        %v4506 = vpop.f32.mrf.mxu0
        %v4507 = vadd.f32 %v4458, %v4506
        %v4508 = vpop.f32.mrf.mxu0
        %v4509 = vadd.f32 %v4460, %v4508
        %4510 = vmatmul.bf16.gmra.mxu0 %v3935
        %v4511 = vpop.f32.mrf.mxu0
        %v4512 = vadd.f32 %v4463, %v4511
        %v4513 = vpop.f32.mrf.mxu0
        %v4514 = vadd.f32 %v4465, %v4513
        %4515 = vmatmul.bf16.gmra.mxu0 %v3937
        %v4516 = vpop.f32.mrf.mxu0
        %v4517 = vadd.f32 %v4468, %v4516
        %v4518 = vpop.f32.mrf.mxu0
        %v4519 = vadd.f32 %v4470, %v4518
        %4520 = vmatmul.bf16.gmra.mxu0 %v3939
        %v4521 = vpop.f32.mrf.mxu0
        %v4522 = vadd.f32 %v4473, %v4521
        %v4523 = vpop.f32.mrf.mxu0
        %v4524 = vadd.f32 %v4475, %v4523
        %4525 = vmatmul.bf16.gmra.mxu0 %v3941
        %v4526 = vpop.f32.mrf.mxu0
        %v4527 = vadd.f32 %v4478, %v4526
        %v4528 = vpop.f32.mrf.mxu0
        %v4529 = vadd.f32 %v4480, %v4528
        %4530 = vmatmul.bf16.gmra.mxu0 %v3943
        %v4531 = vpop.f32.mrf.mxu0
        %v4532 = vadd.f32 %v4483, %v4531
        %v4533 = vpop.f32.mrf.mxu0
        %v4534 = vadd.f32 %v4485, %v4533
        %4535 = vdwg.mxu0
        %v4536 = vld [vmem:[%s13] sm:$0x1]
        %v4538 = vperm.slane %v4536, 0
        %v4540 = vadd.f32 %v4497, %v4538
        %v4541 = vadd.f32 %v4499, %v4538
        %v4542 = vadd.f32 %v4502, %v4538
        %v4543 = vadd.f32 %v4504, %v4538
        %v4544 = vadd.f32 %v4507, %v4538
        %v4545 = vadd.f32 %v4509, %v4538
        %v4546 = vadd.f32 %v4512, %v4538
        %v4547 = vadd.f32 %v4514, %v4538
        %v4548 = vadd.f32 %v4517, %v4538
        %v4549 = vadd.f32 %v4519, %v4538
        %v4550 = vadd.f32 %v4522, %v4538
        %v4551 = vadd.f32 %v4524, %v4538
        %v4552 = vadd.f32 %v4527, %v4538
        %v4553 = vadd.f32 %v4529, %v4538
        %v4554 = vadd.f32 %v4532, %v4538
        %v4555 = vadd.f32 %v4534, %v4538
        %v4556 = vmax.f32 %v4540, 0.0
        %v4557 = vmax.f32 %v4541, 0.0
        %v4558 = vmax.f32 %v4542, 0.0
        %v4559 = vmax.f32 %v4543, 0.0
        %v4560 = vmax.f32 %v4544, 0.0
        %v4561 = vmax.f32 %v4545, 0.0
        %v4562 = vmax.f32 %v4546, 0.0
        %v4563 = vmax.f32 %v4547, 0.0
        %v4564 = vmax.f32 %v4548, 0.0
        %v4565 = vmax.f32 %v4549, 0.0
        %v4566 = vmax.f32 %v4550, 0.0
        %v4567 = vmax.f32 %v4551, 0.0
        %v4568 = vmax.f32 %v4552, 0.0
        %v4569 = vmax.f32 %v4553, 0.0
        %v4570 = vmax.f32 %v4554, 0.0
        %v4571 = vmax.f32 %v4555, 0.0
        %v4572 = vpack.c.bf16 %v4556, %v4556
        %v4573 = vpack.c.bf16 %v4557, %v4557
        %v4574 = vpack.c.bf16 %v4558, %v4558
        %v4575 = vpack.c.bf16 %v4559, %v4559
        %v4576 = vpack.c.bf16 %v4560, %v4560
        %v4577 = vpack.c.bf16 %v4561, %v4561
        %v4578 = vpack.c.bf16 %v4562, %v4562
        %v4579 = vpack.c.bf16 %v4563, %v4563
        %v4580 = vpack.c.bf16 %v4564, %v4564
        %v4581 = vpack.c.bf16 %v4565, %v4565
        %v4582 = vpack.c.bf16 %v4566, %v4566
        %v4583 = vpack.c.bf16 %v4567, %v4567
        %v4584 = vpack.c.bf16 %v4568, %v4568
        %v4585 = vpack.c.bf16 %v4569, %v4569
        %v4586 = vpack.c.bf16 %v4570, %v4570
        %v4587 = vpack.c.bf16 %v4571, %v4571
        %v4588 = vld [vmem:[%s14] sm:$0xf]
        %v4589 = vld [vmem:[%s14 + $0x4] sm:$0xf]
        %v4590 = vld [vmem:[%s14 + $0x8] sm:$0xf]
        %v4591 = vld [vmem:[%s14 + $0xc] sm:$0xf]
        %v4592 = vld [vmem:[%s14 + $0x10] sm:$0xf]
        %v4593 = vld [vmem:[%s14 + $0x14] sm:$0xf]
        %v4594 = vld [vmem:[%s14 + $0x18] sm:$0xf]
        %v4595 = vld [vmem:[%s14 + $0x1c] sm:$0xf]
        %v4596 = vld [vmem:[%s14 + $0x20] sm:$0xf]
        %v4597 = vld [vmem:[%s14 + $0x24] sm:$0xf]
        %v4598 = vld [vmem:[%s14 + $0x28] sm:$0xf]
        %v4599 = vld [vmem:[%s14 + $0x2c] sm:$0xf]
        %v4600 = vld [vmem:[%s14 + $0x30] sm:$0xf]
        %v4601 = vld [vmem:[%s14 + $0x34] sm:$0xf]
        %v4602 = vld [vmem:[%s14 + $0x38] sm:$0xf]
        %v4603 = vld [vmem:[%s14 + $0x3c] sm:$0xf]
        %v4604 = vld [vmem:[#allocation16] sm:$0xf]
        %v4605 = vld [vmem:[#allocation16 + $0x4] sm:$0xf]
        %v4606 = vld [vmem:[#allocation16 + $0x8] sm:$0xf]
        %v4607 = vld [vmem:[#allocation16 + $0xc] sm:$0xf]
        %v4608 = vld [vmem:[#allocation16 + $0x10] sm:$0xf]
        %v4609 = vld [vmem:[#allocation16 + $0x14] sm:$0xf]
        %v4610 = vld [vmem:[#allocation16 + $0x18] sm:$0xf]
        %v4611 = vld [vmem:[#allocation16 + $0x1c] sm:$0xf]
        %v4612 = vld [vmem:[#allocation16 + $0x20] sm:$0xf]
        %v4613 = vld [vmem:[#allocation16 + $0x24] sm:$0xf]
        %v4614 = vld [vmem:[#allocation16 + $0x28] sm:$0xf]
        %v4615 = vld [vmem:[#allocation16 + $0x2c] sm:$0xf]
        %v4616 = vld [vmem:[#allocation16 + $0x30] sm:$0xf]
        %v4617 = vld [vmem:[#allocation16 + $0x34] sm:$0xf]
        %v4618 = vld [vmem:[#allocation16 + $0x38] sm:$0xf]
        %v4619 = vld [vmem:[#allocation16 + $0x3c] sm:$0xf]
        %v4624 = vunpack.c.l.b16 %v4572
        %v4625 = vunpack.c.l.b16 %v4573
        %v4626 = vunpack.c.l.b16 %v4574
        %v4627 = vunpack.c.l.b16 %v4575
        %v4628 = vpack.c.b16 %v4625, %v4624
        %v4629 = vpack.c.b16 %v4627, %v4626
        %4632 = vmatpush.bf16.msra.mxu0 0
        %4633 = vmatpush.bf16.msra.mxu0 0
        %4634 = vmatpush.bf16.msra.mxu0 0
        %4635 = vmatpush.bf16.msra.mxu0 0
        %4636 = vmatpush.bf16.msra.mxu0 0
        %4637 = vmatpush.bf16.msra.mxu0 0
        %4638 = vmatpush.bf16.msra.mxu0 %v4629
        %4639 = vmatpush.bf16.msra.mxu0 %v4628
        %4640 = vmatmul.bf16.gmra.mxu0 %v1066
        %v4641 = vpop.f32.mrf.mxu0
        %v4642 = vadd.f32 0.0, %v4641
        %v4643 = vpop.f32.mrf.mxu0
        %v4644 = vadd.f32 0.0, %v4643
        %4645 = vmatmul.bf16.gmra.mxu0 %v1069
        %v4646 = vpop.f32.mrf.mxu0
        %v4647 = vadd.f32 0.0, %v4646
        %v4648 = vpop.f32.mrf.mxu0
        %v4649 = vadd.f32 0.0, %v4648
        %4650 = vdwg.mxu0
        %v4655 = vunpack.c.l.b16 %v4576
        %v4656 = vunpack.c.l.b16 %v4577
        %v4657 = vunpack.c.l.b16 %v4578
        %v4658 = vunpack.c.l.b16 %v4579
        %v4659 = vpack.c.b16 %v4656, %v4655
        %v4660 = vpack.c.b16 %v4658, %v4657
        %4663 = vmatpush.bf16.msra.mxu0 0
        %4664 = vmatpush.bf16.msra.mxu0 0
        %4665 = vmatpush.bf16.msra.mxu0 0
        %4666 = vmatpush.bf16.msra.mxu0 0
        %4667 = vmatpush.bf16.msra.mxu0 0
        %4668 = vmatpush.bf16.msra.mxu0 0
        %4669 = vmatpush.bf16.msra.mxu0 %v4660
        %4670 = vmatpush.bf16.msra.mxu0 %v4659
        %4671 = vmatmul.bf16.gmra.mxu0 %v1113
        %v4672 = vpop.f32.mrf.mxu0
        %v4673 = vadd.f32 0.0, %v4672
        %v4674 = vpop.f32.mrf.mxu0
        %v4675 = vadd.f32 0.0, %v4674
        %4676 = vmatmul.bf16.gmra.mxu0 %v1116
        %v4677 = vpop.f32.mrf.mxu0
        %v4678 = vadd.f32 0.0, %v4677
        %v4679 = vpop.f32.mrf.mxu0
        %v4680 = vadd.f32 0.0, %v4679
        %4681 = vdwg.mxu0
        %v4686 = vunpack.c.l.b16 %v4580
        %v4687 = vunpack.c.l.b16 %v4581
        %v4688 = vunpack.c.l.b16 %v4582
        %v4689 = vunpack.c.l.b16 %v4583
        %v4690 = vpack.c.b16 %v4687, %v4686
        %v4691 = vpack.c.b16 %v4689, %v4688
        %4694 = vmatpush.bf16.msra.mxu0 0
        %4695 = vmatpush.bf16.msra.mxu0 0
        %4696 = vmatpush.bf16.msra.mxu0 0
        %4697 = vmatpush.bf16.msra.mxu0 0
        %4698 = vmatpush.bf16.msra.mxu0 0
        %4699 = vmatpush.bf16.msra.mxu0 0
        %4700 = vmatpush.bf16.msra.mxu0 %v4691
        %4701 = vmatpush.bf16.msra.mxu0 %v4690
        %4702 = vmatmul.bf16.gmra.mxu0 %v1160
        %v4703 = vpop.f32.mrf.mxu0
        %v4704 = vadd.f32 0.0, %v4703
        %v4705 = vpop.f32.mrf.mxu0
        %v4706 = vadd.f32 0.0, %v4705
        %4707 = vmatmul.bf16.gmra.mxu0 %v1163
        %v4708 = vpop.f32.mrf.mxu0
        %v4709 = vadd.f32 0.0, %v4708
        %v4710 = vpop.f32.mrf.mxu0
        %v4711 = vadd.f32 0.0, %v4710
        %4712 = vdwg.mxu0
        %v4717 = vunpack.c.l.b16 %v4584
        %v4718 = vunpack.c.l.b16 %v4585
        %v4719 = vunpack.c.l.b16 %v4586
        %v4720 = vunpack.c.l.b16 %v4587
        %v4721 = vpack.c.b16 %v4718, %v4717
        %v4722 = vpack.c.b16 %v4720, %v4719
        %4725 = vmatpush.bf16.msra.mxu0 0
        %4726 = vmatpush.bf16.msra.mxu0 0
        %4727 = vmatpush.bf16.msra.mxu0 0
        %4728 = vmatpush.bf16.msra.mxu0 0
        %4729 = vmatpush.bf16.msra.mxu0 0
        %4730 = vmatpush.bf16.msra.mxu0 0
        %4731 = vmatpush.bf16.msra.mxu0 %v4722
        %4732 = vmatpush.bf16.msra.mxu0 %v4721
        %4733 = vmatmul.bf16.gmra.mxu0 %v1207
        %v4734 = vpop.f32.mrf.mxu0
        %v4735 = vadd.f32 0.0, %v4734
        %v4736 = vpop.f32.mrf.mxu0
        %v4737 = vadd.f32 0.0, %v4736
        %4738 = vmatmul.bf16.gmra.mxu0 %v1210
        %v4739 = vpop.f32.mrf.mxu0
        %v4740 = vadd.f32 0.0, %v4739
        %v4741 = vpop.f32.mrf.mxu0
        %v4742 = vadd.f32 0.0, %v4741
        %4743 = vdwg.mxu0
        %v4744 = vpack.c.bf16 %v4642, %v4642
        %v4745 = vpack.c.bf16 %v4644, %v4644
        %v4746 = vpack.c.bf16 %v4647, %v4647
        %v4747 = vpack.c.bf16 %v4649, %v4649
        %v4748 = vpack.c.bf16 %v4673, %v4673
        %v4749 = vpack.c.bf16 %v4675, %v4675
        %v4750 = vpack.c.bf16 %v4678, %v4678
        %v4751 = vpack.c.bf16 %v4680, %v4680
        %v4752 = vpack.c.bf16 %v4704, %v4704
        %v4753 = vpack.c.bf16 %v4706, %v4706
        %v4754 = vpack.c.bf16 %v4709, %v4709
        %v4755 = vpack.c.bf16 %v4711, %v4711
        %v4756 = vpack.c.bf16 %v4735, %v4735
        %v4757 = vpack.c.bf16 %v4737, %v4737
        %v4758 = vpack.c.bf16 %v4740, %v4740
        %v4759 = vpack.c.bf16 %v4742, %v4742
        %v4776 = vunpack.c.l.b16 %v4744
        %v4777 = vunpack.c.l.b16 %v4745
        %v4778 = vunpack.c.l.b16 %v4746
        %v4779 = vunpack.c.l.b16 %v4747
        %v4780 = vunpack.c.l.b16 %v4748
        %v4781 = vunpack.c.l.b16 %v4749
        %v4782 = vunpack.c.l.b16 %v4750
        %v4783 = vunpack.c.l.b16 %v4751
        %v4784 = vunpack.c.l.b16 %v4752
        %v4785 = vunpack.c.l.b16 %v4753
        %v4786 = vunpack.c.l.b16 %v4754
        %v4787 = vunpack.c.l.b16 %v4755
        %v4788 = vunpack.c.l.b16 %v4756
        %v4789 = vunpack.c.l.b16 %v4757
        %v4790 = vunpack.c.l.b16 %v4758
        %v4791 = vunpack.c.l.b16 %v4759
        %v4792 = vpack.c.b16 %v4777, %v4776
        %v4793 = vpack.c.b16 %v4779, %v4778
        %v4794 = vpack.c.b16 %v4781, %v4780
        %v4795 = vpack.c.b16 %v4783, %v4782
        %v4796 = vpack.c.b16 %v4785, %v4784
        %v4797 = vpack.c.b16 %v4787, %v4786
        %v4798 = vpack.c.b16 %v4789, %v4788
        %v4799 = vpack.c.b16 %v4791, %v4790
        %v4824 = vunpack.c.l.b16 %v4604
        %v4825 = vunpack.c.l.b16 %v4605
        %v4826 = vunpack.c.l.b16 %v4606
        %v4827 = vunpack.c.l.b16 %v4607
        %v4828 = vunpack.c.l.b16 %v4608
        %v4829 = vunpack.c.l.b16 %v4609
        %v4830 = vunpack.c.l.b16 %v4610
        %v4831 = vunpack.c.l.b16 %v4611
        %v4832 = vunpack.c.l.b16 %v4612
        %v4833 = vunpack.c.l.b16 %v4613
        %v4834 = vunpack.c.l.b16 %v4614
        %v4835 = vunpack.c.l.b16 %v4615
        %v4836 = vunpack.c.l.b16 %v4616
        %v4837 = vunpack.c.l.b16 %v4617
        %v4838 = vunpack.c.l.b16 %v4618
        %v4839 = vunpack.c.l.b16 %v4619
        %v4840 = vpack.c.b16 %v4825, %v4824
        %v4841 = vpack.c.b16 %v4827, %v4826
        %v4842 = vpack.c.b16 %v4829, %v4828
        %v4843 = vpack.c.b16 %v4831, %v4830
        %v4844 = vpack.c.b16 %v4833, %v4832
        %v4845 = vpack.c.b16 %v4835, %v4834
        %v4846 = vpack.c.b16 %v4837, %v4836
        %v4847 = vpack.c.b16 %v4839, %v4838
        %4856 = vmatpush.bf16.msra.mxu0 %v4847
        %4857 = vmatpush.bf16.msra.mxu0 %v4846
        %4858 = vmatpush.bf16.msra.mxu0 %v4845
        %4859 = vmatpush.bf16.msra.mxu0 %v4844
        %4860 = vmatpush.bf16.msra.mxu0 %v4843
        %4861 = vmatpush.bf16.msra.mxu0 %v4842
        %4862 = vmatpush.bf16.msra.mxu0 %v4841
        %4863 = vmatpush.bf16.msra.mxu0 %v4840
        %4864 = vmatmul.bf16.gmra.mxu0 %v4792
        %v4865 = vpop.f32.mrf.mxu0
        %v4866 = vadd.f32 0.0, %v4865
        %v4867 = vpop.f32.mrf.mxu0
        %v4868 = vadd.f32 0.0, %v4867
        %4869 = vmatmul.bf16.gmra.mxu0 %v4793
        %v4870 = vpop.f32.mrf.mxu0
        %v4871 = vadd.f32 0.0, %v4870
        %v4872 = vpop.f32.mrf.mxu0
        %v4873 = vadd.f32 0.0, %v4872
        %4874 = vmatmul.bf16.gmra.mxu0 %v4794
        %v4875 = vpop.f32.mrf.mxu0
        %v4876 = vadd.f32 0.0, %v4875
        %v4877 = vpop.f32.mrf.mxu0
        %v4878 = vadd.f32 0.0, %v4877
        %4879 = vmatmul.bf16.gmra.mxu0 %v4795
        %v4880 = vpop.f32.mrf.mxu0
        %v4881 = vadd.f32 0.0, %v4880
        %v4882 = vpop.f32.mrf.mxu0
        %v4883 = vadd.f32 0.0, %v4882
        %4884 = vmatmul.bf16.gmra.mxu0 %v4796
        %v4885 = vpop.f32.mrf.mxu0
        %v4886 = vadd.f32 0.0, %v4885
        %v4887 = vpop.f32.mrf.mxu0
        %v4888 = vadd.f32 0.0, %v4887
        %4889 = vmatmul.bf16.gmra.mxu0 %v4797
        %v4890 = vpop.f32.mrf.mxu0
        %v4891 = vadd.f32 0.0, %v4890
        %v4892 = vpop.f32.mrf.mxu0
        %v4893 = vadd.f32 0.0, %v4892
        %4894 = vmatmul.bf16.gmra.mxu0 %v4798
        %v4895 = vpop.f32.mrf.mxu0
        %v4896 = vadd.f32 0.0, %v4895
        %v4897 = vpop.f32.mrf.mxu0
        %v4898 = vadd.f32 0.0, %v4897
        %4899 = vmatmul.bf16.gmra.mxu0 %v4799
        %v4900 = vpop.f32.mrf.mxu0
        %v4901 = vadd.f32 0.0, %v4900
        %v4902 = vpop.f32.mrf.mxu0
        %v4903 = vadd.f32 0.0, %v4902
        %4904 = vdwg.mxu0
        %v4921 = vunpack.c.l.b16 %v4588
        %v4922 = vunpack.c.l.b16 %v4589
        %v4923 = vunpack.c.l.b16 %v4590
        %v4924 = vunpack.c.l.b16 %v4591
        %v4925 = vunpack.c.l.b16 %v4592
        %v4926 = vunpack.c.l.b16 %v4593
        %v4927 = vunpack.c.l.b16 %v4594
        %v4928 = vunpack.c.l.b16 %v4595
        %v4929 = vunpack.c.l.b16 %v4596
        %v4930 = vunpack.c.l.b16 %v4597
        %v4931 = vunpack.c.l.b16 %v4598
        %v4932 = vunpack.c.l.b16 %v4599
        %v4933 = vunpack.c.l.b16 %v4600
        %v4934 = vunpack.c.l.b16 %v4601
        %v4935 = vunpack.c.l.b16 %v4602
        %v4936 = vunpack.c.l.b16 %v4603
        %v4937 = vpack.c.b16 %v4922, %v4921
        %v4938 = vpack.c.b16 %v4924, %v4923
        %v4939 = vpack.c.b16 %v4926, %v4925
        %v4940 = vpack.c.b16 %v4928, %v4927
        %v4941 = vpack.c.b16 %v4930, %v4929
        %v4942 = vpack.c.b16 %v4932, %v4931
        %v4943 = vpack.c.b16 %v4934, %v4933
        %v4944 = vpack.c.b16 %v4936, %v4935
        %4953 = vmatpush.bf16.msra.mxu0 %v4944
        %4954 = vmatpush.bf16.msra.mxu0 %v4943
        %4955 = vmatpush.bf16.msra.mxu0 %v4942
        %4956 = vmatpush.bf16.msra.mxu0 %v4941
        %4957 = vmatpush.bf16.msra.mxu0 %v4940
        %4958 = vmatpush.bf16.msra.mxu0 %v4939
        %4959 = vmatpush.bf16.msra.mxu0 %v4938
        %4960 = vmatpush.bf16.msra.mxu0 %v4937
        %4961 = vmatmul.bf16.gmra.mxu0 %v4628
        %v4962 = vpop.f32.mrf.mxu0
        %v4963 = vadd.f32 %v4866, %v4962
        %v4964 = vpop.f32.mrf.mxu0
        %v4965 = vadd.f32 %v4868, %v4964
        %4966 = vmatmul.bf16.gmra.mxu0 %v4629
        %v4967 = vpop.f32.mrf.mxu0
        %v4968 = vadd.f32 %v4871, %v4967
        %v4969 = vpop.f32.mrf.mxu0
        %v4970 = vadd.f32 %v4873, %v4969
        %4971 = vmatmul.bf16.gmra.mxu0 %v4659
        %v4972 = vpop.f32.mrf.mxu0
        %v4973 = vadd.f32 %v4876, %v4972
        %v4974 = vpop.f32.mrf.mxu0
        %v4975 = vadd.f32 %v4878, %v4974
        %4976 = vmatmul.bf16.gmra.mxu0 %v4660
        %v4977 = vpop.f32.mrf.mxu0
        %v4978 = vadd.f32 %v4881, %v4977
        %v4979 = vpop.f32.mrf.mxu0
        %v4980 = vadd.f32 %v4883, %v4979
        %4981 = vmatmul.bf16.gmra.mxu0 %v4690
        %v4982 = vpop.f32.mrf.mxu0
        %v4983 = vadd.f32 %v4886, %v4982
        %v4984 = vpop.f32.mrf.mxu0
        %v4985 = vadd.f32 %v4888, %v4984
        %4986 = vmatmul.bf16.gmra.mxu0 %v4691
        %v4987 = vpop.f32.mrf.mxu0
        %v4988 = vadd.f32 %v4891, %v4987
        %v4989 = vpop.f32.mrf.mxu0
        %v4990 = vadd.f32 %v4893, %v4989
        %4991 = vmatmul.bf16.gmra.mxu0 %v4721
        %v4992 = vpop.f32.mrf.mxu0
        %v4993 = vadd.f32 %v4896, %v4992
        %v4994 = vpop.f32.mrf.mxu0
        %v4995 = vadd.f32 %v4898, %v4994
        %4996 = vmatmul.bf16.gmra.mxu0 %v4722
        %v4997 = vpop.f32.mrf.mxu0
        %v4998 = vadd.f32 %v4901, %v4997
        %v4999 = vpop.f32.mrf.mxu0
        %v5000 = vadd.f32 %v4903, %v4999
        %5001 = vdwg.mxu0
        %v5002 = vld [vmem:[%s16] sm:$0x1]
        %v5004 = vperm.slane %v5002, 0
        %v5006 = vadd.f32 %v4963, %v5004
        %v5007 = vadd.f32 %v4965, %v5004
        %v5008 = vadd.f32 %v4968, %v5004
        %v5009 = vadd.f32 %v4970, %v5004
        %v5010 = vadd.f32 %v4973, %v5004
        %v5011 = vadd.f32 %v4975, %v5004
        %v5012 = vadd.f32 %v4978, %v5004
        %v5013 = vadd.f32 %v4980, %v5004
        %v5014 = vadd.f32 %v4983, %v5004
        %v5015 = vadd.f32 %v4985, %v5004
        %v5016 = vadd.f32 %v4988, %v5004
        %v5017 = vadd.f32 %v4990, %v5004
        %v5018 = vadd.f32 %v4993, %v5004
        %v5019 = vadd.f32 %v4995, %v5004
        %v5020 = vadd.f32 %v4998, %v5004
        %v5021 = vadd.f32 %v5000, %v5004
        %v5022 = vmax.f32 %v5006, 0.0
        %v5023 = vmax.f32 %v5007, 0.0
        %v5024 = vmax.f32 %v5008, 0.0
        %v5025 = vmax.f32 %v5009, 0.0
        %v5026 = vmax.f32 %v5010, 0.0
        %v5027 = vmax.f32 %v5011, 0.0
        %v5028 = vmax.f32 %v5012, 0.0
        %v5029 = vmax.f32 %v5013, 0.0
        %v5030 = vmax.f32 %v5014, 0.0
        %v5031 = vmax.f32 %v5015, 0.0
        %v5032 = vmax.f32 %v5016, 0.0
        %v5033 = vmax.f32 %v5017, 0.0
        %v5034 = vmax.f32 %v5018, 0.0
        %v5035 = vmax.f32 %v5019, 0.0
        %v5036 = vmax.f32 %v5020, 0.0
        %v5037 = vmax.f32 %v5021, 0.0
        %v5038 = vpack.c.bf16 %v5022, %v5022
        %v5039 = vpack.c.bf16 %v5023, %v5023
        %v5040 = vpack.c.bf16 %v5024, %v5024
        %v5041 = vpack.c.bf16 %v5025, %v5025
        %v5042 = vpack.c.bf16 %v5026, %v5026
        %v5043 = vpack.c.bf16 %v5027, %v5027
        %v5044 = vpack.c.bf16 %v5028, %v5028
        %v5045 = vpack.c.bf16 %v5029, %v5029
        %v5046 = vpack.c.bf16 %v5030, %v5030
        %v5047 = vpack.c.bf16 %v5031, %v5031
        %v5048 = vpack.c.bf16 %v5032, %v5032
        %v5049 = vpack.c.bf16 %v5033, %v5033
        %v5050 = vpack.c.bf16 %v5034, %v5034
        %v5051 = vpack.c.bf16 %v5035, %v5035
        %v5052 = vpack.c.bf16 %v5036, %v5036
        %v5053 = vpack.c.bf16 %v5037, %v5037
        %v5054 = vlaneseq
        %v5055 = vand.u32 %v5054, 127
        %v5056 = vld [vmem:[%s918] sm:$0xff]
        %v5057 = vld [vmem:[%s918 + $0x8] sm:$0xff]
        %v5058 = vld [vmem:[%s918 + $0x10] sm:$0xff]
        %v5059 = vld [vmem:[%s918 + $0x18] sm:$0xff]
        %5060 = vset.pattern.permute.xlu0 0
        %5061 = vperm.xlu0 %5060, %v5056
        %v5062 = vpop.permute.xlu0 %5061
        %5063 = vset.pattern.permute.xlu0 0
        %5064 = vperm.xlu0 %5063, %v5057
        %v5065 = vpop.permute.xlu0 %5064
        %5066 = vset.pattern.permute.xlu0 0
        %5067 = vperm.xlu0 %5066, %v5058
        %v5068 = vpop.permute.xlu0 %5067
        %5069 = vset.pattern.permute.xlu0 0
        %5070 = vperm.xlu0 %5069, %v5059
        %v5071 = vpop.permute.xlu0 %5070
        %vm5072 = vcmp.eq.s32.totalorder %v5055, %v5062
        %vm5073 = vcmp.eq.s32.totalorder %v5055, %v5065
        %vm5074 = vcmp.eq.s32.totalorder %v5055, %v5068
        %vm5075 = vcmp.eq.s32.totalorder %v5055, %v5071
        %v5076 = vsel %vm5072, 1, 0
        %v5077 = vsel %vm5073, 1, 0
        %v5078 = vsel %vm5074, 1, 0
        %v5079 = vsel %vm5075, 1, 0
        %v5080 = vcvt.s32.f32 %v5076
        %v5081 = vcvt.s32.f32 %v5077
        %v5082 = vcvt.s32.f32 %v5078
        %v5083 = vcvt.s32.f32 %v5079
        %v5084 = vpack.c.bf16 %v5080, %v5080
        %v5085 = vpack.c.bf16 %v5081, %v5081
        %v5086 = vpack.c.bf16 %v5082, %v5082
        %v5087 = vpack.c.bf16 %v5083, %v5083
        %v5092 = vunpack.c.l.b16 %v5038
        %v5093 = vunpack.c.l.b16 %v5039
        %v5094 = vunpack.c.l.b16 %v5040
        %v5095 = vunpack.c.l.b16 %v5041
        %v5096 = vpack.c.b16 %v5093, %v5092
        %v5097 = vpack.c.b16 %v5095, %v5094
        %v5101 = vsel %vm1064, %v5084, 0
        %5103 = vmatpush.bf16.msra.mxu0 0
        %5104 = vmatpush.bf16.msra.mxu0 0
        %5105 = vmatpush.bf16.msra.mxu0 0
        %5106 = vmatpush.bf16.msra.mxu0 0
        %5107 = vmatpush.bf16.msra.mxu0 0
        %5108 = vmatpush.bf16.msra.mxu0 0
        %5109 = vmatpush.bf16.msra.mxu0 %v5097
        %5110 = vmatpush.bf16.msra.mxu0 %v5096
        %5111 = vmatmul.bf16.gmra.mxu0 %v5101
        %v5112 = vpop.f32.mrf.mxu0
        %v5113 = vadd.f32 0.0, %v5112
        %v5114 = vpop.f32.mrf.mxu0
        %5115 = vdwg.mxu0
        %v5120 = vunpack.c.l.b16 %v5042
        %v5121 = vunpack.c.l.b16 %v5043
        %v5122 = vunpack.c.l.b16 %v5044
        %v5123 = vunpack.c.l.b16 %v5045
        %v5124 = vpack.c.b16 %v5121, %v5120
        %v5125 = vpack.c.b16 %v5123, %v5122
        %v5129 = vsel %vm1064, %v5085, 0
        %5131 = vmatpush.bf16.msra.mxu0 0
        %5132 = vmatpush.bf16.msra.mxu0 0
        %5133 = vmatpush.bf16.msra.mxu0 0
        %5134 = vmatpush.bf16.msra.mxu0 0
        %5135 = vmatpush.bf16.msra.mxu0 0
        %5136 = vmatpush.bf16.msra.mxu0 0
        %5137 = vmatpush.bf16.msra.mxu0 %v5125
        %5138 = vmatpush.bf16.msra.mxu0 %v5124
        %5139 = vmatmul.bf16.gmra.mxu0 %v5129
        %v5140 = vpop.f32.mrf.mxu0
        %v5141 = vadd.f32 0.0, %v5140
        %v5142 = vpop.f32.mrf.mxu0
        %5143 = vdwg.mxu0
        %v5148 = vunpack.c.l.b16 %v5046
        %v5149 = vunpack.c.l.b16 %v5047
        %v5150 = vunpack.c.l.b16 %v5048
        %v5151 = vunpack.c.l.b16 %v5049
        %v5152 = vpack.c.b16 %v5149, %v5148
        %v5153 = vpack.c.b16 %v5151, %v5150
        %v5157 = vsel %vm1064, %v5086, 0
        %5159 = vmatpush.bf16.msra.mxu0 0
        %5160 = vmatpush.bf16.msra.mxu0 0
        %5161 = vmatpush.bf16.msra.mxu0 0
        %5162 = vmatpush.bf16.msra.mxu0 0
        %5163 = vmatpush.bf16.msra.mxu0 0
        %5164 = vmatpush.bf16.msra.mxu0 0
        %5165 = vmatpush.bf16.msra.mxu0 %v5153
        %5166 = vmatpush.bf16.msra.mxu0 %v5152
        %5167 = vmatmul.bf16.gmra.mxu0 %v5157
        %v5168 = vpop.f32.mrf.mxu0
        %v5169 = vadd.f32 0.0, %v5168
        %v5170 = vpop.f32.mrf.mxu0
        %5171 = vdwg.mxu0
        %v5176 = vunpack.c.l.b16 %v5050
        %v5177 = vunpack.c.l.b16 %v5051
        %v5178 = vunpack.c.l.b16 %v5052
        %v5179 = vunpack.c.l.b16 %v5053
        %v5180 = vpack.c.b16 %v5177, %v5176
        %v5181 = vpack.c.b16 %v5179, %v5178
        %v5185 = vsel %vm1064, %v5087, 0
        %5187 = vmatpush.bf16.msra.mxu0 0
        %5188 = vmatpush.bf16.msra.mxu0 0
        %5189 = vmatpush.bf16.msra.mxu0 0
        %5190 = vmatpush.bf16.msra.mxu0 0
        %5191 = vmatpush.bf16.msra.mxu0 0
        %5192 = vmatpush.bf16.msra.mxu0 0
        %5193 = vmatpush.bf16.msra.mxu0 %v5181
        %5194 = vmatpush.bf16.msra.mxu0 %v5180
        %5195 = vmatmul.bf16.gmra.mxu0 %v5185
        %v5196 = vpop.f32.mrf.mxu0
        %v5197 = vadd.f32 0.0, %v5196
        %v5198 = vpop.f32.mrf.mxu0
        %5199 = vdwg.mxu0
        %v5200 = vpack.c.bf16 %v5113, %v5113
        %v5201 = vpack.c.bf16 %v5141, %v5141
        %v5202 = vpack.c.bf16 %v5169, %v5169
        %v5203 = vpack.c.bf16 %v5197, %v5197
        %v5204 = vld [vmem:[#allocation17] sm:$0xf]
        %v5205 = vld [vmem:[#allocation17 + $0x4] sm:$0xf]
        %v5206 = vld [vmem:[#allocation17 + $0x8] sm:$0xf]
        %v5207 = vld [vmem:[#allocation17 + $0xc] sm:$0xf]
        %v5208 = vld [vmem:[#allocation17 + $0x10] sm:$0xf]
        %v5209 = vld [vmem:[#allocation17 + $0x14] sm:$0xf]
        %v5210 = vld [vmem:[#allocation17 + $0x18] sm:$0xf]
        %v5211 = vld [vmem:[#allocation17 + $0x1c] sm:$0xf]
        %v5212 = vld [vmem:[#allocation17 + $0x20] sm:$0xf]
        %v5213 = vld [vmem:[#allocation17 + $0x24] sm:$0xf]
        %v5214 = vld [vmem:[#allocation17 + $0x28] sm:$0xf]
        %v5215 = vld [vmem:[#allocation17 + $0x2c] sm:$0xf]
        %v5216 = vld [vmem:[#allocation17 + $0x30] sm:$0xf]
        %v5217 = vld [vmem:[#allocation17 + $0x34] sm:$0xf]
        %v5218 = vld [vmem:[#allocation17 + $0x38] sm:$0xf]
        %v5219 = vld [vmem:[#allocation17 + $0x3c] sm:$0xf]
        %v5220 = vld [vmem:[%s18] sm:$0x1]
        %v5222 = vperm.slane %v5220, 0
        %v5228 = vunpack.c.l.b16 %v5200
        %v5229 = vunpack.c.l.b16 %v5201
        %v5230 = vunpack.c.l.b16 %v5202
        %v5231 = vunpack.c.l.b16 %v5203
        %v5232 = vpack.c.b16 %v5229, %v5228
        %v5233 = vpack.c.b16 %v5231, %v5230
        %v5252 = vunpack.c.l.b16 %v5204
        %v5253 = vunpack.c.l.b16 %v5205
        %v5254 = vunpack.c.l.b16 %v5206
        %v5255 = vunpack.c.l.b16 %v5207
        %v5256 = vunpack.c.l.b16 %v5208
        %v5257 = vunpack.c.l.b16 %v5209
        %v5258 = vunpack.c.l.b16 %v5210
        %v5259 = vunpack.c.l.b16 %v5211
        %v5260 = vunpack.c.l.b16 %v5212
        %v5261 = vunpack.c.l.b16 %v5213
        %v5262 = vunpack.c.l.b16 %v5214
        %v5263 = vunpack.c.l.b16 %v5215
        %v5264 = vunpack.c.l.b16 %v5216
        %v5265 = vunpack.c.l.b16 %v5217
        %v5266 = vunpack.c.l.b16 %v5218
        %v5267 = vunpack.c.l.b16 %v5219
        %v5268 = vpack.c.b16 %v5253, %v5252
        %v5269 = vpack.c.b16 %v5255, %v5254
        %v5270 = vpack.c.b16 %v5257, %v5256
        %v5271 = vpack.c.b16 %v5259, %v5258
        %v5272 = vpack.c.b16 %v5261, %v5260
        %v5273 = vpack.c.b16 %v5263, %v5262
        %v5274 = vpack.c.b16 %v5265, %v5264
        %v5275 = vpack.c.b16 %v5267, %v5266
        %5284 = vmatpush.bf16.msra.mxu0 %v5275
        %5285 = vmatpush.bf16.msra.mxu0 %v5274
        %5286 = vmatpush.bf16.msra.mxu0 %v5273
        %5287 = vmatpush.bf16.msra.mxu0 %v5272
        %5288 = vmatpush.bf16.msra.mxu0 %v5271
        %5289 = vmatpush.bf16.msra.mxu0 %v5270
        %5290 = vmatpush.bf16.msra.mxu0 %v5269
        %5291 = vmatpush.bf16.msra.mxu0 %v5268
        %5292 = vmatmul.bf16.gmra.mxu0 %v5232
        %v5293 = vpop.f32.mrf.mxu0
        %v5294 = vadd.f32 %v5222, %v5293
        %v5295 = vpop.f32.mrf.mxu0
        %v5296 = vadd.f32 %v5222, %v5295
        %5297 = vmatmul.bf16.gmra.mxu0 %v5233
        %v5298 = vpop.f32.mrf.mxu0
        %v5299 = vadd.f32 %v5222, %v5298
        %v5300 = vpop.f32.mrf.mxu0
        %v5301 = vadd.f32 %v5222, %v5300
        %5302 = vdwg.mxu0
        %vm5303 = vcmp.ge.f32.partialorder %v5294, 0.0
        %vm5304 = vcmp.ge.f32.partialorder %v5296, 0.0
        %vm5305 = vcmp.ge.f32.partialorder %v5299, 0.0
        %vm5306 = vcmp.ge.f32.partialorder %v5301, 0.0
        %v5307 = vld [vmem:[%s19] sm:$0x1]
        %v5309 = vperm.slane %v5307, 0
        %v5311 = vmul.f32 %v5309, %v5294
        %v5312 = vmul.f32 %v5309, %v5296
        %v5313 = vmul.f32 %v5309, %v5299
        %v5314 = vmul.f32 %v5309, %v5301
        %v5315 = vsel %vm5303, %v5294, %v5311
        %v5316 = vsel %vm5304, %v5296, %v5312
        %v5317 = vsel %vm5305, %v5299, %v5313
        %v5318 = vsel %vm5306, %v5301, %v5314
        %v5319 = vpack.c.bf16 %v5316, %v5315
        %v5320 = vpack.c.bf16 %v5318, %v5317
        %v5321 = vld [vmem:[#allocation19] sm:$0xf]
        %v5322 = vld [vmem:[#allocation19 + $0x4] sm:$0xf]
        %v5323 = vld [vmem:[#allocation19 + $0x8] sm:$0xf]
        %v5324 = vld [vmem:[#allocation19 + $0xc] sm:$0xf]
        %v5325 = vld [vmem:[#allocation19 + $0x10] sm:$0xf]
        %v5326 = vld [vmem:[#allocation19 + $0x14] sm:$0xf]
        %v5327 = vld [vmem:[#allocation19 + $0x18] sm:$0xf]
        %v5328 = vld [vmem:[#allocation19 + $0x1c] sm:$0xf]
        %v5329 = vld [vmem:[#allocation19 + $0x20] sm:$0xf]
        %v5330 = vld [vmem:[#allocation19 + $0x24] sm:$0xf]
        %v5331 = vld [vmem:[#allocation19 + $0x28] sm:$0xf]
        %v5332 = vld [vmem:[#allocation19 + $0x2c] sm:$0xf]
        %v5333 = vld [vmem:[#allocation19 + $0x30] sm:$0xf]
        %v5334 = vld [vmem:[#allocation19 + $0x34] sm:$0xf]
        %v5335 = vld [vmem:[#allocation19 + $0x38] sm:$0xf]
        %v5336 = vld [vmem:[#allocation19 + $0x3c] sm:$0xf]
        %v5337 = vld [vmem:[%s21] sm:$0x1]
        %v5339 = vperm.slane %v5337, 0
        %v5357 = vunpack.c.l.b16 %v5321
        %v5358 = vunpack.c.l.b16 %v5322
        %v5359 = vunpack.c.l.b16 %v5323
        %v5360 = vunpack.c.l.b16 %v5324
        %v5361 = vunpack.c.l.b16 %v5325
        %v5362 = vunpack.c.l.b16 %v5326
        %v5363 = vunpack.c.l.b16 %v5327
        %v5364 = vunpack.c.l.b16 %v5328
        %v5365 = vunpack.c.l.b16 %v5329
        %v5366 = vunpack.c.l.b16 %v5330
        %v5367 = vunpack.c.l.b16 %v5331
        %v5368 = vunpack.c.l.b16 %v5332
        %v5369 = vunpack.c.l.b16 %v5333
        %v5370 = vunpack.c.l.b16 %v5334
        %v5371 = vunpack.c.l.b16 %v5335
        %v5372 = vunpack.c.l.b16 %v5336
        %v5373 = vpack.c.b16 %v5358, %v5357
        %v5374 = vpack.c.b16 %v5360, %v5359
        %v5375 = vpack.c.b16 %v5362, %v5361
        %v5376 = vpack.c.b16 %v5364, %v5363
        %v5377 = vpack.c.b16 %v5366, %v5365
        %v5378 = vpack.c.b16 %v5368, %v5367
        %v5379 = vpack.c.b16 %v5370, %v5369
        %v5380 = vpack.c.b16 %v5372, %v5371
        %5389 = vmatpush.bf16.msra.mxu0 %v5380
        %5390 = vmatpush.bf16.msra.mxu0 %v5379
        %5391 = vmatpush.bf16.msra.mxu0 %v5378
        %5392 = vmatpush.bf16.msra.mxu0 %v5377
        %5393 = vmatpush.bf16.msra.mxu0 %v5376
        %5394 = vmatpush.bf16.msra.mxu0 %v5375
        %5395 = vmatpush.bf16.msra.mxu0 %v5374
        %5396 = vmatpush.bf16.msra.mxu0 %v5373
        %5397 = vmatmul.bf16.gmra.mxu0 %v5319
        %v5398 = vpop.f32.mrf.mxu0
        %v5399 = vadd.f32 %v5339, %v5398
        %v5400 = vpop.f32.mrf.mxu0
        %v5401 = vadd.f32 %v5339, %v5400
        %5402 = vmatmul.bf16.gmra.mxu0 %v5320
        %v5403 = vpop.f32.mrf.mxu0
        %v5404 = vadd.f32 %v5339, %v5403
        %v5405 = vpop.f32.mrf.mxu0
        %v5406 = vadd.f32 %v5339, %v5405
        %5407 = vdwg.mxu0
        %5408 = vst [vmem:[%s911] sm:$0xff] %v5399
        %5409 = vst [vmem:[%s911 + $0x8] sm:$0xff] %v5401
        %5410 = vst [vmem:[%s911 + $0x10] sm:$0xff] %v5404
        %5411 = vst [vmem:[%s911 + $0x18] sm:$0xff] %v5406
        %s5412 = sand.u32 %s531, 1
        %s5413 = scalar_lea.sflag [#allocation4], %s5412
        %s5414 = sand.u32 %s531, 1
        %s5415 = smul.addr %s5414, 32
        %s5416 = scalar_lea.vmem [#allocation20], %s5415
        // Predicated region
        $region153: #{tpu_custom_call.1} parent=107 // pred_check
          %p5417 = pneg %p541
        $region154: #{tpu_custom_call.1} parent=107 // pred_check_branch
          %5419 = sbr.rel (%p5417) target = $region156
        $region155: #{tpu_custom_call.1} parent=107 // pred_region
          %s5420 = smul.u32 4, %s46
          %5422 = vsyncadd %s5413, 0
          %s5423 = smul.addr %s5420, 8
          %s5424 = scalar_lea.hbm %s22, %s5423
          %s5425 = sshll.u32 %s5416, 4
          %s5426 = int_to_ptr.vmem [resolvable:$true] %s5425
          %s5427 = sshll.u32 %s5424, 4
          %s5428 = int_to_ptr.hbm [resolvable:$true] %s5427
          %5433 = dma.vmem_to_hbm [thread:$0]  %s5426, 512, %s5428, %s5413, 128, 128, 8
        $region156: #{tpu_custom_call.1} parent=107 // pred_fallthru
          _
      $region108: #{tpu_custom_call.1} parent=5 // pred_fallthru
        _
      %p5434 = scmp.le.s32.totalorder 2, %s41
      // Predicated region
      $region157: #{tpu_custom_call.1} parent=5 // pred_check
        %p5435 = pneg %p5434
      $region158: #{tpu_custom_call.1} parent=5 // pred_check_branch
        %5437 = sbr.rel (%p5435) target = $region160
      $region159: #{tpu_custom_call.1} parent=5 // pred_region
        %s5438 = ssub.s32 %s41, 2
        // Predicated region
        $region161: #{tpu_custom_call.1} parent=159 // pred_check
          %p5439 = pneg %p547
        $region162: #{tpu_custom_call.1} parent=159 // pred_check_branch
          %5441 = sbr.rel (%p5439) target = $region164
        $region163: #{tpu_custom_call.1} parent=159 // pred_region
          %s5442 = sand.u32 %s532, 1
          %s5443 = scalar_lea.sflag [#allocation4], %s5442
          %s5444 = sand.u32 %s532, 1
          %s5445 = smul.addr %s5444, 32
          %s5446 = scalar_lea.vmem [#allocation20], %s5445
          %5448 = dma.done %s5443, 512
        $region164: #{tpu_custom_call.1} parent=159 // pred_fallthru
          _
      $region160: #{tpu_custom_call.1} parent=5 // pred_fallthru
        _
    $region6: #{tpu_custom_call.1} parent=1 // loop_footer
      %s45 = sadd.s32 1, %s41
    $region7: #{tpu_custom_call.1} parent=1 // loop_footer_branch
      %40 = sbr.rel target = $region3
    $region8: #{tpu_custom_call.1} parent=1 // loop_exit
      _
    %5449 = vsyncpa [#allocation3], 1
    %s5450 = scalar_lea.sflag [#allocation3], 1
    %5451 = vsyncpa %s5450, 1
    %5452 = vsyncpa [#allocation6], 1
    %s5453 = scalar_lea.sflag [#allocation6], 1
    %5454 = vsyncpa %s5453, 1
    %5455 = vsyncpa [#allocation9], 1
    %5456 = vsyncpa [#allocation12], 1
    %5457 = vsyncpa [#allocation15], 1
    %5458 = vsyncpa [#allocation18], 1
    %5459 = vsyncpa [#allocation4], 1
    %s5460 = scalar_lea.sflag [#allocation4], 1
    %5461 = vsyncpa %s5460, 1

</llo_original>
